<compile_context>
chip_gen: v5e
topology: v5e:2x2
jax: 0.10.0
libtpu: 0.0.40
codegen_flags: <defaults>
</compile_context>

<pallas_src>
import math

import jax
import jax.numpy as jnp
from jax import lax
from jax.experimental import pallas as pl
from jax.experimental.pallas import tpu as pltpu

# ----------------------- model hyper-params (small, forward-consistent) -----------------------
CIN = 4            # input image channels
D = 32             # hidden dim
NUM_HEADS = 2
HEAD_DIM = D // NUM_HEADS
FFN = 64
NQ = 8             # number of object queries
NUM_CLASSES = 8

KPAD = 128         # im2col contraction padded 3*3*CIN=36 -> 128 (MXU/lane aligned)
OUT_LANES = 128    # lane-dense packed output: [0:NUM_CLASSES]=logits, [NUM_CLASSES:+4]=boxes
BIAS_LANES = 128   # packed bias/LN slab lane width
LN_EPS = 1e-5

# rows of the packed bias / LayerNorm-parameter slab
(ROW_CONV_B, ROW_ENC_QKV_B, ROW_ENC_BO, ROW_ENC_LN1_G, ROW_ENC_LN1_B,
 ROW_ENC_FFN_B1, ROW_ENC_FFN_B2, ROW_ENC_LN2_G, ROW_ENC_LN2_B,
 ROW_DEC_SA_QKV_B, ROW_DEC_SA_BO, ROW_DEC_LN1_G, ROW_DEC_LN1_B,
 ROW_DEC_CA_QB, ROW_DEC_CA_KVB, ROW_DEC_CA_BO, ROW_DEC_LN2_G, ROW_DEC_LN2_B,
 ROW_DEC_FFN_B1, ROW_DEC_FFN_B2, ROW_DEC_LN3_G, ROW_DEC_LN3_B,
 ROW_HEAD_B, ROW_BOX_B2) = range(24)
NUM_BIAS_ROWS = 24


# ======================================= fused Pallas kernel =======================================

def _rtdetr_fused_kernel(patches_ref, conv_w_ref,
                         enc_qkv_w_ref, enc_wo_ref, enc_w1_ref, enc_w2_ref,
                         dec_sa_qkv_w_ref, dec_sa_wo_ref,
                         dec_ca_q_w_ref, dec_ca_kv_w_ref, dec_ca_wo_ref,
                         dec_w1_ref, dec_w2_ref,
                         head_w_ref, box_w2_ref, query_ref, bias_ref,
                         out_ref):
    f32 = jnp.float32
    bias = bias_ref[...].astype(f32)                                  # (24, 128)

    def brow(r, n):
        return bias[r:r + 1, :n]                                      # (1, n)

    def matmul(a, w_ref, bias_row, width, act=None):
        y = jnp.dot(a, w_ref[...].astype(f32), preferred_element_type=f32)
        y = y + brow(bias_row, width)
        if act == "relu":
            y = jnp.maximum(y, 0.0)
        return y

    def layernorm(x, g_row, b_row):
        mean = jnp.mean(x, axis=-1, keepdims=True)
        var = jnp.mean((x - mean) ** 2, axis=-1, keepdims=True)
        y = (x - mean) * lax.rsqrt(var + LN_EPS)
        return y * brow(g_row, D) + brow(b_row, D)

    def attend(q, k, v):
        # heads stay folded in the lane dim; per-head static lane slices (H=2, unrolled).
        scale = 1.0 / math.sqrt(HEAD_DIM)
        outs = []
        for h in range(NUM_HEADS):
            sl = slice(h * HEAD_DIM, (h + 1) * HEAD_DIM)
            qh, kh, vh = q[:, sl], k[:, sl], v[:, sl]
            # contraction on the last axis of BOTH operands -> no explicit K transpose
            s = lax.dot_general(qh, kh, (((1,), (1,)), ((), ())),
                                preferred_element_type=f32) * scale
            s = s - jnp.max(s, axis=-1, keepdims=True)
            p = jnp.exp(s)
            p = p * pl.reciprocal(jnp.sum(p, axis=-1, keepdims=True), approx=True)
            outs.append(jnp.dot(p, vh, preferred_element_type=f32))
        return jnp.concatenate(outs, axis=-1)

    # ---------------- backbone: 3x3 stride-2 conv as im2col matmul + ReLU ----------------
    x = matmul(patches_ref[0].astype(f32), conv_w_ref, ROW_CONV_B, D, act="relu")     # (S, D)

    # ---------------- encoder layer (fused-QKV MHSA + FFN, post-LN) ----------------
    qkv = matmul(x, enc_qkv_w_ref, ROW_ENC_QKV_B, 3 * D)                              # (S, 3D)
    attn = attend(qkv[:, 0:D], qkv[:, D:2 * D], qkv[:, 2 * D:3 * D])
    attn = matmul(attn, enc_wo_ref, ROW_ENC_BO, D)
    x = layernorm(x + attn, ROW_ENC_LN1_G, ROW_ENC_LN1_B)
    h = matmul(x, enc_w1_ref, ROW_ENC_FFN_B1, FFN, act="relu")
    h = matmul(h, enc_w2_ref, ROW_ENC_FFN_B2, D)
    mem = layernorm(x + h, ROW_ENC_LN2_G, ROW_ENC_LN2_B)                              # (S, D)

    # ---------------- decoder layer ----------------
    q = query_ref[...].astype(f32)                                                    # (NQ, D)

    # self-attention over queries
    qkv = matmul(q, dec_sa_qkv_w_ref, ROW_DEC_SA_QKV_B, 3 * D)
    sa = attend(qkv[:, 0:D], qkv[:, D:2 * D], qkv[:, 2 * D:3 * D])
    sa = matmul(sa, dec_sa_wo_ref, ROW_DEC_SA_BO, D)
    q = layernorm(q + sa, ROW_DEC_LN1_G, ROW_DEC_LN1_B)

    # cross-attention to encoder memory (fused K|V projection)
    cq = matmul(q, dec_ca_q_w_ref, ROW_DEC_CA_QB, D)
    kv = matmul(mem, dec_ca_kv_w_ref, ROW_DEC_CA_KVB, 2 * D)
    ca = attend(cq, kv[:, 0:D], kv[:, D:2 * D])
    ca = matmul(ca, dec_ca_wo_ref, ROW_DEC_CA_BO, D)
    q = layernorm(q + ca, ROW_DEC_LN2_G, ROW_DEC_LN2_B)

    # FFN
    h = matmul(q, dec_w1_ref, ROW_DEC_FFN_B1, FFN, act="relu")
    h = matmul(h, dec_w2_ref, ROW_DEC_FFN_B2, D)
    q = layernorm(q + h, ROW_DEC_LN3_G, ROW_DEC_LN3_B)                                # (NQ, D)

    # ---------------- heads: fused [cls | box_mlp_hidden] matmul ----------------
    head = matmul(q, head_w_ref, ROW_HEAD_B, NUM_CLASSES + D)                         # (NQ, 8+32)
    logits = head[:, 0:NUM_CLASSES]
    bh = jnp.maximum(head[:, NUM_CLASSES:NUM_CLASSES + D], 0.0)
    boxes = jax.nn.sigmoid(matmul(bh, box_w2_ref, ROW_BOX_B2, 4))                     # (NQ, 4)

    # lane-dense packed output (NQ, 128): [0:8]=logits, [8:12]=boxes, rest zero
    pad = jnp.zeros((NQ, OUT_LANES - NUM_CLASSES - 4), f32)
    out_ref[0] = jnp.concatenate([logits, boxes, pad], axis=-1).astype(out_ref.dtype)


# ======================================= glue / wrappers =======================================

def im2col(x, k=3, stride=2, pad=1):
    """x: (B, H, W, C) NHWC -> patches (B, Ho, Wo, k*k*C)."""
    B, H, W, C = x.shape
    xp = jnp.pad(x, ((0, 0), (pad, pad), (pad, pad), (0, 0)))
    Ho = (H + 2 * pad - k) // stride + 1
    Wo = (W + 2 * pad - k) // stride + 1
    patches = []
    for di in range(k):
        for dj in range(k):
            patches.append(xp[:, di:di + Ho * stride:stride, dj:dj + Wo * stride:stride, :])
    return jnp.concatenate(patches, axis=-1), Ho, Wo


WEIGHT_ORDER = ["conv_w", "enc_qkv_w", "enc_wo", "enc_w1", "enc_w2",
                "dec_sa_qkv_w", "dec_sa_wo", "dec_ca_q_w", "dec_ca_kv_w", "dec_ca_wo",
                "dec_w1", "dec_w2", "head_w", "box_w2", "query", "bias"]


def _pack_params(p):
    """Concatenate QKV/head weights and pack every bias / LN vector into one (24,128) slab."""
    def row(*vs):
        v = jnp.concatenate([jnp.asarray(x, jnp.float32) for x in vs]) if len(vs) > 1 \
            else jnp.asarray(vs[0], jnp.float32)
        return jnp.pad(v, (0, BIAS_LANES - v.shape[0]))

    rows = [None] * NUM_BIAS_ROWS
    rows[ROW_CONV_B] = row(p["conv_b"])
    rows[ROW_ENC_QKV_B] = row(p["enc_sa_bq"], p["enc_sa_bk"], p["enc_sa_bv"])
    rows[ROW_ENC_BO] = row(p["enc_sa_bo"])
    rows[ROW_ENC_LN1_G] = row(p["enc_ln1_g"])
    rows[ROW_ENC_LN1_B] = row(p["enc_ln1_b"])
    rows[ROW_ENC_FFN_B1] = row(p["enc_ffn_b1"])
    rows[ROW_ENC_FFN_B2] = row(p["enc_ffn_b2"])
    rows[ROW_ENC_LN2_G] = row(p["enc_ln2_g"])
    rows[ROW_ENC_LN2_B] = row(p["enc_ln2_b"])
    rows[ROW_DEC_SA_QKV_B] = row(p["dec_sa_bq"], p["dec_sa_bk"], p["dec_sa_bv"])
    rows[ROW_DEC_SA_BO] = row(p["dec_sa_bo"])
    rows[ROW_DEC_LN1_G] = row(p["dec_ln1_g"])
    rows[ROW_DEC_LN1_B] = row(p["dec_ln1_b"])
    rows[ROW_DEC_CA_QB] = row(p["dec_ca_bq"])
    rows[ROW_DEC_CA_KVB] = row(p["dec_ca_bk"], p["dec_ca_bv"])
    rows[ROW_DEC_CA_BO] = row(p["dec_ca_bo"])
    rows[ROW_DEC_LN2_G] = row(p["dec_ln2_g"])
    rows[ROW_DEC_LN2_B] = row(p["dec_ln2_b"])
    rows[ROW_DEC_FFN_B1] = row(p["dec_ffn_b1"])
    rows[ROW_DEC_FFN_B2] = row(p["dec_ffn_b2"])
    rows[ROW_DEC_LN3_G] = row(p["dec_ln3_g"])
    rows[ROW_DEC_LN3_B] = row(p["dec_ln3_b"])
    rows[ROW_HEAD_B] = row(p["cls_b"], p["box_b1"])
    rows[ROW_BOX_B2] = row(p["box_b2"])
    bias_slab = jnp.stack(rows)                                                       # (24, 128)

    conv_w = jnp.pad(p["conv_w"], ((0, KPAD - p["conv_w"].shape[0]), (0, 0)))         # (128, D)

    return {
        "conv_w": conv_w,
        "enc_qkv_w": jnp.concatenate([p["enc_sa_wq"], p["enc_sa_wk"], p["enc_sa_wv"]], axis=1),
        "enc_wo": p["enc_sa_wo"],
        "enc_w1": p["enc_ffn_w1"],
        "enc_w2": p["enc_ffn_w2"],
        "dec_sa_qkv_w": jnp.concatenate([p["dec_sa_wq"], p["dec_sa_wk"], p["dec_sa_wv"]], axis=1),
        "dec_sa_wo": p["dec_sa_wo"],
        "dec_ca_q_w": p["dec_ca_wq"],
        "dec_ca_kv_w": jnp.concatenate([p["dec_ca_wk"], p["dec_ca_wv"]], axis=1),
        "dec_ca_wo": p["dec_ca_wo"],
        "dec_w1": p["dec_ffn_w1"],
        "dec_w2": p["dec_ffn_w2"],
        "head_w": jnp.concatenate([p["cls_w"], p["box_w1"]], axis=1),
        "box_w2": p["box_w2"],
        "query": p["query_embed"],
        "bias": bias_slab,
    }


def rtdetr_forward(p, x_nchw, targets=None):
    # TODO(synk): multi_scale random F.interpolate resize only runs in training mode; inference path skips it.
    x = jnp.transpose(x_nchw, (0, 2, 3, 1)).astype(jnp.float32)          # NCHW (PyTorch) -> NHWC
    patches, Ho, Wo = im2col(x)
    B = x.shape[0]
    S = Ho * Wo
    patches = patches.reshape(B, S, -1)
    patches = jnp.pad(patches, ((0, 0), (0, 0), (0, KPAD - patches.shape[-1])))       # (B, S, 128)

    packed = _pack_params(p)
    weights = [packed[k] for k in WEIGHT_ORDER]

    def full_spec(a):
        nd = a.ndim
        return pl.BlockSpec(a.shape, lambda i, _nd=nd: (0,) * _nd)

    out = pl.pallas_call(
        _rtdetr_fused_kernel,
        out_shape=jax.ShapeDtypeStruct((B, NQ, OUT_LANES), jnp.float32),
        grid=(B,),
        in_specs=[pl.BlockSpec((1, S, KPAD), lambda i: (i, 0, 0))]
                 + [full_spec(w) for w in weights],
        out_specs=pl.BlockSpec((1, NQ, OUT_LANES), lambda i: (i, 0, 0)),
        compiler_params=pltpu.CompilerParams(dimension_semantics=("parallel",)),
    )(patches, *weights)

    return {"pred_logits": out[:, :, :NUM_CLASSES],
            "pred_boxes": out[:, :, NUM_CLASSES:NUM_CLASSES + 4]}


# ======================================= parameter init =======================================

def init_params(key):
    keys = iter(jax.random.split(key, 64))

    def lin(kin, kout):
        w = jax.random.normal(next(keys), (kin, kout), jnp.float32) * (1.0 / math.sqrt(kin))
        b = jnp.zeros((kout,), jnp.float32)
        return w, b

    p = {}
    p["conv_w"], p["conv_b"] = lin(3 * 3 * CIN, D)

    def mha(prefix):
        for n in ["q", "k", "v", "o"]:
            p[f"{prefix}_w{n}"], p[f"{prefix}_b{n}"] = lin(D, D)

    mha("enc_sa")
    p["enc_ln1_g"] = jnp.ones((D,), jnp.float32); p["enc_ln1_b"] = jnp.zeros((D,), jnp.float32)
    p["enc_ffn_w1"], p["enc_ffn_b1"] = lin(D, FFN)
    p["enc_ffn_w2"], p["enc_ffn_b2"] = lin(FFN, D)
    p["enc_ln2_g"] = jnp.ones((D,), jnp.float32); p["enc_ln2_b"] = jnp.zeros((D,), jnp.float32)

    p["query_embed"] = jax.random.normal(next(keys), (NQ, D), jnp.float32) * 0.1
    mha("dec_sa")
    p["dec_ln1_g"] = jnp.ones((D,), jnp.float32); p["dec_ln1_b"] = jnp.zeros((D,), jnp.float32)
    mha("dec_ca")
    p["dec_ln2_g"] = jnp.ones((D,), jnp.float32); p["dec_ln2_b"] = jnp.zeros((D,), jnp.float32)
    p["dec_ffn_w1"], p["dec_ffn_b1"] = lin(D, FFN)
    p["dec_ffn_w2"], p["dec_ffn_b2"] = lin(FFN, D)
    p["dec_ln3_g"] = jnp.ones((D,), jnp.float32); p["dec_ln3_b"] = jnp.zeros((D,), jnp.float32)

    p["cls_w"], p["cls_b"] = lin(D, NUM_CLASSES)
    p["box_w1"], p["box_b1"] = lin(D, D)
    p["box_w2"], p["box_b2"] = lin(D, 4)
    return p


# ============================================ main ============================================

if __name__ == "__main__":
    x = jax.random.normal(jax.random.PRNGKey(0), (2, CIN, 16, 16), jnp.float32)  # NCHW, like PyTorch
    params = init_params(jax.random.PRNGKey(42))

    fwd = jax.jit(rtdetr_forward)
    out = fwd(params, x)
    jax.block_until_ready(out)

    assert out["pred_logits"].shape == (2, NQ, NUM_CLASSES)
    assert out["pred_boxes"].shape == (2, NQ, 4)
    assert bool(jnp.all(jnp.isfinite(out["pred_logits"])))
    assert bool(jnp.all((out["pred_boxes"] >= 0.0) & (out["pred_boxes"] <= 1.0)))
    print("KERNEL_OK")
</pallas_src>

<mosaic_0001>
module attributes {stable_mosaic.version = 11 : i64} {
  func.func @_rtdetr_fused_kernel(%arg0: i32, %arg1: memref<1x64x128xf32, #tpu.memory_space<vmem>>, %arg2: memref<128x32xf32, #tpu.memory_space<vmem>>, %arg3: memref<32x96xf32, #tpu.memory_space<vmem>>, %arg4: memref<32x32xf32, #tpu.memory_space<vmem>>, %arg5: memref<32x64xf32, #tpu.memory_space<vmem>>, %arg6: memref<64x32xf32, #tpu.memory_space<vmem>>, %arg7: memref<32x96xf32, #tpu.memory_space<vmem>>, %arg8: memref<32x32xf32, #tpu.memory_space<vmem>>, %arg9: memref<32x32xf32, #tpu.memory_space<vmem>>, %arg10: memref<32x64xf32, #tpu.memory_space<vmem>>, %arg11: memref<32x32xf32, #tpu.memory_space<vmem>>, %arg12: memref<32x64xf32, #tpu.memory_space<vmem>>, %arg13: memref<64x32xf32, #tpu.memory_space<vmem>>, %arg14: memref<32x40xf32, #tpu.memory_space<vmem>>, %arg15: memref<32x4xf32, #tpu.memory_space<vmem>>, %arg16: memref<8x32xf32, #tpu.memory_space<vmem>>, %arg17: memref<24x128xf32, #tpu.memory_space<vmem>>, %arg18: memref<1x8x128xf32, #tpu.memory_space<vmem>>) attributes {dimension_semantics = [#tpu.dimension_semantics<parallel>], iteration_bounds = array<i64: 2>, scalar_prefetch = 0 : i64, scratch_operands = 0 : i64, tpu.core_type = #tpu.core_type<tc>, window_params = [{transform_indices = @transform_0, window_bounds = array<i64: 1, 64, 128>}, {pipeline_mode = #tpu.pipeline_mode<synchronous>, transform_indices = @transform_1, window_bounds = array<i64: 128, 32>}, {pipeline_mode = #tpu.pipeline_mode<synchronous>, transform_indices = @transform_2, window_bounds = array<i64: 32, 96>}, {pipeline_mode = #tpu.pipeline_mode<synchronous>, transform_indices = @transform_3, window_bounds = array<i64: 32, 32>}, {pipeline_mode = #tpu.pipeline_mode<synchronous>, transform_indices = @transform_4, window_bounds = array<i64: 32, 64>}, {pipeline_mode = #tpu.pipeline_mode<synchronous>, transform_indices = @transform_5, window_bounds = array<i64: 64, 32>}, {pipeline_mode = #tpu.pipeline_mode<synchronous>, transform_indices = @transform_6, window_bounds = array<i64: 32, 96>}, {pipeline_mode = #tpu.pipeline_mode<synchronous>, transform_indices = @transform_7, window_bounds = array<i64: 32, 32>}, {pipeline_mode = #tpu.pipeline_mode<synchronous>, transform_indices = @transform_8, window_bounds = array<i64: 32, 32>}, {pipeline_mode = #tpu.pipeline_mode<synchronous>, transform_indices = @transform_9, window_bounds = array<i64: 32, 64>}, {pipeline_mode = #tpu.pipeline_mode<synchronous>, transform_indices = @transform_10, window_bounds = array<i64: 32, 32>}, {pipeline_mode = #tpu.pipeline_mode<synchronous>, transform_indices = @transform_11, window_bounds = array<i64: 32, 64>}, {pipeline_mode = #tpu.pipeline_mode<synchronous>, transform_indices = @transform_12, window_bounds = array<i64: 64, 32>}, {pipeline_mode = #tpu.pipeline_mode<synchronous>, transform_indices = @transform_13, window_bounds = array<i64: 32, 40>}, {pipeline_mode = #tpu.pipeline_mode<synchronous>, transform_indices = @transform_14, window_bounds = array<i64: 32, 4>}, {pipeline_mode = #tpu.pipeline_mode<synchronous>, transform_indices = @transform_15, window_bounds = array<i64: 8, 32>}, {pipeline_mode = #tpu.pipeline_mode<synchronous>, transform_indices = @transform_16, window_bounds = array<i64: 24, 128>}, {transform_indices = @transform_17, window_bounds = array<i64: 1, 8, 128>}]} {
    %c0 = arith.constant 0 : index
    %c0_0 = arith.constant 0 : index
    %0 = vector.load %arg17[%c0, %c0_0] : memref<24x128xf32, #tpu.memory_space<vmem>>, vector<24x128xf32>
    %c0_1 = arith.constant 0 : index
    %c0_2 = arith.constant 0 : index
    %c0_3 = arith.constant 0 : index
    %1 = vector.load %arg1[%c0_1, %c0_2, %c0_3] : memref<1x64x128xf32, #tpu.memory_space<vmem>>, vector<1x64x128xf32>
    %2 = vector.shape_cast %1 : vector<1x64x128xf32> to vector<64x128xf32>
    %c0_4 = arith.constant 0 : index
    %c0_5 = arith.constant 0 : index
    %3 = vector.load %arg2[%c0_4, %c0_5] : memref<128x32xf32, #tpu.memory_space<vmem>>, vector<128x32xf32>
    %cst = arith.constant dense<0.000000e+00> : vector<64x32xf32>
    %4 = tpu.matmul %2, %3, %cst {dimension_numbers = #tpu.dot_dimension_numbers<[1], [0], [0], [1], [0, 0, 1, 1], [], []>} : vector<64x128xf32>, vector<128x32xf32>, vector<64x32xf32> -> vector<64x32xf32>
    %5 = vector.extract_strided_slice %0 {offsets = [0, 0], sizes = [1, 32], strides = [1, 1]} : vector<24x128xf32> to vector<1x32xf32>
    %6 = vector.broadcast %5 : vector<1x32xf32> to vector<64x32xf32>
    %7 = arith.addf %4, %6 : vector<64x32xf32>
    %cst_6 = arith.constant 0.000000e+00 : f32
    %8 = vector.broadcast %cst_6 : f32 to vector<64x32xf32>
    %9 = arith.maximumf %7, %8 : vector<64x32xf32>
    %c0_7 = arith.constant 0 : index
    %c0_8 = arith.constant 0 : index
    %10 = vector.load %arg3[%c0_7, %c0_8] : memref<32x96xf32, #tpu.memory_space<vmem>>, vector<32x96xf32>
    %cst_9 = arith.constant dense<0.000000e+00> : vector<64x96xf32>
    %11 = tpu.matmul %9, %10, %cst_9 {dimension_numbers = #tpu.dot_dimension_numbers<[1], [0], [0], [1], [0, 0, 1, 1], [], []>} : vector<64x32xf32>, vector<32x96xf32>, vector<64x96xf32> -> vector<64x96xf32>
    %12 = vector.extract_strided_slice %0 {offsets = [1, 0], sizes = [1, 96], strides = [1, 1]} : vector<24x128xf32> to vector<1x96xf32>
    %13 = vector.broadcast %12 : vector<1x96xf32> to vector<64x96xf32>
    %14 = arith.addf %11, %13 : vector<64x96xf32>
    %15 = vector.extract_strided_slice %14 {offsets = [0, 0], sizes = [64, 32], strides = [1, 1]} : vector<64x96xf32> to vector<64x32xf32>
    %16 = vector.extract_strided_slice %14 {offsets = [0, 32], sizes = [64, 32], strides = [1, 1]} : vector<64x96xf32> to vector<64x32xf32>
    %17 = vector.extract_strided_slice %14 {offsets = [0, 64], sizes = [64, 32], strides = [1, 1]} : vector<64x96xf32> to vector<64x32xf32>
    %18 = vector.extract_strided_slice %15 {offsets = [0, 0], sizes = [64, 16], strides = [1, 1]} : vector<64x32xf32> to vector<64x16xf32>
    %19 = vector.extract_strided_slice %16 {offsets = [0, 0], sizes = [64, 16], strides = [1, 1]} : vector<64x32xf32> to vector<64x16xf32>
    %20 = vector.extract_strided_slice %17 {offsets = [0, 0], sizes = [64, 16], strides = [1, 1]} : vector<64x32xf32> to vector<64x16xf32>
    %cst_10 = arith.constant dense<0.000000e+00> : vector<64x64xf32>
    %21 = tpu.matmul %18, %19, %cst_10 {dimension_numbers = #tpu.dot_dimension_numbers<[1], [1], [0], [0], [0, 0, 1, 0], [], []>} : vector<64x16xf32>, vector<64x16xf32>, vector<64x64xf32> -> vector<64x64xf32>
    %cst_11 = arith.constant 2.500000e-01 : f32
    %22 = vector.broadcast %cst_11 : f32 to vector<64x64xf32>
    %23 = arith.mulf %21, %22 : vector<64x64xf32>
    %cst_12 = arith.constant dense<0xFF800000> : vector<64xf32>
    %24 = vector.multi_reduction <maximumf>, %23, %cst_12 [1] : vector<64x64xf32> to vector<64xf32>
    %25 = vector.shape_cast %24 : vector<64xf32> to vector<64x1xf32>
    %26 = vector.broadcast %25 : vector<64x1xf32> to vector<64x64xf32>
    %27 = arith.subf %23, %26 : vector<64x64xf32>
    %28 = math.exp %27 : vector<64x64xf32>
    %cst_13 = arith.constant dense<0.000000e+00> : vector<64xf32>
    %29 = vector.multi_reduction <add>, %28, %cst_13 [1] : vector<64x64xf32> to vector<64xf32>
    %30 = vector.shape_cast %29 : vector<64xf32> to vector<64x1xf32>
    %31 = tpu.reciprocal %30 {approx = true} : vector<64x1xf32> -> vector<64x1xf32>
    %32 = vector.broadcast %31 : vector<64x1xf32> to vector<64x64xf32>
    %33 = arith.mulf %28, %32 : vector<64x64xf32>
    %cst_14 = arith.constant dense<0.000000e+00> : vector<64x16xf32>
    %34 = tpu.matmul %33, %20, %cst_14 {dimension_numbers = #tpu.dot_dimension_numbers<[1], [0], [0], [1], [0, 0, 1, 1], [], []>} : vector<64x64xf32>, vector<64x16xf32>, vector<64x16xf32> -> vector<64x16xf32>
    %35 = vector.extract_strided_slice %15 {offsets = [0, 16], sizes = [64, 16], strides = [1, 1]} : vector<64x32xf32> to vector<64x16xf32>
    %36 = vector.extract_strided_slice %16 {offsets = [0, 16], sizes = [64, 16], strides = [1, 1]} : vector<64x32xf32> to vector<64x16xf32>
    %37 = vector.extract_strided_slice %17 {offsets = [0, 16], sizes = [64, 16], strides = [1, 1]} : vector<64x32xf32> to vector<64x16xf32>
    %cst_15 = arith.constant dense<0.000000e+00> : vector<64x64xf32>
    %38 = tpu.matmul %35, %36, %cst_15 {dimension_numbers = #tpu.dot_dimension_numbers<[1], [1], [0], [0], [0, 0, 1, 0], [], []>} : vector<64x16xf32>, vector<64x16xf32>, vector<64x64xf32> -> vector<64x64xf32>
    %cst_16 = arith.constant 2.500000e-01 : f32
    %39 = vector.broadcast %cst_16 : f32 to vector<64x64xf32>
    %40 = arith.mulf %38, %39 : vector<64x64xf32>
    %cst_17 = arith.constant dense<0xFF800000> : vector<64xf32>
    %41 = vector.multi_reduction <maximumf>, %40, %cst_17 [1] : vector<64x64xf32> to vector<64xf32>
    %42 = vector.shape_cast %41 : vector<64xf32> to vector<64x1xf32>
    %43 = vector.broadcast %42 : vector<64x1xf32> to vector<64x64xf32>
    %44 = arith.subf %40, %43 : vector<64x64xf32>
    %45 = math.exp %44 : vector<64x64xf32>
    %cst_18 = arith.constant dense<0.000000e+00> : vector<64xf32>
    %46 = vector.multi_reduction <add>, %45, %cst_18 [1] : vector<64x64xf32> to vector<64xf32>
    %47 = vector.shape_cast %46 : vector<64xf32> to vector<64x1xf32>
    %48 = tpu.reciprocal %47 {approx = true} : vector<64x1xf32> -> vector<64x1xf32>
    %49 = vector.broadcast %48 : vector<64x1xf32> to vector<64x64xf32>
    %50 = arith.mulf %45, %49 : vector<64x64xf32>
    %cst_19 = arith.constant dense<0.000000e+00> : vector<64x16xf32>
    %51 = tpu.matmul %50, %37, %cst_19 {dimension_numbers = #tpu.dot_dimension_numbers<[1], [0], [0], [1], [0, 0, 1, 1], [], []>} : vector<64x64xf32>, vector<64x16xf32>, vector<64x16xf32> -> vector<64x16xf32>
    %52 = tpu.concatenate %34, %51 in 1 : vector<64x16xf32>, vector<64x16xf32> -> vector<64x32xf32>
    %c0_20 = arith.constant 0 : index
    %c0_21 = arith.constant 0 : index
    %53 = vector.load %arg4[%c0_20, %c0_21] : memref<32x32xf32, #tpu.memory_space<vmem>>, vector<32x32xf32>
    %cst_22 = arith.constant dense<0.000000e+00> : vector<64x32xf32>
    %54 = tpu.matmul %52, %53, %cst_22 {dimension_numbers = #tpu.dot_dimension_numbers<[1], [0], [0], [1], [0, 0, 1, 1], [], []>} : vector<64x32xf32>, vector<32x32xf32>, vector<64x32xf32> -> vector<64x32xf32>
    %55 = vector.extract_strided_slice %0 {offsets = [2, 0], sizes = [1, 32], strides = [1, 1]} : vector<24x128xf32> to vector<1x32xf32>
    %56 = vector.broadcast %55 : vector<1x32xf32> to vector<64x32xf32>
    %57 = arith.addf %54, %56 : vector<64x32xf32>
    %58 = arith.addf %9, %57 : vector<64x32xf32>
    %cst_23 = arith.constant dense<0.000000e+00> : vector<64xf32>
    %59 = vector.multi_reduction <add>, %58, %cst_23 [1] : vector<64x32xf32> to vector<64xf32>
    %60 = vector.shape_cast %59 : vector<64xf32> to vector<64x1xf32>
    %cst_24 = arith.constant 3.200000e+01 : f32
    %61 = vector.broadcast %cst_24 : f32 to vector<64x1xf32>
    %62 = arith.divf %60, %61 : vector<64x1xf32>
    %63 = vector.broadcast %62 : vector<64x1xf32> to vector<64x32xf32>
    %64 = arith.subf %58, %63 : vector<64x32xf32>
    %65 = arith.mulf %64, %64 : vector<64x32xf32>
    %cst_25 = arith.constant dense<0.000000e+00> : vector<64xf32>
    %66 = vector.multi_reduction <add>, %65, %cst_25 [1] : vector<64x32xf32> to vector<64xf32>
    %67 = vector.shape_cast %66 : vector<64xf32> to vector<64x1xf32>
    %cst_26 = arith.constant 3.200000e+01 : f32
    %68 = vector.broadcast %cst_26 : f32 to vector<64x1xf32>
    %69 = arith.divf %67, %68 : vector<64x1xf32>
    %70 = vector.broadcast %62 : vector<64x1xf32> to vector<64x32xf32>
    %71 = arith.subf %58, %70 : vector<64x32xf32>
    %cst_27 = arith.constant 9.99999974E-6 : f32
    %72 = vector.broadcast %cst_27 : f32 to vector<64x1xf32>
    %73 = arith.addf %69, %72 : vector<64x1xf32>
    %74 = math.rsqrt %73 : vector<64x1xf32>
    %75 = vector.broadcast %74 : vector<64x1xf32> to vector<64x32xf32>
    %76 = arith.mulf %71, %75 : vector<64x32xf32>
    %77 = vector.extract_strided_slice %0 {offsets = [3, 0], sizes = [1, 32], strides = [1, 1]} : vector<24x128xf32> to vector<1x32xf32>
    %78 = vector.broadcast %77 : vector<1x32xf32> to vector<64x32xf32>
    %79 = arith.mulf %76, %78 : vector<64x32xf32>
    %80 = vector.extract_strided_slice %0 {offsets = [4, 0], sizes = [1, 32], strides = [1, 1]} : vector<24x128xf32> to vector<1x32xf32>
    %81 = vector.broadcast %80 : vector<1x32xf32> to vector<64x32xf32>
    %82 = arith.addf %79, %81 : vector<64x32xf32>
    %c0_28 = arith.constant 0 : index
    %c0_29 = arith.constant 0 : index
    %83 = vector.load %arg5[%c0_28, %c0_29] : memref<32x64xf32, #tpu.memory_space<vmem>>, vector<32x64xf32>
    %cst_30 = arith.constant dense<0.000000e+00> : vector<64x64xf32>
    %84 = tpu.matmul %82, %83, %cst_30 {dimension_numbers = #tpu.dot_dimension_numbers<[1], [0], [0], [1], [0, 0, 1, 1], [], []>} : vector<64x32xf32>, vector<32x64xf32>, vector<64x64xf32> -> vector<64x64xf32>
    %85 = vector.extract_strided_slice %0 {offsets = [5, 0], sizes = [1, 64], strides = [1, 1]} : vector<24x128xf32> to vector<1x64xf32>
    %86 = vector.broadcast %85 : vector<1x64xf32> to vector<64x64xf32>
    %87 = arith.addf %84, %86 : vector<64x64xf32>
    %cst_31 = arith.constant 0.000000e+00 : f32
    %88 = vector.broadcast %cst_31 : f32 to vector<64x64xf32>
    %89 = arith.maximumf %87, %88 : vector<64x64xf32>
    %c0_32 = arith.constant 0 : index
    %c0_33 = arith.constant 0 : index
    %90 = vector.load %arg6[%c0_32, %c0_33] : memref<64x32xf32, #tpu.memory_space<vmem>>, vector<64x32xf32>
    %cst_34 = arith.constant dense<0.000000e+00> : vector<64x32xf32>
    %91 = tpu.matmul %89, %90, %cst_34 {dimension_numbers = #tpu.dot_dimension_numbers<[1], [0], [0], [1], [0, 0, 1, 1], [], []>} : vector<64x64xf32>, vector<64x32xf32>, vector<64x32xf32> -> vector<64x32xf32>
    %92 = vector.extract_strided_slice %0 {offsets = [6, 0], sizes = [1, 32], strides = [1, 1]} : vector<24x128xf32> to vector<1x32xf32>
    %93 = vector.broadcast %92 : vector<1x32xf32> to vector<64x32xf32>
    %94 = arith.addf %91, %93 : vector<64x32xf32>
    %95 = arith.addf %82, %94 : vector<64x32xf32>
    %cst_35 = arith.constant dense<0.000000e+00> : vector<64xf32>
    %96 = vector.multi_reduction <add>, %95, %cst_35 [1] : vector<64x32xf32> to vector<64xf32>
    %97 = vector.shape_cast %96 : vector<64xf32> to vector<64x1xf32>
    %cst_36 = arith.constant 3.200000e+01 : f32
    %98 = vector.broadcast %cst_36 : f32 to vector<64x1xf32>
    %99 = arith.divf %97, %98 : vector<64x1xf32>
    %100 = vector.broadcast %99 : vector<64x1xf32> to vector<64x32xf32>
    %101 = arith.subf %95, %100 : vector<64x32xf32>
    %102 = arith.mulf %101, %101 : vector<64x32xf32>
    %cst_37 = arith.constant dense<0.000000e+00> : vector<64xf32>
    %103 = vector.multi_reduction <add>, %102, %cst_37 [1] : vector<64x32xf32> to vector<64xf32>
    %104 = vector.shape_cast %103 : vector<64xf32> to vector<64x1xf32>
    %cst_38 = arith.constant 3.200000e+01 : f32
    %105 = vector.broadcast %cst_38 : f32 to vector<64x1xf32>
    %106 = arith.divf %104, %105 : vector<64x1xf32>
    %107 = vector.broadcast %99 : vector<64x1xf32> to vector<64x32xf32>
    %108 = arith.subf %95, %107 : vector<64x32xf32>
    %cst_39 = arith.constant 9.99999974E-6 : f32
    %109 = vector.broadcast %cst_39 : f32 to vector<64x1xf32>
    %110 = arith.addf %106, %109 : vector<64x1xf32>
    %111 = math.rsqrt %110 : vector<64x1xf32>
    %112 = vector.broadcast %111 : vector<64x1xf32> to vector<64x32xf32>
    %113 = arith.mulf %108, %112 : vector<64x32xf32>
    %114 = vector.extract_strided_slice %0 {offsets = [7, 0], sizes = [1, 32], strides = [1, 1]} : vector<24x128xf32> to vector<1x32xf32>
    %115 = vector.broadcast %114 : vector<1x32xf32> to vector<64x32xf32>
    %116 = arith.mulf %113, %115 : vector<64x32xf32>
    %117 = vector.extract_strided_slice %0 {offsets = [8, 0], sizes = [1, 32], strides = [1, 1]} : vector<24x128xf32> to vector<1x32xf32>
    %118 = vector.broadcast %117 : vector<1x32xf32> to vector<64x32xf32>
    %119 = arith.addf %116, %118 : vector<64x32xf32>
    %c0_40 = arith.constant 0 : index
    %c0_41 = arith.constant 0 : index
    %120 = vector.load %arg16[%c0_40, %c0_41] : memref<8x32xf32, #tpu.memory_space<vmem>>, vector<8x32xf32>
    %c0_42 = arith.constant 0 : index
    %c0_43 = arith.constant 0 : index
    %121 = vector.load %arg7[%c0_42, %c0_43] : memref<32x96xf32, #tpu.memory_space<vmem>>, vector<32x96xf32>
    %cst_44 = arith.constant dense<0.000000e+00> : vector<8x96xf32>
    %122 = tpu.matmul %120, %121, %cst_44 {dimension_numbers = #tpu.dot_dimension_numbers<[1], [0], [0], [1], [0, 0, 1, 1], [], []>} : vector<8x32xf32>, vector<32x96xf32>, vector<8x96xf32> -> vector<8x96xf32>
    %123 = vector.extract_strided_slice %0 {offsets = [9, 0], sizes = [1, 96], strides = [1, 1]} : vector<24x128xf32> to vector<1x96xf32>
    %124 = vector.broadcast %123 : vector<1x96xf32> to vector<8x96xf32>
    %125 = arith.addf %122, %124 : vector<8x96xf32>
    %126 = vector.extract_strided_slice %125 {offsets = [0, 0], sizes = [8, 32], strides = [1, 1]} : vector<8x96xf32> to vector<8x32xf32>
    %127 = vector.extract_strided_slice %125 {offsets = [0, 32], sizes = [8, 32], strides = [1, 1]} : vector<8x96xf32> to vector<8x32xf32>
    %128 = vector.extract_strided_slice %125 {offsets = [0, 64], sizes = [8, 32], strides = [1, 1]} : vector<8x96xf32> to vector<8x32xf32>
    %129 = vector.extract_strided_slice %126 {offsets = [0, 0], sizes = [8, 16], strides = [1, 1]} : vector<8x32xf32> to vector<8x16xf32>
    %130 = vector.extract_strided_slice %127 {offsets = [0, 0], sizes = [8, 16], strides = [1, 1]} : vector<8x32xf32> to vector<8x16xf32>
    %131 = vector.extract_strided_slice %128 {offsets = [0, 0], sizes = [8, 16], strides = [1, 1]} : vector<8x32xf32> to vector<8x16xf32>
    %cst_45 = arith.constant dense<0.000000e+00> : vector<8x8xf32>
    %132 = tpu.matmul %129, %130, %cst_45 {dimension_numbers = #tpu.dot_dimension_numbers<[1], [1], [0], [0], [0, 0, 1, 0], [], []>} : vector<8x16xf32>, vector<8x16xf32>, vector<8x8xf32> -> vector<8x8xf32>
    %cst_46 = arith.constant 2.500000e-01 : f32
    %133 = vector.broadcast %cst_46 : f32 to vector<8x8xf32>
    %134 = arith.mulf %132, %133 : vector<8x8xf32>
    %cst_47 = arith.constant dense<0xFF800000> : vector<8xf32>
    %135 = vector.multi_reduction <maximumf>, %134, %cst_47 [1] : vector<8x8xf32> to vector<8xf32>
    %136 = vector.shape_cast %135 : vector<8xf32> to vector<8x1xf32>
    %137 = vector.broadcast %136 : vector<8x1xf32> to vector<8x8xf32>
    %138 = arith.subf %134, %137 : vector<8x8xf32>
    %139 = math.exp %138 : vector<8x8xf32>
    %cst_48 = arith.constant dense<0.000000e+00> : vector<8xf32>
    %140 = vector.multi_reduction <add>, %139, %cst_48 [1] : vector<8x8xf32> to vector<8xf32>
    %141 = vector.shape_cast %140 : vector<8xf32> to vector<8x1xf32>
    %142 = tpu.reciprocal %141 {approx = true} : vector<8x1xf32> -> vector<8x1xf32>
    %143 = vector.broadcast %142 : vector<8x1xf32> to vector<8x8xf32>
    %144 = arith.mulf %139, %143 : vector<8x8xf32>
    %cst_49 = arith.constant dense<0.000000e+00> : vector<8x16xf32>
    %145 = tpu.matmul %144, %131, %cst_49 {dimension_numbers = #tpu.dot_dimension_numbers<[1], [0], [0], [1], [0, 0, 1, 1], [], []>} : vector<8x8xf32>, vector<8x16xf32>, vector<8x16xf32> -> vector<8x16xf32>
    %146 = vector.extract_strided_slice %126 {offsets = [0, 16], sizes = [8, 16], strides = [1, 1]} : vector<8x32xf32> to vector<8x16xf32>
    %147 = vector.extract_strided_slice %127 {offsets = [0, 16], sizes = [8, 16], strides = [1, 1]} : vector<8x32xf32> to vector<8x16xf32>
    %148 = vector.extract_strided_slice %128 {offsets = [0, 16], sizes = [8, 16], strides = [1, 1]} : vector<8x32xf32> to vector<8x16xf32>
    %cst_50 = arith.constant dense<0.000000e+00> : vector<8x8xf32>
    %149 = tpu.matmul %146, %147, %cst_50 {dimension_numbers = #tpu.dot_dimension_numbers<[1], [1], [0], [0], [0, 0, 1, 0], [], []>} : vector<8x16xf32>, vector<8x16xf32>, vector<8x8xf32> -> vector<8x8xf32>
    %cst_51 = arith.constant 2.500000e-01 : f32
    %150 = vector.broadcast %cst_51 : f32 to vector<8x8xf32>
    %151 = arith.mulf %149, %150 : vector<8x8xf32>
    %cst_52 = arith.constant dense<0xFF800000> : vector<8xf32>
    %152 = vector.multi_reduction <maximumf>, %151, %cst_52 [1] : vector<8x8xf32> to vector<8xf32>
    %153 = vector.shape_cast %152 : vector<8xf32> to vector<8x1xf32>
    %154 = vector.broadcast %153 : vector<8x1xf32> to vector<8x8xf32>
    %155 = arith.subf %151, %154 : vector<8x8xf32>
    %156 = math.exp %155 : vector<8x8xf32>
    %cst_53 = arith.constant dense<0.000000e+00> : vector<8xf32>
    %157 = vector.multi_reduction <add>, %156, %cst_53 [1] : vector<8x8xf32> to vector<8xf32>
    %158 = vector.shape_cast %157 : vector<8xf32> to vector<8x1xf32>
    %159 = tpu.reciprocal %158 {approx = true} : vector<8x1xf32> -> vector<8x1xf32>
    %160 = vector.broadcast %159 : vector<8x1xf32> to vector<8x8xf32>
    %161 = arith.mulf %156, %160 : vector<8x8xf32>
    %cst_54 = arith.constant dense<0.000000e+00> : vector<8x16xf32>
    %162 = tpu.matmul %161, %148, %cst_54 {dimension_numbers = #tpu.dot_dimension_numbers<[1], [0], [0], [1], [0, 0, 1, 1], [], []>} : vector<8x8xf32>, vector<8x16xf32>, vector<8x16xf32> -> vector<8x16xf32>
    %163 = tpu.concatenate %145, %162 in 1 : vector<8x16xf32>, vector<8x16xf32> -> vector<8x32xf32>
    %c0_55 = arith.constant 0 : index
    %c0_56 = arith.constant 0 : index
    %164 = vector.load %arg8[%c0_55, %c0_56] : memref<32x32xf32, #tpu.memory_space<vmem>>, vector<32x32xf32>
    %cst_57 = arith.constant dense<0.000000e+00> : vector<8x32xf32>
    %165 = tpu.matmul %163, %164, %cst_57 {dimension_numbers = #tpu.dot_dimension_numbers<[1], [0], [0], [1], [0, 0, 1, 1], [], []>} : vector<8x32xf32>, vector<32x32xf32>, vector<8x32xf32> -> vector<8x32xf32>
    %166 = vector.extract_strided_slice %0 {offsets = [10, 0], sizes = [1, 32], strides = [1, 1]} : vector<24x128xf32> to vector<1x32xf32>
    %167 = vector.broadcast %166 : vector<1x32xf32> to vector<8x32xf32>
    %168 = arith.addf %165, %167 : vector<8x32xf32>
    %169 = arith.addf %120, %168 : vector<8x32xf32>
    %cst_58 = arith.constant dense<0.000000e+00> : vector<8xf32>
    %170 = vector.multi_reduction <add>, %169, %cst_58 [1] : vector<8x32xf32> to vector<8xf32>
    %171 = vector.shape_cast %170 : vector<8xf32> to vector<8x1xf32>
    %cst_59 = arith.constant 3.200000e+01 : f32
    %172 = vector.broadcast %cst_59 : f32 to vector<8x1xf32>
    %173 = arith.divf %171, %172 : vector<8x1xf32>
    %174 = vector.broadcast %173 : vector<8x1xf32> to vector<8x32xf32>
    %175 = arith.subf %169, %174 : vector<8x32xf32>
    %176 = arith.mulf %175, %175 : vector<8x32xf32>
    %cst_60 = arith.constant dense<0.000000e+00> : vector<8xf32>
    %177 = vector.multi_reduction <add>, %176, %cst_60 [1] : vector<8x32xf32> to vector<8xf32>
    %178 = vector.shape_cast %177 : vector<8xf32> to vector<8x1xf32>
    %cst_61 = arith.constant 3.200000e+01 : f32
    %179 = vector.broadcast %cst_61 : f32 to vector<8x1xf32>
    %180 = arith.divf %178, %179 : vector<8x1xf32>
    %181 = vector.broadcast %173 : vector<8x1xf32> to vector<8x32xf32>
    %182 = arith.subf %169, %181 : vector<8x32xf32>
    %cst_62 = arith.constant 9.99999974E-6 : f32
    %183 = vector.broadcast %cst_62 : f32 to vector<8x1xf32>
    %184 = arith.addf %180, %183 : vector<8x1xf32>
    %185 = math.rsqrt %184 : vector<8x1xf32>
    %186 = vector.broadcast %185 : vector<8x1xf32> to vector<8x32xf32>
    %187 = arith.mulf %182, %186 : vector<8x32xf32>
    %188 = vector.extract_strided_slice %0 {offsets = [11, 0], sizes = [1, 32], strides = [1, 1]} : vector<24x128xf32> to vector<1x32xf32>
    %189 = vector.broadcast %188 : vector<1x32xf32> to vector<8x32xf32>
    %190 = arith.mulf %187, %189 : vector<8x32xf32>
    %191 = vector.extract_strided_slice %0 {offsets = [12, 0], sizes = [1, 32], strides = [1, 1]} : vector<24x128xf32> to vector<1x32xf32>
    %192 = vector.broadcast %191 : vector<1x32xf32> to vector<8x32xf32>
    %193 = arith.addf %190, %192 : vector<8x32xf32>
    %c0_63 = arith.constant 0 : index
    %c0_64 = arith.constant 0 : index
    %194 = vector.load %arg9[%c0_63, %c0_64] : memref<32x32xf32, #tpu.memory_space<vmem>>, vector<32x32xf32>
    %cst_65 = arith.constant dense<0.000000e+00> : vector<8x32xf32>
    %195 = tpu.matmul %193, %194, %cst_65 {dimension_numbers = #tpu.dot_dimension_numbers<[1], [0], [0], [1], [0, 0, 1, 1], [], []>} : vector<8x32xf32>, vector<32x32xf32>, vector<8x32xf32> -> vector<8x32xf32>
    %196 = vector.extract_strided_slice %0 {offsets = [13, 0], sizes = [1, 32], strides = [1, 1]} : vector<24x128xf32> to vector<1x32xf32>
    %197 = vector.broadcast %196 : vector<1x32xf32> to vector<8x32xf32>
    %198 = arith.addf %195, %197 : vector<8x32xf32>
    %c0_66 = arith.constant 0 : index
    %c0_67 = arith.constant 0 : index
    %199 = vector.load %arg10[%c0_66, %c0_67] : memref<32x64xf32, #tpu.memory_space<vmem>>, vector<32x64xf32>
    %cst_68 = arith.constant dense<0.000000e+00> : vector<64x64xf32>
    %200 = tpu.matmul %119, %199, %cst_68 {dimension_numbers = #tpu.dot_dimension_numbers<[1], [0], [0], [1], [0, 0, 1, 1], [], []>} : vector<64x32xf32>, vector<32x64xf32>, vector<64x64xf32> -> vector<64x64xf32>
    %201 = vector.extract_strided_slice %0 {offsets = [14, 0], sizes = [1, 64], strides = [1, 1]} : vector<24x128xf32> to vector<1x64xf32>
    %202 = vector.broadcast %201 : vector<1x64xf32> to vector<64x64xf32>
    %203 = arith.addf %200, %202 : vector<64x64xf32>
    %204 = vector.extract_strided_slice %203 {offsets = [0, 0], sizes = [64, 32], strides = [1, 1]} : vector<64x64xf32> to vector<64x32xf32>
    %205 = vector.extract_strided_slice %203 {offsets = [0, 32], sizes = [64, 32], strides = [1, 1]} : vector<64x64xf32> to vector<64x32xf32>
    %206 = vector.extract_strided_slice %198 {offsets = [0, 0], sizes = [8, 16], strides = [1, 1]} : vector<8x32xf32> to vector<8x16xf32>
    %207 = vector.extract_strided_slice %204 {offsets = [0, 0], sizes = [64, 16], strides = [1, 1]} : vector<64x32xf32> to vector<64x16xf32>
    %208 = vector.extract_strided_slice %205 {offsets = [0, 0], sizes = [64, 16], strides = [1, 1]} : vector<64x32xf32> to vector<64x16xf32>
    %cst_69 = arith.constant dense<0.000000e+00> : vector<8x64xf32>
    %209 = tpu.matmul %206, %207, %cst_69 {dimension_numbers = #tpu.dot_dimension_numbers<[1], [1], [0], [0], [0, 0, 1, 0], [], []>} : vector<8x16xf32>, vector<64x16xf32>, vector<8x64xf32> -> vector<8x64xf32>
    %cst_70 = arith.constant 2.500000e-01 : f32
    %210 = vector.broadcast %cst_70 : f32 to vector<8x64xf32>
    %211 = arith.mulf %209, %210 : vector<8x64xf32>
    %cst_71 = arith.constant dense<0xFF800000> : vector<8xf32>
    %212 = vector.multi_reduction <maximumf>, %211, %cst_71 [1] : vector<8x64xf32> to vector<8xf32>
    %213 = vector.shape_cast %212 : vector<8xf32> to vector<8x1xf32>
    %214 = vector.broadcast %213 : vector<8x1xf32> to vector<8x64xf32>
    %215 = arith.subf %211, %214 : vector<8x64xf32>
    %216 = math.exp %215 : vector<8x64xf32>
    %cst_72 = arith.constant dense<0.000000e+00> : vector<8xf32>
    %217 = vector.multi_reduction <add>, %216, %cst_72 [1] : vector<8x64xf32> to vector<8xf32>
    %218 = vector.shape_cast %217 : vector<8xf32> to vector<8x1xf32>
    %219 = tpu.reciprocal %218 {approx = true} : vector<8x1xf32> -> vector<8x1xf32>
    %220 = vector.broadcast %219 : vector<8x1xf32> to vector<8x64xf32>
    %221 = arith.mulf %216, %220 : vector<8x64xf32>
    %cst_73 = arith.constant dense<0.000000e+00> : vector<8x16xf32>
    %222 = tpu.matmul %221, %208, %cst_73 {dimension_numbers = #tpu.dot_dimension_numbers<[1], [0], [0], [1], [0, 0, 1, 1], [], []>} : vector<8x64xf32>, vector<64x16xf32>, vector<8x16xf32> -> vector<8x16xf32>
    %223 = vector.extract_strided_slice %198 {offsets = [0, 16], sizes = [8, 16], strides = [1, 1]} : vector<8x32xf32> to vector<8x16xf32>
    %224 = vector.extract_strided_slice %204 {offsets = [0, 16], sizes = [64, 16], strides = [1, 1]} : vector<64x32xf32> to vector<64x16xf32>
    %225 = vector.extract_strided_slice %205 {offsets = [0, 16], sizes = [64, 16], strides = [1, 1]} : vector<64x32xf32> to vector<64x16xf32>
    %cst_74 = arith.constant dense<0.000000e+00> : vector<8x64xf32>
    %226 = tpu.matmul %223, %224, %cst_74 {dimension_numbers = #tpu.dot_dimension_numbers<[1], [1], [0], [0], [0, 0, 1, 0], [], []>} : vector<8x16xf32>, vector<64x16xf32>, vector<8x64xf32> -> vector<8x64xf32>
    %cst_75 = arith.constant 2.500000e-01 : f32
    %227 = vector.broadcast %cst_75 : f32 to vector<8x64xf32>
    %228 = arith.mulf %226, %227 : vector<8x64xf32>
    %cst_76 = arith.constant dense<0xFF800000> : vector<8xf32>
    %229 = vector.multi_reduction <maximumf>, %228, %cst_76 [1] : vector<8x64xf32> to vector<8xf32>
    %230 = vector.shape_cast %229 : vector<8xf32> to vector<8x1xf32>
    %231 = vector.broadcast %230 : vector<8x1xf32> to vector<8x64xf32>
    %232 = arith.subf %228, %231 : vector<8x64xf32>
    %233 = math.exp %232 : vector<8x64xf32>
    %cst_77 = arith.constant dense<0.000000e+00> : vector<8xf32>
    %234 = vector.multi_reduction <add>, %233, %cst_77 [1] : vector<8x64xf32> to vector<8xf32>
    %235 = vector.shape_cast %234 : vector<8xf32> to vector<8x1xf32>
    %236 = tpu.reciprocal %235 {approx = true} : vector<8x1xf32> -> vector<8x1xf32>
    %237 = vector.broadcast %236 : vector<8x1xf32> to vector<8x64xf32>
    %238 = arith.mulf %233, %237 : vector<8x64xf32>
    %cst_78 = arith.constant dense<0.000000e+00> : vector<8x16xf32>
    %239 = tpu.matmul %238, %225, %cst_78 {dimension_numbers = #tpu.dot_dimension_numbers<[1], [0], [0], [1], [0, 0, 1, 1], [], []>} : vector<8x64xf32>, vector<64x16xf32>, vector<8x16xf32> -> vector<8x16xf32>
    %240 = tpu.concatenate %222, %239 in 1 : vector<8x16xf32>, vector<8x16xf32> -> vector<8x32xf32>
    %c0_79 = arith.constant 0 : index
    %c0_80 = arith.constant 0 : index
    %241 = vector.load %arg11[%c0_79, %c0_80] : memref<32x32xf32, #tpu.memory_space<vmem>>, vector<32x32xf32>
    %cst_81 = arith.constant dense<0.000000e+00> : vector<8x32xf32>
    %242 = tpu.matmul %240, %241, %cst_81 {dimension_numbers = #tpu.dot_dimension_numbers<[1], [0], [0], [1], [0, 0, 1, 1], [], []>} : vector<8x32xf32>, vector<32x32xf32>, vector<8x32xf32> -> vector<8x32xf32>
    %243 = vector.extract_strided_slice %0 {offsets = [15, 0], sizes = [1, 32], strides = [1, 1]} : vector<24x128xf32> to vector<1x32xf32>
    %244 = vector.broadcast %243 : vector<1x32xf32> to vector<8x32xf32>
    %245 = arith.addf %242, %244 : vector<8x32xf32>
    %246 = arith.addf %193, %245 : vector<8x32xf32>
    %cst_82 = arith.constant dense<0.000000e+00> : vector<8xf32>
    %247 = vector.multi_reduction <add>, %246, %cst_82 [1] : vector<8x32xf32> to vector<8xf32>
    %248 = vector.shape_cast %247 : vector<8xf32> to vector<8x1xf32>
    %cst_83 = arith.constant 3.200000e+01 : f32
    %249 = vector.broadcast %cst_83 : f32 to vector<8x1xf32>
    %250 = arith.divf %248, %249 : vector<8x1xf32>
    %251 = vector.broadcast %250 : vector<8x1xf32> to vector<8x32xf32>
    %252 = arith.subf %246, %251 : vector<8x32xf32>
    %253 = arith.mulf %252, %252 : vector<8x32xf32>
    %cst_84 = arith.constant dense<0.000000e+00> : vector<8xf32>
    %254 = vector.multi_reduction <add>, %253, %cst_84 [1] : vector<8x32xf32> to vector<8xf32>
    %255 = vector.shape_cast %254 : vector<8xf32> to vector<8x1xf32>
    %cst_85 = arith.constant 3.200000e+01 : f32
    %256 = vector.broadcast %cst_85 : f32 to vector<8x1xf32>
    %257 = arith.divf %255, %256 : vector<8x1xf32>
    %258 = vector.broadcast %250 : vector<8x1xf32> to vector<8x32xf32>
    %259 = arith.subf %246, %258 : vector<8x32xf32>
    %cst_86 = arith.constant 9.99999974E-6 : f32
    %260 = vector.broadcast %cst_86 : f32 to vector<8x1xf32>
    %261 = arith.addf %257, %260 : vector<8x1xf32>
    %262 = math.rsqrt %261 : vector<8x1xf32>
    %263 = vector.broadcast %262 : vector<8x1xf32> to vector<8x32xf32>
    %264 = arith.mulf %259, %263 : vector<8x32xf32>
    %265 = vector.extract_strided_slice %0 {offsets = [16, 0], sizes = [1, 32], strides = [1, 1]} : vector<24x128xf32> to vector<1x32xf32>
    %266 = vector.broadcast %265 : vector<1x32xf32> to vector<8x32xf32>
    %267 = arith.mulf %264, %266 : vector<8x32xf32>
    %268 = vector.extract_strided_slice %0 {offsets = [17, 0], sizes = [1, 32], strides = [1, 1]} : vector<24x128xf32> to vector<1x32xf32>
    %269 = vector.broadcast %268 : vector<1x32xf32> to vector<8x32xf32>
    %270 = arith.addf %267, %269 : vector<8x32xf32>
    %c0_87 = arith.constant 0 : index
    %c0_88 = arith.constant 0 : index
    %271 = vector.load %arg12[%c0_87, %c0_88] : memref<32x64xf32, #tpu.memory_space<vmem>>, vector<32x64xf32>
    %cst_89 = arith.constant dense<0.000000e+00> : vector<8x64xf32>
    %272 = tpu.matmul %270, %271, %cst_89 {dimension_numbers = #tpu.dot_dimension_numbers<[1], [0], [0], [1], [0, 0, 1, 1], [], []>} : vector<8x32xf32>, vector<32x64xf32>, vector<8x64xf32> -> vector<8x64xf32>
    %273 = vector.extract_strided_slice %0 {offsets = [18, 0], sizes = [1, 64], strides = [1, 1]} : vector<24x128xf32> to vector<1x64xf32>
    %274 = vector.broadcast %273 : vector<1x64xf32> to vector<8x64xf32>
    %275 = arith.addf %272, %274 : vector<8x64xf32>
    %cst_90 = arith.constant 0.000000e+00 : f32
    %276 = vector.broadcast %cst_90 : f32 to vector<8x64xf32>
    %277 = arith.maximumf %275, %276 : vector<8x64xf32>
    %c0_91 = arith.constant 0 : index
    %c0_92 = arith.constant 0 : index
    %278 = vector.load %arg13[%c0_91, %c0_92] : memref<64x32xf32, #tpu.memory_space<vmem>>, vector<64x32xf32>
    %cst_93 = arith.constant dense<0.000000e+00> : vector<8x32xf32>
    %279 = tpu.matmul %277, %278, %cst_93 {dimension_numbers = #tpu.dot_dimension_numbers<[1], [0], [0], [1], [0, 0, 1, 1], [], []>} : vector<8x64xf32>, vector<64x32xf32>, vector<8x32xf32> -> vector<8x32xf32>
    %280 = vector.extract_strided_slice %0 {offsets = [19, 0], sizes = [1, 32], strides = [1, 1]} : vector<24x128xf32> to vector<1x32xf32>
    %281 = vector.broadcast %280 : vector<1x32xf32> to vector<8x32xf32>
    %282 = arith.addf %279, %281 : vector<8x32xf32>
    %283 = arith.addf %270, %282 : vector<8x32xf32>
    %cst_94 = arith.constant dense<0.000000e+00> : vector<8xf32>
    %284 = vector.multi_reduction <add>, %283, %cst_94 [1] : vector<8x32xf32> to vector<8xf32>
    %285 = vector.shape_cast %284 : vector<8xf32> to vector<8x1xf32>
    %cst_95 = arith.constant 3.200000e+01 : f32
    %286 = vector.broadcast %cst_95 : f32 to vector<8x1xf32>
    %287 = arith.divf %285, %286 : vector<8x1xf32>
    %288 = vector.broadcast %287 : vector<8x1xf32> to vector<8x32xf32>
    %289 = arith.subf %283, %288 : vector<8x32xf32>
    %290 = arith.mulf %289, %289 : vector<8x32xf32>
    %cst_96 = arith.constant dense<0.000000e+00> : vector<8xf32>
    %291 = vector.multi_reduction <add>, %290, %cst_96 [1] : vector<8x32xf32> to vector<8xf32>
    %292 = vector.shape_cast %291 : vector<8xf32> to vector<8x1xf32>
    %cst_97 = arith.constant 3.200000e+01 : f32
    %293 = vector.broadcast %cst_97 : f32 to vector<8x1xf32>
    %294 = arith.divf %292, %293 : vector<8x1xf32>
    %295 = vector.broadcast %287 : vector<8x1xf32> to vector<8x32xf32>
    %296 = arith.subf %283, %295 : vector<8x32xf32>
    %cst_98 = arith.constant 9.99999974E-6 : f32
    %297 = vector.broadcast %cst_98 : f32 to vector<8x1xf32>
    %298 = arith.addf %294, %297 : vector<8x1xf32>
    %299 = math.rsqrt %298 : vector<8x1xf32>
    %300 = vector.broadcast %299 : vector<8x1xf32> to vector<8x32xf32>
    %301 = arith.mulf %296, %300 : vector<8x32xf32>
    %302 = vector.extract_strided_slice %0 {offsets = [20, 0], sizes = [1, 32], strides = [1, 1]} : vector<24x128xf32> to vector<1x32xf32>
    %303 = vector.broadcast %302 : vector<1x32xf32> to vector<8x32xf32>
    %304 = arith.mulf %301, %303 : vector<8x32xf32>
    %305 = vector.extract_strided_slice %0 {offsets = [21, 0], sizes = [1, 32], strides = [1, 1]} : vector<24x128xf32> to vector<1x32xf32>
    %306 = vector.broadcast %305 : vector<1x32xf32> to vector<8x32xf32>
    %307 = arith.addf %304, %306 : vector<8x32xf32>
    %c0_99 = arith.constant 0 : index
    %c0_100 = arith.constant 0 : index
    %308 = vector.load %arg14[%c0_99, %c0_100] : memref<32x40xf32, #tpu.memory_space<vmem>>, vector<32x40xf32>
    %cst_101 = arith.constant dense<0.000000e+00> : vector<8x40xf32>
    %309 = tpu.matmul %307, %308, %cst_101 {dimension_numbers = #tpu.dot_dimension_numbers<[1], [0], [0], [1], [0, 0, 1, 1], [], []>} : vector<8x32xf32>, vector<32x40xf32>, vector<8x40xf32> -> vector<8x40xf32>
    %310 = vector.extract_strided_slice %0 {offsets = [22, 0], sizes = [1, 40], strides = [1, 1]} : vector<24x128xf32> to vector<1x40xf32>
    %311 = vector.broadcast %310 : vector<1x40xf32> to vector<8x40xf32>
    %312 = arith.addf %309, %311 : vector<8x40xf32>
    %313 = vector.extract_strided_slice %312 {offsets = [0, 0], sizes = [8, 8], strides = [1, 1]} : vector<8x40xf32> to vector<8x8xf32>
    %314 = vector.extract_strided_slice %312 {offsets = [0, 8], sizes = [8, 32], strides = [1, 1]} : vector<8x40xf32> to vector<8x32xf32>
    %cst_102 = arith.constant 0.000000e+00 : f32
    %315 = vector.broadcast %cst_102 : f32 to vector<8x32xf32>
    %316 = arith.maximumf %314, %315 : vector<8x32xf32>
    %c0_103 = arith.constant 0 : index
    %c0_104 = arith.constant 0 : index
    %317 = vector.load %arg15[%c0_103, %c0_104] : memref<32x4xf32, #tpu.memory_space<vmem>>, vector<32x4xf32>
    %cst_105 = arith.constant dense<0.000000e+00> : vector<8x4xf32>
    %318 = tpu.matmul %316, %317, %cst_105 {dimension_numbers = #tpu.dot_dimension_numbers<[1], [0], [0], [1], [0, 0, 1, 1], [], []>} : vector<8x32xf32>, vector<32x4xf32>, vector<8x4xf32> -> vector<8x4xf32>
    %319 = vector.extract_strided_slice %0 {offsets = [23, 0], sizes = [1, 4], strides = [1, 1]} : vector<24x128xf32> to vector<1x4xf32>
    %320 = vector.broadcast %319 : vector<1x4xf32> to vector<8x4xf32>
    %321 = arith.addf %318, %320 : vector<8x4xf32>
    %322 = arith.negf %321 : vector<8x4xf32>
    %323 = math.exp %322 : vector<8x4xf32>
    %cst_106 = arith.constant 1.000000e+00 : f32
    %324 = vector.broadcast %cst_106 : f32 to vector<8x4xf32>
    %325 = arith.addf %324, %323 : vector<8x4xf32>
    %326 = arith.divf %324, %325 : vector<8x4xf32>
    %cst_107 = arith.constant 0.000000e+00 : f32
    %327 = vector.broadcast %cst_107 : f32 to vector<8x116xf32>
    %328 = tpu.concatenate %313, %326, %327 in 1 : vector<8x8xf32>, vector<8x4xf32>, vector<8x116xf32> -> vector<8x128xf32>
    %c0_108 = arith.constant 0 : index
    %c0_109 = arith.constant 0 : index
    %c0_110 = arith.constant 0 : index
    %329 = vector.load %arg18[%c0_108, %c0_109, %c0_110] : memref<1x8x128xf32, #tpu.memory_space<vmem>>, vector<1x8x128xf32>
    %330 = vector.shape_cast %329 : vector<1x8x128xf32> to vector<8x128xf32>
    %331 = vector.shape_cast %328 : vector<8x128xf32> to vector<1x8x128xf32>
    tpu.vector_store %arg18[%c0_108, %c0_109, %c0_110], %331 {strides = array<i32>} : memref<1x8x128xf32, #tpu.memory_space<vmem>>, vector<1x8x128xf32>,
    return
  }
  func.func @transform_0(%arg0: i32) -> (i32, i32, i32) {
    %c0_i32 = arith.constant 0 : i32
    %c0_i32_0 = arith.constant 0 : i32
    %c0_i32_1 = arith.constant 0 : i32
    return %arg0, %c0_i32, %c0_i32_0 : i32, i32, i32
  }
  func.func @transform_1(%arg0: i32) -> (i32, i32) {
    %c0_i32 = arith.constant 0 : i32
    %c0_i32_0 = arith.constant 0 : i32
    %c0_i32_1 = arith.constant 0 : i32
    return %c0_i32, %c0_i32_0 : i32, i32
  }
  func.func @transform_2(%arg0: i32) -> (i32, i32) {
    %c0_i32 = arith.constant 0 : i32
    %c0_i32_0 = arith.constant 0 : i32
    %c0_i32_1 = arith.constant 0 : i32
    return %c0_i32, %c0_i32_0 : i32, i32
  }
  func.func @transform_3(%arg0: i32) -> (i32, i32) {
    %c0_i32 = arith.constant 0 : i32
    %c0_i32_0 = arith.constant 0 : i32
    %c0_i32_1 = arith.constant 0 : i32
    return %c0_i32, %c0_i32_0 : i32, i32
  }
  func.func @transform_4(%arg0: i32) -> (i32, i32) {
    %c0_i32 = arith.constant 0 : i32
    %c0_i32_0 = arith.constant 0 : i32
    %c0_i32_1 = arith.constant 0 : i32
    return %c0_i32, %c0_i32_0 : i32, i32
  }
  func.func @transform_5(%arg0: i32) -> (i32, i32) {
    %c0_i32 = arith.constant 0 : i32
    %c0_i32_0 = arith.constant 0 : i32
    %c0_i32_1 = arith.constant 0 : i32
    return %c0_i32, %c0_i32_0 : i32, i32
  }
  func.func @transform_6(%arg0: i32) -> (i32, i32) {
    %c0_i32 = arith.constant 0 : i32
    %c0_i32_0 = arith.constant 0 : i32
    %c0_i32_1 = arith.constant 0 : i32
    return %c0_i32, %c0_i32_0 : i32, i32
  }
  func.func @transform_7(%arg0: i32) -> (i32, i32) {
    %c0_i32 = arith.constant 0 : i32
    %c0_i32_0 = arith.constant 0 : i32
    %c0_i32_1 = arith.constant 0 : i32
    return %c0_i32, %c0_i32_0 : i32, i32
  }
  func.func @transform_8(%arg0: i32) -> (i32, i32) {
    %c0_i32 = arith.constant 0 : i32
    %c0_i32_0 = arith.constant 0 : i32
    %c0_i32_1 = arith.constant 0 : i32
    return %c0_i32, %c0_i32_0 : i32, i32
  }
  func.func @transform_9(%arg0: i32) -> (i32, i32) {
    %c0_i32 = arith.constant 0 : i32
    %c0_i32_0 = arith.constant 0 : i32
    %c0_i32_1 = arith.constant 0 : i32
    return %c0_i32, %c0_i32_0 : i32, i32
  }
  func.func @transform_10(%arg0: i32) -> (i32, i32) {
    %c0_i32 = arith.constant 0 : i32
    %c0_i32_0 = arith.constant 0 : i32
    %c0_i32_1 = arith.constant 0 : i32
    return %c0_i32, %c0_i32_0 : i32, i32
  }
  func.func @transform_11(%arg0: i32) -> (i32, i32) {
    %c0_i32 = arith.constant 0 : i32
    %c0_i32_0 = arith.constant 0 : i32
    %c0_i32_1 = arith.constant 0 : i32
    return %c0_i32, %c0_i32_0 : i32, i32
  }
  func.func @transform_12(%arg0: i32) -> (i32, i32) {
    %c0_i32 = arith.constant 0 : i32
    %c0_i32_0 = arith.constant 0 : i32
    %c0_i32_1 = arith.constant 0 : i32
    return %c0_i32, %c0_i32_0 : i32, i32
  }
  func.func @transform_13(%arg0: i32) -> (i32, i32) {
    %c0_i32 = arith.constant 0 : i32
    %c0_i32_0 = arith.constant 0 : i32
    %c0_i32_1 = arith.constant 0 : i32
    return %c0_i32, %c0_i32_0 : i32, i32
  }
  func.func @transform_14(%arg0: i32) -> (i32, i32) {
    %c0_i32 = arith.constant 0 : i32
    %c0_i32_0 = arith.constant 0 : i32
    %c0_i32_1 = arith.constant 0 : i32
    return %c0_i32, %c0_i32_0 : i32, i32
  }
  func.func @transform_15(%arg0: i32) -> (i32, i32) {
    %c0_i32 = arith.constant 0 : i32
    %c0_i32_0 = arith.constant 0 : i32
    %c0_i32_1 = arith.constant 0 : i32
    return %c0_i32, %c0_i32_0 : i32, i32
  }
  func.func @transform_16(%arg0: i32) -> (i32, i32) {
    %c0_i32 = arith.constant 0 : i32
    %c0_i32_0 = arith.constant 0 : i32
    %c0_i32_1 = arith.constant 0 : i32
    return %c0_i32, %c0_i32_0 : i32, i32
  }
  func.func @transform_17(%arg0: i32) -> (i32, i32, i32) {
    %c0_i32 = arith.constant 0 : i32
    %c0_i32_0 = arith.constant 0 : i32
    %c0_i32_1 = arith.constant 0 : i32
    return %arg0, %c0_i32, %c0_i32_0 : i32, i32, i32
  }
}

</mosaic_0001>

<llo_original>
// kernel: rtdetr_forward.1
$region0: #{rtdetr_forward.1}
  #allocation0 [shape = 'u32[]', space=smem, size = 0x4, offset = 0x4, fixed_abs, tag = 'smem constant byte address 0x4 - core index']
  #allocation1 [shape = 'u32[72,128]{1,0:T(1,128)}', space=vmem, size = 0x9000, scoped, tag = 'internal scratch']
  %s0 = inlined_call_operand.vmem [shape: f32[2,64,128], index: 0, kind: input, shape index: {}]
  %s1 = inlined_call_operand.vmem [shape: f32[128,32], index: 1, kind: input, shape index: {}]
  %s2 = inlined_call_operand.vmem [shape: f32[32,96], index: 2, kind: input, shape index: {}]
  %s3 = inlined_call_operand.vmem [shape: f32[32,32], index: 3, kind: input, shape index: {}]
  %s4 = inlined_call_operand.vmem [shape: f32[32,64], index: 4, kind: input, shape index: {}]
  %s5 = inlined_call_operand.vmem [shape: f32[64,32], index: 5, kind: input, shape index: {}]
  %s6 = inlined_call_operand.vmem [shape: f32[32,96], index: 6, kind: input, shape index: {}]
  %s7 = inlined_call_operand.vmem [shape: f32[32,32], index: 7, kind: input, shape index: {}]
  %s8 = inlined_call_operand.vmem [shape: f32[32,32], index: 8, kind: input, shape index: {}]
  %s9 = inlined_call_operand.vmem [shape: f32[32,64], index: 9, kind: input, shape index: {}]
  %s10 = inlined_call_operand.vmem [shape: f32[32,32], index: 10, kind: input, shape index: {}]
  %s11 = inlined_call_operand.vmem [shape: f32[32,64], index: 11, kind: input, shape index: {}]
  %s12 = inlined_call_operand.vmem [shape: f32[64,32], index: 12, kind: input, shape index: {}]
  %s13 = inlined_call_operand.vmem [shape: f32[32,40], index: 13, kind: input, shape index: {}]
  %s14 = inlined_call_operand.vmem [shape: f32[32,4], index: 14, kind: input, shape index: {}]
  %s15 = inlined_call_operand.vmem [shape: f32[8,32], index: 15, kind: input, shape index: {}]
  %s16 = inlined_call_operand.vmem [shape: f32[24,128], index: 16, kind: input, shape index: {}]
  %s17 = inlined_call_operand.vmem [shape: f32[2,8,128], index: 17, kind: output, shape index: {}]
  %s18 = sld [smem:[#allocation0]]
  $region101: #{rtdetr_forward.1} parent=0
    _
  %s20 = ssub.s32 1, %s18
  %s21 = scalar_select 0, %s20, %s18
  loop: start=0, step=1, limit=4
  $region2: #{rtdetr_forward.1} parent=0 // loop_pre_header
    _
  $region3: #{rtdetr_forward.1} parent=0 // loop_header
    %s23 = sphi 0, %s27
    %p24 = scmp.ge.s32.totalorder %s23, 4
    %s33 = sphi 0, %s35
    %s36 = sphi 0, %s33
    %s37 = sphi 0, %s36
    %s53 = sphi 0, %s37
    %s57 = sphi 0, %s57
    %s59 = sphi 0, %s57
    %s60 = sphi 0, %s59
    %s74 = sphi 0, %s60
    %s78 = sphi 0, %s78
    %s80 = sphi 0, %s78
    %s81 = sphi 0, %s80
    %s95 = sphi 0, %s81
    %s99 = sphi 0, %s99
    %s101 = sphi 0, %s99
    %s102 = sphi 0, %s101
    %s116 = sphi 0, %s102
    %s120 = sphi 0, %s120
    %s122 = sphi 0, %s120
    %s123 = sphi 0, %s122
    %s137 = sphi 0, %s123
    %s141 = sphi 0, %s141
    %s143 = sphi 0, %s141
    %s144 = sphi 0, %s143
    %s158 = sphi 0, %s144
    %s162 = sphi 0, %s162
    %s164 = sphi 0, %s162
    %s165 = sphi 0, %s164
    %s179 = sphi 0, %s165
    %s183 = sphi 0, %s183
    %s185 = sphi 0, %s183
    %s186 = sphi 0, %s185
    %s200 = sphi 0, %s186
    %s204 = sphi 0, %s204
    %s206 = sphi 0, %s204
    %s207 = sphi 0, %s206
    %s221 = sphi 0, %s207
    %s225 = sphi 0, %s225
    %s227 = sphi 0, %s225
    %s228 = sphi 0, %s227
    %s242 = sphi 0, %s228
    %s246 = sphi 0, %s246
    %s248 = sphi 0, %s246
    %s249 = sphi 0, %s248
    %s263 = sphi 0, %s249
    %s267 = sphi 0, %s267
    %s269 = sphi 0, %s267
    %s270 = sphi 0, %s269
    %s284 = sphi 0, %s270
    %s288 = sphi 0, %s288
    %s290 = sphi 0, %s288
    %s291 = sphi 0, %s290
    %s305 = sphi 0, %s291
    %s309 = sphi 0, %s309
    %s311 = sphi 0, %s309
    %s312 = sphi 0, %s311
    %s326 = sphi 0, %s312
    %s330 = sphi 0, %s330
    %s332 = sphi 0, %s330
    %s333 = sphi 0, %s332
    %s347 = sphi 0, %s333
    %s351 = sphi 0, %s351
    %s353 = sphi 0, %s351
    %s354 = sphi 0, %s353
    %s368 = sphi 0, %s354
    %s372 = sphi 0, %s372
    %s374 = sphi 0, %s372
    %s375 = sphi 0, %s374
    %s389 = sphi 0, %s375
    %s395 = sphi 0, %s397
    %s398 = sphi 0, %s395
    %s399 = sphi 0, %s398
    %s415 = sphi 0, %s399
  $region4: #{rtdetr_forward.1} parent=0 // loop_header_branch
    %26 = sbr.rel (%p24) target = $region8
  $region5: #{rtdetr_forward.1} parent=0 // loop_body
    %s28 = ssub.s32 %s23, 1
    %s29 = ssub.s32 %s23, 2
    %s30 = sadd.s32 %s23, 1
    %s31 = ssub.s32 %s23, %s30
    %p32 = scmp.eq.s32.totalorder %s31, 0
    %s34 = sadd.s32 %s33, 1
    %s35 = scalar_select %p32, %s33, %s34
    %p38 = pneg %p32
    %p39 = scmp.eq.s32.totalorder %s23, 1
    %p40 = por %p38, %p39
    %p41 = scmp.ne.s32.totalorder %s33, %s36
    %p42 = scmp.eq.s32.totalorder %s23, 0
    %p43 = por %p41, %p42
    %p44 = scmp.ne.s32.totalorder %s33, %s36
    %p45 = scmp.eq.s32.totalorder %s28, 1
    %p46 = por %p44, %p45
    %p47 = scmp.ne.s32.totalorder %s36, %s37
    %p48 = scmp.eq.s32.totalorder %s28, 0
    %p49 = por %p47, %p48
    %p50 = scmp.ne.s32.totalorder %s36, %s37
    %p51 = scmp.eq.s32.totalorder %s29, 1
    %p52 = por %p50, %p51
    %p54 = scmp.ne.s32.totalorder %s37, %s53
    %p55 = scmp.eq.s32.totalorder %s29, 0
    %p56 = por %p54, %p55
    %s58 = sadd.s32 %s57, 1
    %p61 = scmp.eq.s32.totalorder %s23, 1
    %p62 = scmp.ne.s32.totalorder %s57, %s59
    %p63 = scmp.eq.s32.totalorder %s23, 0
    %p64 = por %p62, %p63
    %p65 = scmp.ne.s32.totalorder %s57, %s59
    %p66 = scmp.eq.s32.totalorder %s28, 1
    %p67 = por %p65, %p66
    %p68 = scmp.ne.s32.totalorder %s59, %s60
    %p69 = scmp.eq.s32.totalorder %s28, 0
    %p70 = por %p68, %p69
    %p71 = scmp.ne.s32.totalorder %s59, %s60
    %p72 = scmp.eq.s32.totalorder %s29, 1
    %p73 = por %p71, %p72
    %p75 = scmp.ne.s32.totalorder %s60, %s74
    %p76 = scmp.eq.s32.totalorder %s29, 0
    %p77 = por %p75, %p76
    %s79 = sadd.s32 %s78, 1
    %p82 = scmp.eq.s32.totalorder %s23, 1
    %p83 = scmp.ne.s32.totalorder %s78, %s80
    %p84 = scmp.eq.s32.totalorder %s23, 0
    %p85 = por %p83, %p84
    %p86 = scmp.ne.s32.totalorder %s78, %s80
    %p87 = scmp.eq.s32.totalorder %s28, 1
    %p88 = por %p86, %p87
    %p89 = scmp.ne.s32.totalorder %s80, %s81
    %p90 = scmp.eq.s32.totalorder %s28, 0
    %p91 = por %p89, %p90
    %p92 = scmp.ne.s32.totalorder %s80, %s81
    %p93 = scmp.eq.s32.totalorder %s29, 1
    %p94 = por %p92, %p93
    %p96 = scmp.ne.s32.totalorder %s81, %s95
    %p97 = scmp.eq.s32.totalorder %s29, 0
    %p98 = por %p96, %p97
    %s100 = sadd.s32 %s99, 1
    %p103 = scmp.eq.s32.totalorder %s23, 1
    %p104 = scmp.ne.s32.totalorder %s99, %s101
    %p105 = scmp.eq.s32.totalorder %s23, 0
    %p106 = por %p104, %p105
    %p107 = scmp.ne.s32.totalorder %s99, %s101
    %p108 = scmp.eq.s32.totalorder %s28, 1
    %p109 = por %p107, %p108
    %p110 = scmp.ne.s32.totalorder %s101, %s102
    %p111 = scmp.eq.s32.totalorder %s28, 0
    %p112 = por %p110, %p111
    %p113 = scmp.ne.s32.totalorder %s101, %s102
    %p114 = scmp.eq.s32.totalorder %s29, 1
    %p115 = por %p113, %p114
    %p117 = scmp.ne.s32.totalorder %s102, %s116
    %p118 = scmp.eq.s32.totalorder %s29, 0
    %p119 = por %p117, %p118
    %s121 = sadd.s32 %s120, 1
    %p124 = scmp.eq.s32.totalorder %s23, 1
    %p125 = scmp.ne.s32.totalorder %s120, %s122
    %p126 = scmp.eq.s32.totalorder %s23, 0
    %p127 = por %p125, %p126
    %p128 = scmp.ne.s32.totalorder %s120, %s122
    %p129 = scmp.eq.s32.totalorder %s28, 1
    %p130 = por %p128, %p129
    %p131 = scmp.ne.s32.totalorder %s122, %s123
    %p132 = scmp.eq.s32.totalorder %s28, 0
    %p133 = por %p131, %p132
    %p134 = scmp.ne.s32.totalorder %s122, %s123
    %p135 = scmp.eq.s32.totalorder %s29, 1
    %p136 = por %p134, %p135
    %p138 = scmp.ne.s32.totalorder %s123, %s137
    %p139 = scmp.eq.s32.totalorder %s29, 0
    %p140 = por %p138, %p139
    %s142 = sadd.s32 %s141, 1
    %p145 = scmp.eq.s32.totalorder %s23, 1
    %p146 = scmp.ne.s32.totalorder %s141, %s143
    %p147 = scmp.eq.s32.totalorder %s23, 0
    %p148 = por %p146, %p147
    %p149 = scmp.ne.s32.totalorder %s141, %s143
    %p150 = scmp.eq.s32.totalorder %s28, 1
    %p151 = por %p149, %p150
    %p152 = scmp.ne.s32.totalorder %s143, %s144
    %p153 = scmp.eq.s32.totalorder %s28, 0
    %p154 = por %p152, %p153
    %p155 = scmp.ne.s32.totalorder %s143, %s144
    %p156 = scmp.eq.s32.totalorder %s29, 1
    %p157 = por %p155, %p156
    %p159 = scmp.ne.s32.totalorder %s144, %s158
    %p160 = scmp.eq.s32.totalorder %s29, 0
    %p161 = por %p159, %p160
    %s163 = sadd.s32 %s162, 1
    %p166 = scmp.eq.s32.totalorder %s23, 1
    %p167 = scmp.ne.s32.totalorder %s162, %s164
    %p168 = scmp.eq.s32.totalorder %s23, 0
    %p169 = por %p167, %p168
    %p170 = scmp.ne.s32.totalorder %s162, %s164
    %p171 = scmp.eq.s32.totalorder %s28, 1
    %p172 = por %p170, %p171
    %p173 = scmp.ne.s32.totalorder %s164, %s165
    %p174 = scmp.eq.s32.totalorder %s28, 0
    %p175 = por %p173, %p174
    %p176 = scmp.ne.s32.totalorder %s164, %s165
    %p177 = scmp.eq.s32.totalorder %s29, 1
    %p178 = por %p176, %p177
    %p180 = scmp.ne.s32.totalorder %s165, %s179
    %p181 = scmp.eq.s32.totalorder %s29, 0
    %p182 = por %p180, %p181
    %s184 = sadd.s32 %s183, 1
    %p187 = scmp.eq.s32.totalorder %s23, 1
    %p188 = scmp.ne.s32.totalorder %s183, %s185
    %p189 = scmp.eq.s32.totalorder %s23, 0
    %p190 = por %p188, %p189
    %p191 = scmp.ne.s32.totalorder %s183, %s185
    %p192 = scmp.eq.s32.totalorder %s28, 1
    %p193 = por %p191, %p192
    %p194 = scmp.ne.s32.totalorder %s185, %s186
    %p195 = scmp.eq.s32.totalorder %s28, 0
    %p196 = por %p194, %p195
    %p197 = scmp.ne.s32.totalorder %s185, %s186
    %p198 = scmp.eq.s32.totalorder %s29, 1
    %p199 = por %p197, %p198
    %p201 = scmp.ne.s32.totalorder %s186, %s200
    %p202 = scmp.eq.s32.totalorder %s29, 0
    %p203 = por %p201, %p202
    %s205 = sadd.s32 %s204, 1
    %p208 = scmp.eq.s32.totalorder %s23, 1
    %p209 = scmp.ne.s32.totalorder %s204, %s206
    %p210 = scmp.eq.s32.totalorder %s23, 0
    %p211 = por %p209, %p210
    %p212 = scmp.ne.s32.totalorder %s204, %s206
    %p213 = scmp.eq.s32.totalorder %s28, 1
    %p214 = por %p212, %p213
    %p215 = scmp.ne.s32.totalorder %s206, %s207
    %p216 = scmp.eq.s32.totalorder %s28, 0
    %p217 = por %p215, %p216
    %p218 = scmp.ne.s32.totalorder %s206, %s207
    %p219 = scmp.eq.s32.totalorder %s29, 1
    %p220 = por %p218, %p219
    %p222 = scmp.ne.s32.totalorder %s207, %s221
    %p223 = scmp.eq.s32.totalorder %s29, 0
    %p224 = por %p222, %p223
    %s226 = sadd.s32 %s225, 1
    %p229 = scmp.eq.s32.totalorder %s23, 1
    %p230 = scmp.ne.s32.totalorder %s225, %s227
    %p231 = scmp.eq.s32.totalorder %s23, 0
    %p232 = por %p230, %p231
    %p233 = scmp.ne.s32.totalorder %s225, %s227
    %p234 = scmp.eq.s32.totalorder %s28, 1
    %p235 = por %p233, %p234
    %p236 = scmp.ne.s32.totalorder %s227, %s228
    %p237 = scmp.eq.s32.totalorder %s28, 0
    %p238 = por %p236, %p237
    %p239 = scmp.ne.s32.totalorder %s227, %s228
    %p240 = scmp.eq.s32.totalorder %s29, 1
    %p241 = por %p239, %p240
    %p243 = scmp.ne.s32.totalorder %s228, %s242
    %p244 = scmp.eq.s32.totalorder %s29, 0
    %p245 = por %p243, %p244
    %s247 = sadd.s32 %s246, 1
    %p250 = scmp.eq.s32.totalorder %s23, 1
    %p251 = scmp.ne.s32.totalorder %s246, %s248
    %p252 = scmp.eq.s32.totalorder %s23, 0
    %p253 = por %p251, %p252
    %p254 = scmp.ne.s32.totalorder %s246, %s248
    %p255 = scmp.eq.s32.totalorder %s28, 1
    %p256 = por %p254, %p255
    %p257 = scmp.ne.s32.totalorder %s248, %s249
    %p258 = scmp.eq.s32.totalorder %s28, 0
    %p259 = por %p257, %p258
    %p260 = scmp.ne.s32.totalorder %s248, %s249
    %p261 = scmp.eq.s32.totalorder %s29, 1
    %p262 = por %p260, %p261
    %p264 = scmp.ne.s32.totalorder %s249, %s263
    %p265 = scmp.eq.s32.totalorder %s29, 0
    %p266 = por %p264, %p265
    %s268 = sadd.s32 %s267, 1
    %p271 = scmp.eq.s32.totalorder %s23, 1
    %p272 = scmp.ne.s32.totalorder %s267, %s269
    %p273 = scmp.eq.s32.totalorder %s23, 0
    %p274 = por %p272, %p273
    %p275 = scmp.ne.s32.totalorder %s267, %s269
    %p276 = scmp.eq.s32.totalorder %s28, 1
    %p277 = por %p275, %p276
    %p278 = scmp.ne.s32.totalorder %s269, %s270
    %p279 = scmp.eq.s32.totalorder %s28, 0
    %p280 = por %p278, %p279
    %p281 = scmp.ne.s32.totalorder %s269, %s270
    %p282 = scmp.eq.s32.totalorder %s29, 1
    %p283 = por %p281, %p282
    %p285 = scmp.ne.s32.totalorder %s270, %s284
    %p286 = scmp.eq.s32.totalorder %s29, 0
    %p287 = por %p285, %p286
    %s289 = sadd.s32 %s288, 1
    %p292 = scmp.eq.s32.totalorder %s23, 1
    %p293 = scmp.ne.s32.totalorder %s288, %s290
    %p294 = scmp.eq.s32.totalorder %s23, 0
    %p295 = por %p293, %p294
    %p296 = scmp.ne.s32.totalorder %s288, %s290
    %p297 = scmp.eq.s32.totalorder %s28, 1
    %p298 = por %p296, %p297
    %p299 = scmp.ne.s32.totalorder %s290, %s291
    %p300 = scmp.eq.s32.totalorder %s28, 0
    %p301 = por %p299, %p300
    %p302 = scmp.ne.s32.totalorder %s290, %s291
    %p303 = scmp.eq.s32.totalorder %s29, 1
    %p304 = por %p302, %p303
    %p306 = scmp.ne.s32.totalorder %s291, %s305
    %p307 = scmp.eq.s32.totalorder %s29, 0
    %p308 = por %p306, %p307
    %s310 = sadd.s32 %s309, 1
    %p313 = scmp.eq.s32.totalorder %s23, 1
    %p314 = scmp.ne.s32.totalorder %s309, %s311
    %p315 = scmp.eq.s32.totalorder %s23, 0
    %p316 = por %p314, %p315
    %p317 = scmp.ne.s32.totalorder %s309, %s311
    %p318 = scmp.eq.s32.totalorder %s28, 1
    %p319 = por %p317, %p318
    %p320 = scmp.ne.s32.totalorder %s311, %s312
    %p321 = scmp.eq.s32.totalorder %s28, 0
    %p322 = por %p320, %p321
    %p323 = scmp.ne.s32.totalorder %s311, %s312
    %p324 = scmp.eq.s32.totalorder %s29, 1
    %p325 = por %p323, %p324
    %p327 = scmp.ne.s32.totalorder %s312, %s326
    %p328 = scmp.eq.s32.totalorder %s29, 0
    %p329 = por %p327, %p328
    %s331 = sadd.s32 %s330, 1
    %p334 = scmp.eq.s32.totalorder %s23, 1
    %p335 = scmp.ne.s32.totalorder %s330, %s332
    %p336 = scmp.eq.s32.totalorder %s23, 0
    %p337 = por %p335, %p336
    %p338 = scmp.ne.s32.totalorder %s330, %s332
    %p339 = scmp.eq.s32.totalorder %s28, 1
    %p340 = por %p338, %p339
    %p341 = scmp.ne.s32.totalorder %s332, %s333
    %p342 = scmp.eq.s32.totalorder %s28, 0
    %p343 = por %p341, %p342
    %p344 = scmp.ne.s32.totalorder %s332, %s333
    %p345 = scmp.eq.s32.totalorder %s29, 1
    %p346 = por %p344, %p345
    %p348 = scmp.ne.s32.totalorder %s333, %s347
    %p349 = scmp.eq.s32.totalorder %s29, 0
    %p350 = por %p348, %p349
    %s352 = sadd.s32 %s351, 1
    %p355 = scmp.eq.s32.totalorder %s23, 1
    %p356 = scmp.ne.s32.totalorder %s351, %s353
    %p357 = scmp.eq.s32.totalorder %s23, 0
    %p358 = por %p356, %p357
    %p359 = scmp.ne.s32.totalorder %s351, %s353
    %p360 = scmp.eq.s32.totalorder %s28, 1
    %p361 = por %p359, %p360
    %p362 = scmp.ne.s32.totalorder %s353, %s354
    %p363 = scmp.eq.s32.totalorder %s28, 0
    %p364 = por %p362, %p363
    %p365 = scmp.ne.s32.totalorder %s353, %s354
    %p366 = scmp.eq.s32.totalorder %s29, 1
    %p367 = por %p365, %p366
    %p369 = scmp.ne.s32.totalorder %s354, %s368
    %p370 = scmp.eq.s32.totalorder %s29, 0
    %p371 = por %p369, %p370
    %s373 = sadd.s32 %s372, 1
    %p376 = scmp.eq.s32.totalorder %s23, 1
    %p377 = scmp.ne.s32.totalorder %s372, %s374
    %p378 = scmp.eq.s32.totalorder %s23, 0
    %p379 = por %p377, %p378
    %p380 = scmp.ne.s32.totalorder %s372, %s374
    %p381 = scmp.eq.s32.totalorder %s28, 1
    %p382 = por %p380, %p381
    %p383 = scmp.ne.s32.totalorder %s374, %s375
    %p384 = scmp.eq.s32.totalorder %s28, 0
    %p385 = por %p383, %p384
    %p386 = scmp.ne.s32.totalorder %s374, %s375
    %p387 = scmp.eq.s32.totalorder %s29, 1
    %p388 = por %p386, %p387
    %p390 = scmp.ne.s32.totalorder %s375, %s389
    %p391 = scmp.eq.s32.totalorder %s29, 0
    %p392 = por %p390, %p391
    %s393 = ssub.s32 %s23, %s30
    %p394 = scmp.eq.s32.totalorder %s393, 0
    %s396 = sadd.s32 %s395, 1
    %s397 = scalar_select %p394, %s395, %s396
    %p400 = pneg %p394
    %p401 = scmp.eq.s32.totalorder %s23, 1
    %p402 = por %p400, %p401
    %p403 = scmp.ne.s32.totalorder %s395, %s398
    %p404 = scmp.eq.s32.totalorder %s23, 0
    %p405 = por %p403, %p404
    %p406 = scmp.ne.s32.totalorder %s395, %s398
    %p407 = scmp.eq.s32.totalorder %s28, 1
    %p408 = por %p406, %p407
    %p409 = scmp.ne.s32.totalorder %s398, %s399
    %p410 = scmp.eq.s32.totalorder %s28, 0
    %p411 = por %p409, %p410
    %p412 = scmp.ne.s32.totalorder %s398, %s399
    %p413 = scmp.eq.s32.totalorder %s29, 1
    %p414 = por %p412, %p413
    %p416 = scmp.ne.s32.totalorder %s399, %s415
    %p417 = scmp.eq.s32.totalorder %s29, 0
    %p418 = por %p416, %p417
    %p419 = scmp.le.s32.totalorder 1, %s23
    %p420 = scmp.lt.s32.totalorder %s23, 3
    %p421 = pnand %p419, %p420
    %p422 = pneg %p421
    // Predicated region
    $region9: #{rtdetr_forward.1} parent=5 // pred_check
      _
    $region10: #{rtdetr_forward.1} parent=5 // pred_check_branch
      %424 = sbr.rel (%p421) target = $region12
    $region11: #{rtdetr_forward.1} parent=5 // pred_region
      %s425 = ssub.s32 %s23, 1
      // Predicated region
      $region13: #{rtdetr_forward.1} parent=11 // pred_check
        %p426 = pneg %p70
      $region14: #{rtdetr_forward.1} parent=11 // pred_check_branch
        %428 = sbr.rel (%p426) target = $region16
      $region15: #{rtdetr_forward.1} parent=11 // pred_region
        _
      $region16: #{rtdetr_forward.1} parent=11 // pred_fallthru
        _
      // Predicated region
      $region17: #{rtdetr_forward.1} parent=11 // pred_check
        %p429 = pneg %p91
      $region18: #{rtdetr_forward.1} parent=11 // pred_check_branch
        %431 = sbr.rel (%p429) target = $region20
      $region19: #{rtdetr_forward.1} parent=11 // pred_region
        _
      $region20: #{rtdetr_forward.1} parent=11 // pred_fallthru
        _
      // Predicated region
      $region21: #{rtdetr_forward.1} parent=11 // pred_check
        %p432 = pneg %p112
      $region22: #{rtdetr_forward.1} parent=11 // pred_check_branch
        %434 = sbr.rel (%p432) target = $region24
      $region23: #{rtdetr_forward.1} parent=11 // pred_region
        _
      $region24: #{rtdetr_forward.1} parent=11 // pred_fallthru
        _
      // Predicated region
      $region25: #{rtdetr_forward.1} parent=11 // pred_check
        %p435 = pneg %p133
      $region26: #{rtdetr_forward.1} parent=11 // pred_check_branch
        %437 = sbr.rel (%p435) target = $region28
      $region27: #{rtdetr_forward.1} parent=11 // pred_region
        _
      $region28: #{rtdetr_forward.1} parent=11 // pred_fallthru
        _
      // Predicated region
      $region29: #{rtdetr_forward.1} parent=11 // pred_check
        %p438 = pneg %p154
      $region30: #{rtdetr_forward.1} parent=11 // pred_check_branch
        %440 = sbr.rel (%p438) target = $region32
      $region31: #{rtdetr_forward.1} parent=11 // pred_region
        _
      $region32: #{rtdetr_forward.1} parent=11 // pred_fallthru
        _
      // Predicated region
      $region33: #{rtdetr_forward.1} parent=11 // pred_check
        %p441 = pneg %p175
      $region34: #{rtdetr_forward.1} parent=11 // pred_check_branch
        %443 = sbr.rel (%p441) target = $region36
      $region35: #{rtdetr_forward.1} parent=11 // pred_region
        _
      $region36: #{rtdetr_forward.1} parent=11 // pred_fallthru
        _
      // Predicated region
      $region37: #{rtdetr_forward.1} parent=11 // pred_check
        %p444 = pneg %p196
      $region38: #{rtdetr_forward.1} parent=11 // pred_check_branch
        %446 = sbr.rel (%p444) target = $region40
      $region39: #{rtdetr_forward.1} parent=11 // pred_region
        _
      $region40: #{rtdetr_forward.1} parent=11 // pred_fallthru
        _
      // Predicated region
      $region41: #{rtdetr_forward.1} parent=11 // pred_check
        %p447 = pneg %p217
      $region42: #{rtdetr_forward.1} parent=11 // pred_check_branch
        %449 = sbr.rel (%p447) target = $region44
      $region43: #{rtdetr_forward.1} parent=11 // pred_region
        _
      $region44: #{rtdetr_forward.1} parent=11 // pred_fallthru
        _
      // Predicated region
      $region45: #{rtdetr_forward.1} parent=11 // pred_check
        %p450 = pneg %p238
      $region46: #{rtdetr_forward.1} parent=11 // pred_check_branch
        %452 = sbr.rel (%p450) target = $region48
      $region47: #{rtdetr_forward.1} parent=11 // pred_region
        _
      $region48: #{rtdetr_forward.1} parent=11 // pred_fallthru
        _
      // Predicated region
      $region49: #{rtdetr_forward.1} parent=11 // pred_check
        %p453 = pneg %p259
      $region50: #{rtdetr_forward.1} parent=11 // pred_check_branch
        %455 = sbr.rel (%p453) target = $region52
      $region51: #{rtdetr_forward.1} parent=11 // pred_region
        _
      $region52: #{rtdetr_forward.1} parent=11 // pred_fallthru
        _
      // Predicated region
      $region53: #{rtdetr_forward.1} parent=11 // pred_check
        %p456 = pneg %p280
      $region54: #{rtdetr_forward.1} parent=11 // pred_check_branch
        %458 = sbr.rel (%p456) target = $region56
      $region55: #{rtdetr_forward.1} parent=11 // pred_region
        _
      $region56: #{rtdetr_forward.1} parent=11 // pred_fallthru
        _
      // Predicated region
      $region57: #{rtdetr_forward.1} parent=11 // pred_check
        %p459 = pneg %p301
      $region58: #{rtdetr_forward.1} parent=11 // pred_check_branch
        %461 = sbr.rel (%p459) target = $region60
      $region59: #{rtdetr_forward.1} parent=11 // pred_region
        _
      $region60: #{rtdetr_forward.1} parent=11 // pred_fallthru
        _
      // Predicated region
      $region61: #{rtdetr_forward.1} parent=11 // pred_check
        %p462 = pneg %p322
      $region62: #{rtdetr_forward.1} parent=11 // pred_check_branch
        %464 = sbr.rel (%p462) target = $region64
      $region63: #{rtdetr_forward.1} parent=11 // pred_region
        _
      $region64: #{rtdetr_forward.1} parent=11 // pred_fallthru
        _
      // Predicated region
      $region65: #{rtdetr_forward.1} parent=11 // pred_check
        %p465 = pneg %p343
      $region66: #{rtdetr_forward.1} parent=11 // pred_check_branch
        %467 = sbr.rel (%p465) target = $region68
      $region67: #{rtdetr_forward.1} parent=11 // pred_region
        _
      $region68: #{rtdetr_forward.1} parent=11 // pred_fallthru
        _
      // Predicated region
      $region69: #{rtdetr_forward.1} parent=11 // pred_check
        %p468 = pneg %p364
      $region70: #{rtdetr_forward.1} parent=11 // pred_check_branch
        %470 = sbr.rel (%p468) target = $region72
      $region71: #{rtdetr_forward.1} parent=11 // pred_region
        _
      $region72: #{rtdetr_forward.1} parent=11 // pred_fallthru
        _
      // Predicated region
      $region73: #{rtdetr_forward.1} parent=11 // pred_check
        %p471 = pneg %p385
      $region74: #{rtdetr_forward.1} parent=11 // pred_check_branch
        %473 = sbr.rel (%p471) target = $region76
      $region75: #{rtdetr_forward.1} parent=11 // pred_region
        _
      $region76: #{rtdetr_forward.1} parent=11 // pred_fallthru
        _
    $region12: #{rtdetr_forward.1} parent=5 // pred_fallthru
      _
    %p474 = scmp.lt.s32.totalorder %s23, 2
    // Predicated region
    $region77: #{rtdetr_forward.1} parent=5 // pred_check
      %p475 = pneg %p474
    $region78: #{rtdetr_forward.1} parent=5 // pred_check_branch
      %477 = sbr.rel (%p475) target = $region80
    $region79: #{rtdetr_forward.1} parent=5 // pred_region
      // Predicated region
      $region81: #{rtdetr_forward.1} parent=79 // pred_check
        %p478 = pneg %p43
      $region82: #{rtdetr_forward.1} parent=79 // pred_check_branch
        %480 = sbr.rel (%p478) target = $region84
      $region83: #{rtdetr_forward.1} parent=79 // pred_region
        %p481 = scmp.lt.s32.totalorder %s23, 1
        %s482 = scalar_select %p481, %s23, 1
        %s483 = smul.addr %s482, 8
        %s484 = smul.addr %s483, 8
        %s485 = scalar_lea.vmem %s0, %s484
      $region84: #{rtdetr_forward.1} parent=79 // pred_fallthru
        _
    $region80: #{rtdetr_forward.1} parent=5 // pred_fallthru
      _
    %p486 = scmp.le.s32.totalorder 1, %s23
    %p487 = scmp.lt.s32.totalorder %s23, 3
    %p488 = pnand %p486, %p487
    %p489 = pneg %p488
    // Predicated region
    $region85: #{rtdetr_forward.1} parent=5 // pred_check
      _
    $region86: #{rtdetr_forward.1} parent=5 // pred_check_branch
      %491 = sbr.rel (%p488) target = $region88
    $region87: #{rtdetr_forward.1} parent=5 // pred_region
      %s492 = ssub.s32 %s23, 1
      %p493 = scmp.lt.s32.totalorder %s28, 1
      %s494 = scalar_select %p493, %s28, 1
      %s495 = smul.addr %s494, 8
      %s496 = smul.addr %s495, 8
      %s497 = scalar_lea.vmem %s0, %s496
      %p498 = pneg %p49
      %p499 = pneg %p46
      %p500 = pneg %p70
      %p501 = pneg %p67
      %p502 = pneg %p91
      %p503 = pneg %p88
      %p504 = pneg %p112
      %p505 = pneg %p109
      %p506 = pneg %p133
      %p507 = pneg %p130
      %p508 = pneg %p154
      %p509 = pneg %p151
      %p510 = pneg %p175
      %p511 = pneg %p172
      %p512 = pneg %p196
      %p513 = pneg %p193
      %p514 = pneg %p217
      %p515 = pneg %p214
      %p516 = pneg %p238
      %p517 = pneg %p235
      %p518 = pneg %p259
      %p519 = pneg %p256
      %p520 = pneg %p280
      %p521 = pneg %p277
      %p522 = pneg %p301
      %p523 = pneg %p298
      %p524 = pneg %p322
      %p525 = pneg %p319
      %p526 = pneg %p343
      %p527 = pneg %p340
      %p528 = pneg %p364
      %p529 = pneg %p361
      %p530 = pneg %p385
      %p531 = pneg %p382
      %p532 = pneg %p411
      %p533 = pneg %p408
      %p534 = scmp.lt.s32.totalorder %s28, 1
      %s535 = scalar_select %p534, %s28, 1
      %s536 = smul.addr %s535, 8
      %s537 = scalar_lea.vmem %s17, %s536
      %p538 = scmp.lt.s32.totalorder %s28, 1
      %s539 = scalar_select %p538, %s28, 1
      %s540 = smul.addr %s539, 8
      %s541 = smul.addr %s540, 8
      %s542 = scalar_lea.vmem %s0, %s541
      %p543 = scmp.lt.s32.totalorder %s28, 1
      %s544 = scalar_select %p543, %s28, 1
      %s545 = smul.addr %s544, 8
      %s546 = scalar_lea.vmem %s17, %s545
      %v547 = vld [vmem:[%s16] sm:$0xff]
      %v548 = vld [vmem:[%s16 + $0x8] sm:$0xff]
      %v549 = vld [vmem:[%s16 + $0x10] sm:$0xff]
      %v550 = vld [vmem:[%s542] sm:$0xff]
      %v551 = vld [vmem:[%s542 + $0x8] sm:$0xff]
      %v552 = vld [vmem:[%s542 + $0x10] sm:$0xff]
      %v553 = vld [vmem:[%s542 + $0x18] sm:$0xff]
      %v554 = vld [vmem:[%s542 + $0x20] sm:$0xff]
      %v555 = vld [vmem:[%s542 + $0x28] sm:$0xff]
      %v556 = vld [vmem:[%s542 + $0x30] sm:$0xff]
      %v557 = vld [vmem:[%s542 + $0x38] sm:$0xff]
      %v558 = vld [vmem:[%s1] sm:$0xff]
      %v559 = vld [vmem:[%s1 + $0x8] sm:$0xff]
      %v560 = vld [vmem:[%s1 + $0x10] sm:$0xff]
      %v561 = vld [vmem:[%s1 + $0x18] sm:$0xff]
      %v562 = vld [vmem:[%s1 + $0x20] sm:$0xff]
      %v563 = vld [vmem:[%s1 + $0x28] sm:$0xff]
      %v564 = vld [vmem:[%s1 + $0x30] sm:$0xff]
      %v565 = vld [vmem:[%s1 + $0x38] sm:$0xff]
      %v566 = vld [vmem:[%s1 + $0x40] sm:$0xff]
      %v567 = vld [vmem:[%s1 + $0x48] sm:$0xff]
      %v568 = vld [vmem:[%s1 + $0x50] sm:$0xff]
      %v569 = vld [vmem:[%s1 + $0x58] sm:$0xff]
      %v570 = vld [vmem:[%s1 + $0x60] sm:$0xff]
      %v571 = vld [vmem:[%s1 + $0x68] sm:$0xff]
      %v572 = vld [vmem:[%s1 + $0x70] sm:$0xff]
      %v573 = vld [vmem:[%s1 + $0x78] sm:$0xff]
      %v574 = vperm.slane %v547, 0
      %575 = vmatpush.msra.mxu0 %v573
      %576 = vmatpush.msra.mxu0 %v572
      %577 = vmatpush.msra.mxu0 %v571
      %578 = vmatpush.msra.mxu0 %v570
      %579 = vmatpush.msra.mxu0 %v569
      %580 = vmatpush.msra.mxu0 %v568
      %581 = vmatpush.msra.mxu0 %v567
      %582 = vmatpush.msra.mxu0 %v566
      %583 = vmatpush.msra.mxu0 %v565
      %584 = vmatpush.msra.mxu0 %v564
      %585 = vmatpush.msra.mxu0 %v563
      %586 = vmatpush.msra.mxu0 %v562
      %587 = vmatpush.msra.mxu0 %v561
      %588 = vmatpush.msra.mxu0 %v560
      %589 = vmatpush.msra.mxu0 %v559
      %590 = vmatpush.msra.mxu0 %v558
      %591 = vmatmul.f32.gmra.mxu0 %v550
      %v592 = vpop.f32.mrf.mxu0
      %v593 = vadd.f32 %v574, %v592
      %594 = vmatmul.f32.gmra.mxu0 %v551
      %v595 = vpop.f32.mrf.mxu0
      %v596 = vadd.f32 %v574, %v595
      %597 = vmatmul.f32.gmra.mxu0 %v552
      %v598 = vpop.f32.mrf.mxu0
      %v599 = vadd.f32 %v574, %v598
      %600 = vmatmul.f32.gmra.mxu0 %v553
      %v601 = vpop.f32.mrf.mxu0
      %v602 = vadd.f32 %v574, %v601
      %603 = vmatmul.f32.gmra.mxu0 %v554
      %v604 = vpop.f32.mrf.mxu0
      %v605 = vadd.f32 %v574, %v604
      %606 = vmatmul.f32.gmra.mxu0 %v555
      %v607 = vpop.f32.mrf.mxu0
      %v608 = vadd.f32 %v574, %v607
      %609 = vmatmul.f32.gmra.mxu0 %v556
      %v610 = vpop.f32.mrf.mxu0
      %v611 = vadd.f32 %v574, %v610
      %612 = vmatmul.f32.gmra.mxu0 %v557
      %v613 = vpop.f32.mrf.mxu0
      %v614 = vadd.f32 %v574, %v613
      %615 = vdwg.mxu0
      %v616 = vmax.f32 %v593, 0.0
      %v617 = vmax.f32 %v596, 0.0
      %v618 = vmax.f32 %v599, 0.0
      %v619 = vmax.f32 %v602, 0.0
      %v620 = vmax.f32 %v605, 0.0
      %v621 = vmax.f32 %v608, 0.0
      %v622 = vmax.f32 %v611, 0.0
      %v623 = vmax.f32 %v614, 0.0
      %v624 = vld [vmem:[%s2] sm:$0xff]
      %v625 = vld [vmem:[%s2 + $0x8] sm:$0xff]
      %v626 = vld [vmem:[%s2 + $0x10] sm:$0xff]
      %v627 = vld [vmem:[%s2 + $0x18] sm:$0xff]
      %v628 = vperm.slane %v547, 1
      %vm629 = vcmask 261120
      %v631 = vsel %vm629, %v616, 0
      %v634 = vsel %vm629, %v617, 0
      %v637 = vsel %vm629, %v618, 0
      %v640 = vsel %vm629, %v619, 0
      %v643 = vsel %vm629, %v620, 0
      %v646 = vsel %vm629, %v621, 0
      %v649 = vsel %vm629, %v622, 0
      %v652 = vsel %vm629, %v623, 0
      %654 = vmatpush.msra.mxu0 0.0
      %655 = vmatpush.msra.mxu0 0.0
      %656 = vmatpush.msra.mxu0 0.0
      %657 = vmatpush.msra.mxu0 0.0
      %658 = vmatpush.msra.mxu0 0.0
      %659 = vmatpush.msra.mxu0 0.0
      %660 = vmatpush.msra.mxu0 0.0
      %661 = vmatpush.msra.mxu0 0.0
      %662 = vmatpush.msra.mxu0 0.0
      %663 = vmatpush.msra.mxu0 0.0
      %664 = vmatpush.msra.mxu0 0.0
      %665 = vmatpush.msra.mxu0 0.0
      %666 = vmatpush.msra.mxu0 %v627
      %667 = vmatpush.msra.mxu0 %v626
      %668 = vmatpush.msra.mxu0 %v625
      %669 = vmatpush.msra.mxu0 %v624
      %670 = vmatmul.f32.gmra.mxu0 %v631
      %v671 = vpop.f32.mrf.mxu0
      %v672 = vadd.f32 %v628, %v671
      %673 = vmatmul.f32.gmra.mxu0 %v634
      %v674 = vpop.f32.mrf.mxu0
      %v675 = vadd.f32 %v628, %v674
      %676 = vmatmul.f32.gmra.mxu0 %v637
      %v677 = vpop.f32.mrf.mxu0
      %v678 = vadd.f32 %v628, %v677
      %679 = vmatmul.f32.gmra.mxu0 %v640
      %v680 = vpop.f32.mrf.mxu0
      %v681 = vadd.f32 %v628, %v680
      %682 = vmatmul.f32.gmra.mxu0 %v643
      %v683 = vpop.f32.mrf.mxu0
      %v684 = vadd.f32 %v628, %v683
      %685 = vmatmul.f32.gmra.mxu0 %v646
      %v686 = vpop.f32.mrf.mxu0
      %v687 = vadd.f32 %v628, %v686
      %688 = vmatmul.f32.gmra.mxu0 %v649
      %v689 = vpop.f32.mrf.mxu0
      %v690 = vadd.f32 %v628, %v689
      %691 = vmatmul.f32.gmra.mxu0 %v652
      %v692 = vpop.f32.mrf.mxu0
      %v693 = vadd.f32 %v628, %v692
      %694 = vdwg.mxu0
      %703 = vrot.lane.b32.xlu0 %v672, 96
      %v704 = vpop.permute.xlu0 %703
      %705 = vrot.lane.b32.xlu0 %v675, 96
      %v706 = vpop.permute.xlu0 %705
      %707 = vrot.lane.b32.xlu0 %v678, 96
      %v708 = vpop.permute.xlu0 %707
      %709 = vrot.lane.b32.xlu0 %v681, 96
      %v710 = vpop.permute.xlu0 %709
      %711 = vrot.lane.b32.xlu0 %v684, 96
      %v712 = vpop.permute.xlu0 %711
      %713 = vrot.lane.b32.xlu0 %v687, 96
      %v714 = vpop.permute.xlu0 %713
      %715 = vrot.lane.b32.xlu0 %v690, 96
      %v716 = vpop.permute.xlu0 %715
      %717 = vrot.lane.b32.xlu0 %v693, 96
      %v718 = vpop.permute.xlu0 %717
      %vm719 = vcmask 130048
      %v720 = vsel %vm719, %v672, 0
      %v722 = vsel %vm719, %v675, 0
      %v724 = vsel %vm719, %v678, 0
      %v726 = vsel %vm719, %v681, 0
      %v728 = vsel %vm719, %v684, 0
      %v730 = vsel %vm719, %v687, 0
      %v732 = vsel %vm719, %v690, 0
      %v734 = vsel %vm719, %v693, 0
      %v736 = vsel %vm719, %v704, 0
      %v738 = vsel %vm719, %v706, 0
      %v740 = vsel %vm719, %v708, 0
      %v742 = vsel %vm719, %v710, 0
      %v744 = vsel %vm719, %v712, 0
      %v746 = vsel %vm719, %v714, 0
      %v748 = vsel %vm719, %v716, 0
      %v750 = vsel %vm719, %v718, 0
      %752 = vmatpush.xpose.msra.mxu0 0.0
      %753 = vmatpush.xpose.msra.mxu0 0.0
      %754 = vmatpush.xpose.msra.mxu0 0.0
      %755 = vmatpush.xpose.msra.mxu0 0.0
      %756 = vmatpush.xpose.msra.mxu0 0.0
      %757 = vmatpush.xpose.msra.mxu0 0.0
      %758 = vmatpush.xpose.msra.mxu0 0.0
      %759 = vmatpush.xpose.msra.mxu0 0.0
      %760 = vmatpush.xpose.msra.mxu0 %v750
      %761 = vmatpush.xpose.msra.mxu0 %v748
      %762 = vmatpush.xpose.msra.mxu0 %v746
      %763 = vmatpush.xpose.msra.mxu0 %v744
      %764 = vmatpush.xpose.msra.mxu0 %v742
      %765 = vmatpush.xpose.msra.mxu0 %v740
      %766 = vmatpush.xpose.msra.mxu0 %v738
      %767 = vmatpush.xpose.msra.mxu0 %v736
      %768 = vmatmul.f32.gmra.mxu0 %v720
      %v769 = vpop.f32.mrf.mxu0
      %v770 = vadd.f32 0.0, %v769
      %771 = vmatmul.f32.gmra.mxu0 %v722
      %v772 = vpop.f32.mrf.mxu0
      %v773 = vadd.f32 0.0, %v772
      %774 = vmatmul.f32.gmra.mxu0 %v724
      %v775 = vpop.f32.mrf.mxu0
      %v776 = vadd.f32 0.0, %v775
      %777 = vmatmul.f32.gmra.mxu0 %v726
      %v778 = vpop.f32.mrf.mxu0
      %v779 = vadd.f32 0.0, %v778
      %780 = vmatmul.f32.gmra.mxu0 %v728
      %v781 = vpop.f32.mrf.mxu0
      %v782 = vadd.f32 0.0, %v781
      %783 = vmatmul.f32.gmra.mxu0 %v730
      %v784 = vpop.f32.mrf.mxu0
      %v785 = vadd.f32 0.0, %v784
      %786 = vmatmul.f32.gmra.mxu0 %v732
      %v787 = vpop.f32.mrf.mxu0
      %v788 = vadd.f32 0.0, %v787
      %789 = vmatmul.f32.gmra.mxu0 %v734
      %v790 = vpop.f32.mrf.mxu0
      %v791 = vadd.f32 0.0, %v790
      %792 = vdwg.mxu0
      %v793 = vmul.f32 %v770, 0.25
      %v794 = vmul.f32 %v773, 0.25
      %v795 = vmul.f32 %v776, 0.25
      %v796 = vmul.f32 %v779, 0.25
      %v797 = vmul.f32 %v782, 0.25
      %v798 = vmul.f32 %v785, 0.25
      %v799 = vmul.f32 %v788, 0.25
      %v800 = vmul.f32 %v791, 0.25
      %vm801 = vcmask 523264
      %v802 = vsel %vm801, %v793, -inf
      %803 = vmax.xlane.f32.xlu0 %v802
      %v804 = vpop.xlane.xlu0 %803
      %v805 = vsel %vm801, %v794, -inf
      %806 = vmax.xlane.f32.xlu0 %v805
      %v807 = vpop.xlane.xlu0 %806
      %v808 = vsel %vm801, %v795, -inf
      %809 = vmax.xlane.f32.xlu0 %v808
      %v810 = vpop.xlane.xlu0 %809
      %v811 = vsel %vm801, %v796, -inf
      %812 = vmax.xlane.f32.xlu0 %v811
      %v813 = vpop.xlane.xlu0 %812
      %v814 = vsel %vm801, %v797, -inf
      %815 = vmax.xlane.f32.xlu0 %v814
      %v816 = vpop.xlane.xlu0 %815
      %v817 = vsel %vm801, %v798, -inf
      %818 = vmax.xlane.f32.xlu0 %v817
      %v819 = vpop.xlane.xlu0 %818
      %v820 = vsel %vm801, %v799, -inf
      %821 = vmax.xlane.f32.xlu0 %v820
      %v822 = vpop.xlane.xlu0 %821
      %v823 = vsel %vm801, %v800, -inf
      %824 = vmax.xlane.f32.xlu0 %v823
      %v825 = vpop.xlane.xlu0 %824
      %v826 = vsub.f32 %v793, %v804
      %v827 = vsub.f32 %v794, %v807
      %v828 = vsub.f32 %v795, %v810
      %v829 = vsub.f32 %v796, %v813
      %v830 = vsub.f32 %v797, %v816
      %v831 = vsub.f32 %v798, %v819
      %v832 = vsub.f32 %v799, %v822
      %v833 = vsub.f32 %v800, %v825
      %v834 = vmul.f32 %v826, 1.442695
      %v835 = vpow.pop %v834
      %v836 = vmul.f32 %v827, 1.442695
      %v837 = vpow.pop %v836
      %v838 = vmul.f32 %v828, 1.442695
      %v839 = vpow.pop %v838
      %v840 = vmul.f32 %v829, 1.442695
      %v841 = vpow.pop %v840
      %v842 = vmul.f32 %v830, 1.442695
      %v843 = vpow.pop %v842
      %v844 = vmul.f32 %v831, 1.442695
      %v845 = vpow.pop %v844
      %v846 = vmul.f32 %v832, 1.442695
      %v847 = vpow.pop %v846
      %v848 = vmul.f32 %v833, 1.442695
      %v849 = vpow.pop %v848
      %v850 = vsel %vm801, %v835, 0.0
      %851 = vadd.xlane.f32.xlu0 %v850
      %v852 = vpop.xlane.xlu0 %851
      %v853 = vsel %vm801, %v837, 0.0
      %854 = vadd.xlane.f32.xlu0 %v853
      %v855 = vpop.xlane.xlu0 %854
      %v856 = vsel %vm801, %v839, 0.0
      %857 = vadd.xlane.f32.xlu0 %v856
      %v858 = vpop.xlane.xlu0 %857
      %v859 = vsel %vm801, %v841, 0.0
      %860 = vadd.xlane.f32.xlu0 %v859
      %v861 = vpop.xlane.xlu0 %860
      %v862 = vsel %vm801, %v843, 0.0
      %863 = vadd.xlane.f32.xlu0 %v862
      %v864 = vpop.xlane.xlu0 %863
      %v865 = vsel %vm801, %v845, 0.0
      %866 = vadd.xlane.f32.xlu0 %v865
      %v867 = vpop.xlane.xlu0 %866
      %v868 = vsel %vm801, %v847, 0.0
      %869 = vadd.xlane.f32.xlu0 %v868
      %v870 = vpop.xlane.xlu0 %869
      %v871 = vsel %vm801, %v849, 0.0
      %872 = vadd.xlane.f32.xlu0 %v871
      %v873 = vpop.xlane.xlu0 %872
      %v874 = vrcp.pop %v852
      %v875 = vrcp.pop %v855
      %v876 = vrcp.pop %v858
      %v877 = vrcp.pop %v861
      %v878 = vrcp.pop %v864
      %v879 = vrcp.pop %v867
      %v880 = vrcp.pop %v870
      %v881 = vrcp.pop %v873
      %v882 = vmul.f32 %v835, %v874
      %v883 = vmul.f32 %v837, %v875
      %v884 = vmul.f32 %v839, %v876
      %v885 = vmul.f32 %v841, %v877
      %v886 = vmul.f32 %v843, %v878
      %v887 = vmul.f32 %v845, %v879
      %v888 = vmul.f32 %v847, %v880
      %v889 = vmul.f32 %v849, %v881
      %890 = vrot.lane.b32.xlu0 %v672, 64
      %v891 = vpop.permute.xlu0 %890
      %892 = vrot.lane.b32.xlu0 %v675, 64
      %v893 = vpop.permute.xlu0 %892
      %894 = vrot.lane.b32.xlu0 %v678, 64
      %v895 = vpop.permute.xlu0 %894
      %896 = vrot.lane.b32.xlu0 %v681, 64
      %v897 = vpop.permute.xlu0 %896
      %898 = vrot.lane.b32.xlu0 %v684, 64
      %v899 = vpop.permute.xlu0 %898
      %900 = vrot.lane.b32.xlu0 %v687, 64
      %v901 = vpop.permute.xlu0 %900
      %902 = vrot.lane.b32.xlu0 %v690, 64
      %v903 = vpop.permute.xlu0 %902
      %904 = vrot.lane.b32.xlu0 %v693, 64
      %v905 = vpop.permute.xlu0 %904
      %v915 = vsel %vm801, %v882, 0
      %v918 = vsel %vm801, %v883, 0
      %v921 = vsel %vm801, %v884, 0
      %v924 = vsel %vm801, %v885, 0
      %v927 = vsel %vm801, %v886, 0
      %v930 = vsel %vm801, %v887, 0
      %v933 = vsel %vm801, %v888, 0
      %v936 = vsel %vm801, %v889, 0
      %938 = vmatpush.msra.mxu0 0.0
      %939 = vmatpush.msra.mxu0 0.0
      %940 = vmatpush.msra.mxu0 0.0
      %941 = vmatpush.msra.mxu0 0.0
      %942 = vmatpush.msra.mxu0 0.0
      %943 = vmatpush.msra.mxu0 0.0
      %944 = vmatpush.msra.mxu0 0.0
      %945 = vmatpush.msra.mxu0 0.0
      %946 = vmatpush.msra.mxu0 %v905
      %947 = vmatpush.msra.mxu0 %v903
      %948 = vmatpush.msra.mxu0 %v901
      %949 = vmatpush.msra.mxu0 %v899
      %950 = vmatpush.msra.mxu0 %v897
      %951 = vmatpush.msra.mxu0 %v895
      %952 = vmatpush.msra.mxu0 %v893
      %953 = vmatpush.msra.mxu0 %v891
      %954 = vmatmul.f32.gmra.mxu0 %v915
      %v955 = vpop.f32.mrf.mxu0
      %v956 = vadd.f32 0.0, %v955
      %957 = vmatmul.f32.gmra.mxu0 %v918
      %v958 = vpop.f32.mrf.mxu0
      %v959 = vadd.f32 0.0, %v958
      %960 = vmatmul.f32.gmra.mxu0 %v921
      %v961 = vpop.f32.mrf.mxu0
      %v962 = vadd.f32 0.0, %v961
      %963 = vmatmul.f32.gmra.mxu0 %v924
      %v964 = vpop.f32.mrf.mxu0
      %v965 = vadd.f32 0.0, %v964
      %966 = vmatmul.f32.gmra.mxu0 %v927
      %v967 = vpop.f32.mrf.mxu0
      %v968 = vadd.f32 0.0, %v967
      %969 = vmatmul.f32.gmra.mxu0 %v930
      %v970 = vpop.f32.mrf.mxu0
      %v971 = vadd.f32 0.0, %v970
      %972 = vmatmul.f32.gmra.mxu0 %v933
      %v973 = vpop.f32.mrf.mxu0
      %v974 = vadd.f32 0.0, %v973
      %975 = vmatmul.f32.gmra.mxu0 %v936
      %v976 = vpop.f32.mrf.mxu0
      %v977 = vadd.f32 0.0, %v976
      %978 = vdwg.mxu0
      %979 = vrot.lane.b32.xlu0 %v672, 112
      %v980 = vpop.permute.xlu0 %979
      %981 = vrot.lane.b32.xlu0 %v675, 112
      %v982 = vpop.permute.xlu0 %981
      %983 = vrot.lane.b32.xlu0 %v678, 112
      %v984 = vpop.permute.xlu0 %983
      %985 = vrot.lane.b32.xlu0 %v681, 112
      %v986 = vpop.permute.xlu0 %985
      %987 = vrot.lane.b32.xlu0 %v684, 112
      %v988 = vpop.permute.xlu0 %987
      %989 = vrot.lane.b32.xlu0 %v687, 112
      %v990 = vpop.permute.xlu0 %989
      %991 = vrot.lane.b32.xlu0 %v690, 112
      %v992 = vpop.permute.xlu0 %991
      %993 = vrot.lane.b32.xlu0 %v693, 112
      %v994 = vpop.permute.xlu0 %993
      %995 = vrot.lane.b32.xlu0 %v672, 80
      %v996 = vpop.permute.xlu0 %995
      %997 = vrot.lane.b32.xlu0 %v675, 80
      %v998 = vpop.permute.xlu0 %997
      %999 = vrot.lane.b32.xlu0 %v678, 80
      %v1000 = vpop.permute.xlu0 %999
      %1001 = vrot.lane.b32.xlu0 %v681, 80
      %v1002 = vpop.permute.xlu0 %1001
      %1003 = vrot.lane.b32.xlu0 %v684, 80
      %v1004 = vpop.permute.xlu0 %1003
      %1005 = vrot.lane.b32.xlu0 %v687, 80
      %v1006 = vpop.permute.xlu0 %1005
      %1007 = vrot.lane.b32.xlu0 %v690, 80
      %v1008 = vpop.permute.xlu0 %1007
      %1009 = vrot.lane.b32.xlu0 %v693, 80
      %v1010 = vpop.permute.xlu0 %1009
      %v1011 = vsel %vm719, %v980, 0
      %v1013 = vsel %vm719, %v982, 0
      %v1015 = vsel %vm719, %v984, 0
      %v1017 = vsel %vm719, %v986, 0
      %v1019 = vsel %vm719, %v988, 0
      %v1021 = vsel %vm719, %v990, 0
      %v1023 = vsel %vm719, %v992, 0
      %v1025 = vsel %vm719, %v994, 0
      %v1027 = vsel %vm719, %v996, 0
      %v1029 = vsel %vm719, %v998, 0
      %v1031 = vsel %vm719, %v1000, 0
      %v1033 = vsel %vm719, %v1002, 0
      %v1035 = vsel %vm719, %v1004, 0
      %v1037 = vsel %vm719, %v1006, 0
      %v1039 = vsel %vm719, %v1008, 0
      %v1041 = vsel %vm719, %v1010, 0
      %1043 = vmatpush.xpose.msra.mxu0 0.0
      %1044 = vmatpush.xpose.msra.mxu0 0.0
      %1045 = vmatpush.xpose.msra.mxu0 0.0
      %1046 = vmatpush.xpose.msra.mxu0 0.0
      %1047 = vmatpush.xpose.msra.mxu0 0.0
      %1048 = vmatpush.xpose.msra.mxu0 0.0
      %1049 = vmatpush.xpose.msra.mxu0 0.0
      %1050 = vmatpush.xpose.msra.mxu0 0.0
      %1051 = vmatpush.xpose.msra.mxu0 %v1041
      %1052 = vmatpush.xpose.msra.mxu0 %v1039
      %1053 = vmatpush.xpose.msra.mxu0 %v1037
      %1054 = vmatpush.xpose.msra.mxu0 %v1035
      %1055 = vmatpush.xpose.msra.mxu0 %v1033
      %1056 = vmatpush.xpose.msra.mxu0 %v1031
      %1057 = vmatpush.xpose.msra.mxu0 %v1029
      %1058 = vmatpush.xpose.msra.mxu0 %v1027
      %1059 = vmatmul.f32.gmra.mxu0 %v1011
      %v1060 = vpop.f32.mrf.mxu0
      %v1061 = vadd.f32 0.0, %v1060
      %1062 = vmatmul.f32.gmra.mxu0 %v1013
      %v1063 = vpop.f32.mrf.mxu0
      %v1064 = vadd.f32 0.0, %v1063
      %1065 = vmatmul.f32.gmra.mxu0 %v1015
      %v1066 = vpop.f32.mrf.mxu0
      %v1067 = vadd.f32 0.0, %v1066
      %1068 = vmatmul.f32.gmra.mxu0 %v1017
      %v1069 = vpop.f32.mrf.mxu0
      %v1070 = vadd.f32 0.0, %v1069
      %1071 = vmatmul.f32.gmra.mxu0 %v1019
      %v1072 = vpop.f32.mrf.mxu0
      %v1073 = vadd.f32 0.0, %v1072
      %1074 = vmatmul.f32.gmra.mxu0 %v1021
      %v1075 = vpop.f32.mrf.mxu0
      %v1076 = vadd.f32 0.0, %v1075
      %1077 = vmatmul.f32.gmra.mxu0 %v1023
      %v1078 = vpop.f32.mrf.mxu0
      %v1079 = vadd.f32 0.0, %v1078
      %1080 = vmatmul.f32.gmra.mxu0 %v1025
      %v1081 = vpop.f32.mrf.mxu0
      %v1082 = vadd.f32 0.0, %v1081
      %1083 = vdwg.mxu0
      %v1084 = vmul.f32 %v1061, 0.25
      %v1085 = vmul.f32 %v1064, 0.25
      %v1086 = vmul.f32 %v1067, 0.25
      %v1087 = vmul.f32 %v1070, 0.25
      %v1088 = vmul.f32 %v1073, 0.25
      %v1089 = vmul.f32 %v1076, 0.25
      %v1090 = vmul.f32 %v1079, 0.25
      %v1091 = vmul.f32 %v1082, 0.25
      %v1092 = vsel %vm801, %v1084, -inf
      %1093 = vmax.xlane.f32.xlu0 %v1092
      %v1094 = vpop.xlane.xlu0 %1093
      %v1095 = vsel %vm801, %v1085, -inf
      %1096 = vmax.xlane.f32.xlu0 %v1095
      %v1097 = vpop.xlane.xlu0 %1096
      %v1098 = vsel %vm801, %v1086, -inf
      %1099 = vmax.xlane.f32.xlu0 %v1098
      %v1100 = vpop.xlane.xlu0 %1099
      %v1101 = vsel %vm801, %v1087, -inf
      %1102 = vmax.xlane.f32.xlu0 %v1101
      %v1103 = vpop.xlane.xlu0 %1102
      %v1104 = vsel %vm801, %v1088, -inf
      %1105 = vmax.xlane.f32.xlu0 %v1104
      %v1106 = vpop.xlane.xlu0 %1105
      %v1107 = vsel %vm801, %v1089, -inf
      %1108 = vmax.xlane.f32.xlu0 %v1107
      %v1109 = vpop.xlane.xlu0 %1108
      %v1110 = vsel %vm801, %v1090, -inf
      %1111 = vmax.xlane.f32.xlu0 %v1110
      %v1112 = vpop.xlane.xlu0 %1111
      %v1113 = vsel %vm801, %v1091, -inf
      %1114 = vmax.xlane.f32.xlu0 %v1113
      %v1115 = vpop.xlane.xlu0 %1114
      %v1116 = vsub.f32 %v1084, %v1094
      %v1117 = vsub.f32 %v1085, %v1097
      %v1118 = vsub.f32 %v1086, %v1100
      %v1119 = vsub.f32 %v1087, %v1103
      %v1120 = vsub.f32 %v1088, %v1106
      %v1121 = vsub.f32 %v1089, %v1109
      %v1122 = vsub.f32 %v1090, %v1112
      %v1123 = vsub.f32 %v1091, %v1115
      %v1124 = vmul.f32 %v1116, 1.442695
      %v1125 = vpow.pop %v1124
      %v1126 = vmul.f32 %v1117, 1.442695
      %v1127 = vpow.pop %v1126
      %v1128 = vmul.f32 %v1118, 1.442695
      %v1129 = vpow.pop %v1128
      %v1130 = vmul.f32 %v1119, 1.442695
      %v1131 = vpow.pop %v1130
      %v1132 = vmul.f32 %v1120, 1.442695
      %v1133 = vpow.pop %v1132
      %v1134 = vmul.f32 %v1121, 1.442695
      %v1135 = vpow.pop %v1134
      %v1136 = vmul.f32 %v1122, 1.442695
      %v1137 = vpow.pop %v1136
      %v1138 = vmul.f32 %v1123, 1.442695
      %v1139 = vpow.pop %v1138
      %v1140 = vsel %vm801, %v1125, 0.0
      %1141 = vadd.xlane.f32.xlu0 %v1140
      %v1142 = vpop.xlane.xlu0 %1141
      %v1143 = vsel %vm801, %v1127, 0.0
      %1144 = vadd.xlane.f32.xlu0 %v1143
      %v1145 = vpop.xlane.xlu0 %1144
      %v1146 = vsel %vm801, %v1129, 0.0
      %1147 = vadd.xlane.f32.xlu0 %v1146
      %v1148 = vpop.xlane.xlu0 %1147
      %v1149 = vsel %vm801, %v1131, 0.0
      %1150 = vadd.xlane.f32.xlu0 %v1149
      %v1151 = vpop.xlane.xlu0 %1150
      %v1152 = vsel %vm801, %v1133, 0.0
      %1153 = vadd.xlane.f32.xlu0 %v1152
      %v1154 = vpop.xlane.xlu0 %1153
      %v1155 = vsel %vm801, %v1135, 0.0
      %1156 = vadd.xlane.f32.xlu0 %v1155
      %v1157 = vpop.xlane.xlu0 %1156
      %v1158 = vsel %vm801, %v1137, 0.0
      %1159 = vadd.xlane.f32.xlu0 %v1158
      %v1160 = vpop.xlane.xlu0 %1159
      %v1161 = vsel %vm801, %v1139, 0.0
      %1162 = vadd.xlane.f32.xlu0 %v1161
      %v1163 = vpop.xlane.xlu0 %1162
      %v1164 = vrcp.pop %v1142
      %v1165 = vrcp.pop %v1145
      %v1166 = vrcp.pop %v1148
      %v1167 = vrcp.pop %v1151
      %v1168 = vrcp.pop %v1154
      %v1169 = vrcp.pop %v1157
      %v1170 = vrcp.pop %v1160
      %v1171 = vrcp.pop %v1163
      %v1172 = vmul.f32 %v1125, %v1164
      %v1173 = vmul.f32 %v1127, %v1165
      %v1174 = vmul.f32 %v1129, %v1166
      %v1175 = vmul.f32 %v1131, %v1167
      %v1176 = vmul.f32 %v1133, %v1168
      %v1177 = vmul.f32 %v1135, %v1169
      %v1178 = vmul.f32 %v1137, %v1170
      %v1179 = vmul.f32 %v1139, %v1171
      %1180 = vrot.lane.b32.xlu0 %v672, 48
      %v1181 = vpop.permute.xlu0 %1180
      %1182 = vrot.lane.b32.xlu0 %v675, 48
      %v1183 = vpop.permute.xlu0 %1182
      %1184 = vrot.lane.b32.xlu0 %v678, 48
      %v1185 = vpop.permute.xlu0 %1184
      %1186 = vrot.lane.b32.xlu0 %v681, 48
      %v1187 = vpop.permute.xlu0 %1186
      %1188 = vrot.lane.b32.xlu0 %v684, 48
      %v1189 = vpop.permute.xlu0 %1188
      %1190 = vrot.lane.b32.xlu0 %v687, 48
      %v1191 = vpop.permute.xlu0 %1190
      %1192 = vrot.lane.b32.xlu0 %v690, 48
      %v1193 = vpop.permute.xlu0 %1192
      %1194 = vrot.lane.b32.xlu0 %v693, 48
      %v1195 = vpop.permute.xlu0 %1194
      %v1205 = vsel %vm801, %v1172, 0
      %v1208 = vsel %vm801, %v1173, 0
      %v1211 = vsel %vm801, %v1174, 0
      %v1214 = vsel %vm801, %v1175, 0
      %v1217 = vsel %vm801, %v1176, 0
      %v1220 = vsel %vm801, %v1177, 0
      %v1223 = vsel %vm801, %v1178, 0
      %v1226 = vsel %vm801, %v1179, 0
      %1228 = vmatpush.msra.mxu0 0.0
      %1229 = vmatpush.msra.mxu0 0.0
      %1230 = vmatpush.msra.mxu0 0.0
      %1231 = vmatpush.msra.mxu0 0.0
      %1232 = vmatpush.msra.mxu0 0.0
      %1233 = vmatpush.msra.mxu0 0.0
      %1234 = vmatpush.msra.mxu0 0.0
      %1235 = vmatpush.msra.mxu0 0.0
      %1236 = vmatpush.msra.mxu0 %v1195
      %1237 = vmatpush.msra.mxu0 %v1193
      %1238 = vmatpush.msra.mxu0 %v1191
      %1239 = vmatpush.msra.mxu0 %v1189
      %1240 = vmatpush.msra.mxu0 %v1187
      %1241 = vmatpush.msra.mxu0 %v1185
      %1242 = vmatpush.msra.mxu0 %v1183
      %1243 = vmatpush.msra.mxu0 %v1181
      %1244 = vmatmul.f32.gmra.mxu0 %v1205
      %v1245 = vpop.f32.mrf.mxu0
      %v1246 = vadd.f32 0.0, %v1245
      %1247 = vmatmul.f32.gmra.mxu0 %v1208
      %v1248 = vpop.f32.mrf.mxu0
      %v1249 = vadd.f32 0.0, %v1248
      %1250 = vmatmul.f32.gmra.mxu0 %v1211
      %v1251 = vpop.f32.mrf.mxu0
      %v1252 = vadd.f32 0.0, %v1251
      %1253 = vmatmul.f32.gmra.mxu0 %v1214
      %v1254 = vpop.f32.mrf.mxu0
      %v1255 = vadd.f32 0.0, %v1254
      %1256 = vmatmul.f32.gmra.mxu0 %v1217
      %v1257 = vpop.f32.mrf.mxu0
      %v1258 = vadd.f32 0.0, %v1257
      %1259 = vmatmul.f32.gmra.mxu0 %v1220
      %v1260 = vpop.f32.mrf.mxu0
      %v1261 = vadd.f32 0.0, %v1260
      %1262 = vmatmul.f32.gmra.mxu0 %v1223
      %v1263 = vpop.f32.mrf.mxu0
      %v1264 = vadd.f32 0.0, %v1263
      %1265 = vmatmul.f32.gmra.mxu0 %v1226
      %v1266 = vpop.f32.mrf.mxu0
      %v1267 = vadd.f32 0.0, %v1266
      %1268 = vdwg.mxu0
      %1277 = vrot.lane.b32.xlu0 %v1246, 16
      %v1278 = vpop.permute.xlu0 %1277
      %1279 = vrot.lane.b32.xlu0 %v1249, 16
      %v1280 = vpop.permute.xlu0 %1279
      %1281 = vrot.lane.b32.xlu0 %v1252, 16
      %v1282 = vpop.permute.xlu0 %1281
      %1283 = vrot.lane.b32.xlu0 %v1255, 16
      %v1284 = vpop.permute.xlu0 %1283
      %1285 = vrot.lane.b32.xlu0 %v1258, 16
      %v1286 = vpop.permute.xlu0 %1285
      %1287 = vrot.lane.b32.xlu0 %v1261, 16
      %v1288 = vpop.permute.xlu0 %1287
      %1289 = vrot.lane.b32.xlu0 %v1264, 16
      %v1290 = vpop.permute.xlu0 %1289
      %1291 = vrot.lane.b32.xlu0 %v1267, 16
      %v1292 = vpop.permute.xlu0 %1291
      %v1301 = vsel %vm719, %v956, %v1278
      %v1302 = vsel %vm719, %v959, %v1280
      %v1303 = vsel %vm719, %v962, %v1282
      %v1304 = vsel %vm719, %v965, %v1284
      %v1305 = vsel %vm719, %v968, %v1286
      %v1306 = vsel %vm719, %v971, %v1288
      %v1307 = vsel %vm719, %v974, %v1290
      %v1308 = vsel %vm719, %v977, %v1292
      %v1309 = vld [vmem:[%s3] sm:$0xff]
      %v1310 = vld [vmem:[%s3 + $0x8] sm:$0xff]
      %v1311 = vld [vmem:[%s3 + $0x10] sm:$0xff]
      %v1312 = vld [vmem:[%s3 + $0x18] sm:$0xff]
      %v1313 = vperm.slane %v547, 2
      %v1315 = vsel %vm629, %v1301, 0
      %v1318 = vsel %vm629, %v1302, 0
      %v1321 = vsel %vm629, %v1303, 0
      %v1324 = vsel %vm629, %v1304, 0
      %v1327 = vsel %vm629, %v1305, 0
      %v1330 = vsel %vm629, %v1306, 0
      %v1333 = vsel %vm629, %v1307, 0
      %v1336 = vsel %vm629, %v1308, 0
      %1338 = vmatpush.msra.mxu0 0.0
      %1339 = vmatpush.msra.mxu0 0.0
      %1340 = vmatpush.msra.mxu0 0.0
      %1341 = vmatpush.msra.mxu0 0.0
      %1342 = vmatpush.msra.mxu0 0.0
      %1343 = vmatpush.msra.mxu0 0.0
      %1344 = vmatpush.msra.mxu0 0.0
      %1345 = vmatpush.msra.mxu0 0.0
      %1346 = vmatpush.msra.mxu0 0.0
      %1347 = vmatpush.msra.mxu0 0.0
      %1348 = vmatpush.msra.mxu0 0.0
      %1349 = vmatpush.msra.mxu0 0.0
      %1350 = vmatpush.msra.mxu0 %v1312
      %1351 = vmatpush.msra.mxu0 %v1311
      %1352 = vmatpush.msra.mxu0 %v1310
      %1353 = vmatpush.msra.mxu0 %v1309
      %1354 = vmatmul.f32.gmra.mxu0 %v1315
      %v1355 = vpop.f32.mrf.mxu0
      %v1356 = vadd.f32 %v1313, %v1355
      %1357 = vmatmul.f32.gmra.mxu0 %v1318
      %v1358 = vpop.f32.mrf.mxu0
      %v1359 = vadd.f32 %v1313, %v1358
      %1360 = vmatmul.f32.gmra.mxu0 %v1321
      %v1361 = vpop.f32.mrf.mxu0
      %v1362 = vadd.f32 %v1313, %v1361
      %1363 = vmatmul.f32.gmra.mxu0 %v1324
      %v1364 = vpop.f32.mrf.mxu0
      %v1365 = vadd.f32 %v1313, %v1364
      %1366 = vmatmul.f32.gmra.mxu0 %v1327
      %v1367 = vpop.f32.mrf.mxu0
      %v1368 = vadd.f32 %v1313, %v1367
      %1369 = vmatmul.f32.gmra.mxu0 %v1330
      %v1370 = vpop.f32.mrf.mxu0
      %v1371 = vadd.f32 %v1313, %v1370
      %1372 = vmatmul.f32.gmra.mxu0 %v1333
      %v1373 = vpop.f32.mrf.mxu0
      %v1374 = vadd.f32 %v1313, %v1373
      %1375 = vmatmul.f32.gmra.mxu0 %v1336
      %v1376 = vpop.f32.mrf.mxu0
      %v1377 = vadd.f32 %v1313, %v1376
      %1378 = vdwg.mxu0
      %v1379 = vadd.f32 %v616, %v1356
      %v1380 = vadd.f32 %v617, %v1359
      %v1381 = vadd.f32 %v618, %v1362
      %v1382 = vadd.f32 %v619, %v1365
      %v1383 = vadd.f32 %v620, %v1368
      %v1384 = vadd.f32 %v621, %v1371
      %v1385 = vadd.f32 %v622, %v1374
      %v1386 = vadd.f32 %v623, %v1377
      %v1387 = vsel %vm629, %v1379, 0.0
      %1388 = vadd.xlane.f32.xlu0 %v1387
      %v1389 = vpop.xlane.xlu0 %1388
      %v1390 = vsel %vm629, %v1380, 0.0
      %1391 = vadd.xlane.f32.xlu0 %v1390
      %v1392 = vpop.xlane.xlu0 %1391
      %v1393 = vsel %vm629, %v1381, 0.0
      %1394 = vadd.xlane.f32.xlu0 %v1393
      %v1395 = vpop.xlane.xlu0 %1394
      %v1396 = vsel %vm629, %v1382, 0.0
      %1397 = vadd.xlane.f32.xlu0 %v1396
      %v1398 = vpop.xlane.xlu0 %1397
      %v1399 = vsel %vm629, %v1383, 0.0
      %1400 = vadd.xlane.f32.xlu0 %v1399
      %v1401 = vpop.xlane.xlu0 %1400
      %v1402 = vsel %vm629, %v1384, 0.0
      %1403 = vadd.xlane.f32.xlu0 %v1402
      %v1404 = vpop.xlane.xlu0 %1403
      %v1405 = vsel %vm629, %v1385, 0.0
      %1406 = vadd.xlane.f32.xlu0 %v1405
      %v1407 = vpop.xlane.xlu0 %1406
      %v1408 = vsel %vm629, %v1386, 0.0
      %1409 = vadd.xlane.f32.xlu0 %v1408
      %v1410 = vpop.xlane.xlu0 %1409
      %v1411 = vrcp.pop 32.0
      %v1412 = vmul.f32 32.0, %v1411
      %v1413 = vsub.f32 1.0, %v1412
      %v1414 = vmul.f32 %v1411, %v1413
      %v1415 = vadd.f32 %v1411, %v1414
      %vm1416 = vweird.f32 %v1411
      %v1417 = vsel %vm1416, %v1411, %v1415
      %v1418 = vmul.f32 %v1389, %v1417
      %v1419 = vmul.f32 %v1392, %v1417
      %v1420 = vmul.f32 %v1395, %v1417
      %v1421 = vmul.f32 %v1398, %v1417
      %v1422 = vmul.f32 %v1401, %v1417
      %v1423 = vmul.f32 %v1404, %v1417
      %v1424 = vmul.f32 %v1407, %v1417
      %v1425 = vmul.f32 %v1410, %v1417
      %v1426 = vsub.f32 %v1379, %v1418
      %v1427 = vsub.f32 %v1380, %v1419
      %v1428 = vsub.f32 %v1381, %v1420
      %v1429 = vsub.f32 %v1382, %v1421
      %v1430 = vsub.f32 %v1383, %v1422
      %v1431 = vsub.f32 %v1384, %v1423
      %v1432 = vsub.f32 %v1385, %v1424
      %v1433 = vsub.f32 %v1386, %v1425
      %v1434 = vmul.f32 %v1426, %v1426
      %v1435 = vmul.f32 %v1427, %v1427
      %v1436 = vmul.f32 %v1428, %v1428
      %v1437 = vmul.f32 %v1429, %v1429
      %v1438 = vmul.f32 %v1430, %v1430
      %v1439 = vmul.f32 %v1431, %v1431
      %v1440 = vmul.f32 %v1432, %v1432
      %v1441 = vmul.f32 %v1433, %v1433
      %v1442 = vsel %vm629, %v1434, 0.0
      %1443 = vadd.xlane.f32.xlu0 %v1442
      %v1444 = vpop.xlane.xlu0 %1443
      %v1445 = vsel %vm629, %v1435, 0.0
      %1446 = vadd.xlane.f32.xlu0 %v1445
      %v1447 = vpop.xlane.xlu0 %1446
      %v1448 = vsel %vm629, %v1436, 0.0
      %1449 = vadd.xlane.f32.xlu0 %v1448
      %v1450 = vpop.xlane.xlu0 %1449
      %v1451 = vsel %vm629, %v1437, 0.0
      %1452 = vadd.xlane.f32.xlu0 %v1451
      %v1453 = vpop.xlane.xlu0 %1452
      %v1454 = vsel %vm629, %v1438, 0.0
      %1455 = vadd.xlane.f32.xlu0 %v1454
      %v1456 = vpop.xlane.xlu0 %1455
      %v1457 = vsel %vm629, %v1439, 0.0
      %1458 = vadd.xlane.f32.xlu0 %v1457
      %v1459 = vpop.xlane.xlu0 %1458
      %v1460 = vsel %vm629, %v1440, 0.0
      %1461 = vadd.xlane.f32.xlu0 %v1460
      %v1462 = vpop.xlane.xlu0 %1461
      %v1463 = vsel %vm629, %v1441, 0.0
      %1464 = vadd.xlane.f32.xlu0 %v1463
      %v1465 = vpop.xlane.xlu0 %1464
      %v1466 = vmul.f32 %v1444, %v1417
      %v1467 = vmul.f32 %v1447, %v1417
      %v1468 = vmul.f32 %v1450, %v1417
      %v1469 = vmul.f32 %v1453, %v1417
      %v1470 = vmul.f32 %v1456, %v1417
      %v1471 = vmul.f32 %v1459, %v1417
      %v1472 = vmul.f32 %v1462, %v1417
      %v1473 = vmul.f32 %v1465, %v1417
      %v1474 = vadd.f32 %v1466, 1e-05
      %v1475 = vadd.f32 %v1467, 1e-05
      %v1476 = vadd.f32 %v1468, 1e-05
      %v1477 = vadd.f32 %v1469, 1e-05
      %v1478 = vadd.f32 %v1470, 1e-05
      %v1479 = vadd.f32 %v1471, 1e-05
      %v1480 = vadd.f32 %v1472, 1e-05
      %v1481 = vadd.f32 %v1473, 1e-05
      %v1482 = vrsqrt.pop %v1474
      %v1483 = vmul.f32 %v1482, %v1474
      %v1484 = vmul.f32 %v1483, %v1482
      %v1485 = vmul.f32 0.5, %v1484
      %v1486 = vsub.f32 1.5, %v1485
      %v1487 = vmul.f32 %v1482, %v1486
      %vm1488 = vweird.f32 %v1474
      %vm1489 = vweird.f32 %v1482
      %vm1490 = vmor %vm1488, %vm1489
      %v1491 = vsel %vm1490, %v1482, %v1487
      %v1492 = vrsqrt.pop %v1475
      %v1493 = vmul.f32 %v1492, %v1475
      %v1494 = vmul.f32 %v1493, %v1492
      %v1495 = vmul.f32 0.5, %v1494
      %v1496 = vsub.f32 1.5, %v1495
      %v1497 = vmul.f32 %v1492, %v1496
      %vm1498 = vweird.f32 %v1475
      %vm1499 = vweird.f32 %v1492
      %vm1500 = vmor %vm1498, %vm1499
      %v1501 = vsel %vm1500, %v1492, %v1497
      %v1502 = vrsqrt.pop %v1476
      %v1503 = vmul.f32 %v1502, %v1476
      %v1504 = vmul.f32 %v1503, %v1502
      %v1505 = vmul.f32 0.5, %v1504
      %v1506 = vsub.f32 1.5, %v1505
      %v1507 = vmul.f32 %v1502, %v1506
      %vm1508 = vweird.f32 %v1476
      %vm1509 = vweird.f32 %v1502
      %vm1510 = vmor %vm1508, %vm1509
      %v1511 = vsel %vm1510, %v1502, %v1507
      %v1512 = vrsqrt.pop %v1477
      %v1513 = vmul.f32 %v1512, %v1477
      %v1514 = vmul.f32 %v1513, %v1512
      %v1515 = vmul.f32 0.5, %v1514
      %v1516 = vsub.f32 1.5, %v1515
      %v1517 = vmul.f32 %v1512, %v1516
      %vm1518 = vweird.f32 %v1477
      %vm1519 = vweird.f32 %v1512
      %vm1520 = vmor %vm1518, %vm1519
      %v1521 = vsel %vm1520, %v1512, %v1517
      %v1522 = vrsqrt.pop %v1478
      %v1523 = vmul.f32 %v1522, %v1478
      %v1524 = vmul.f32 %v1523, %v1522
      %v1525 = vmul.f32 0.5, %v1524
      %v1526 = vsub.f32 1.5, %v1525
      %v1527 = vmul.f32 %v1522, %v1526
      %vm1528 = vweird.f32 %v1478
      %vm1529 = vweird.f32 %v1522
      %vm1530 = vmor %vm1528, %vm1529
      %v1531 = vsel %vm1530, %v1522, %v1527
      %v1532 = vrsqrt.pop %v1479
      %v1533 = vmul.f32 %v1532, %v1479
      %v1534 = vmul.f32 %v1533, %v1532
      %v1535 = vmul.f32 0.5, %v1534
      %v1536 = vsub.f32 1.5, %v1535
      %v1537 = vmul.f32 %v1532, %v1536
      %vm1538 = vweird.f32 %v1479
      %vm1539 = vweird.f32 %v1532
      %vm1540 = vmor %vm1538, %vm1539
      %v1541 = vsel %vm1540, %v1532, %v1537
      %v1542 = vrsqrt.pop %v1480
      %v1543 = vmul.f32 %v1542, %v1480
      %v1544 = vmul.f32 %v1543, %v1542
      %v1545 = vmul.f32 0.5, %v1544
      %v1546 = vsub.f32 1.5, %v1545
      %v1547 = vmul.f32 %v1542, %v1546
      %vm1548 = vweird.f32 %v1480
      %vm1549 = vweird.f32 %v1542
      %vm1550 = vmor %vm1548, %vm1549
      %v1551 = vsel %vm1550, %v1542, %v1547
      %v1552 = vrsqrt.pop %v1481
      %v1553 = vmul.f32 %v1552, %v1481
      %v1554 = vmul.f32 %v1553, %v1552
      %v1555 = vmul.f32 0.5, %v1554
      %v1556 = vsub.f32 1.5, %v1555
      %v1557 = vmul.f32 %v1552, %v1556
      %vm1558 = vweird.f32 %v1481
      %vm1559 = vweird.f32 %v1552
      %vm1560 = vmor %vm1558, %vm1559
      %v1561 = vsel %vm1560, %v1552, %v1557
      %v1562 = vmul.f32 %v1426, %v1491
      %v1563 = vmul.f32 %v1427, %v1501
      %v1564 = vmul.f32 %v1428, %v1511
      %v1565 = vmul.f32 %v1429, %v1521
      %v1566 = vmul.f32 %v1430, %v1531
      %v1567 = vmul.f32 %v1431, %v1541
      %v1568 = vmul.f32 %v1432, %v1551
      %v1569 = vmul.f32 %v1433, %v1561
      %v1570 = vperm.slane %v547, 3
      %v1571 = vmul.f32 %v1562, %v1570
      %v1572 = vmul.f32 %v1563, %v1570
      %v1573 = vmul.f32 %v1564, %v1570
      %v1574 = vmul.f32 %v1565, %v1570
      %v1575 = vmul.f32 %v1566, %v1570
      %v1576 = vmul.f32 %v1567, %v1570
      %v1577 = vmul.f32 %v1568, %v1570
      %v1578 = vmul.f32 %v1569, %v1570
      %v1579 = vperm.slane %v547, 4
      %v1580 = vadd.f32 %v1571, %v1579
      %v1581 = vadd.f32 %v1572, %v1579
      %v1582 = vadd.f32 %v1573, %v1579
      %v1583 = vadd.f32 %v1574, %v1579
      %v1584 = vadd.f32 %v1575, %v1579
      %v1585 = vadd.f32 %v1576, %v1579
      %v1586 = vadd.f32 %v1577, %v1579
      %v1587 = vadd.f32 %v1578, %v1579
      %v1588 = vld [vmem:[%s4] sm:$0xff]
      %v1589 = vld [vmem:[%s4 + $0x8] sm:$0xff]
      %v1590 = vld [vmem:[%s4 + $0x10] sm:$0xff]
      %v1591 = vld [vmem:[%s4 + $0x18] sm:$0xff]
      %v1592 = vperm.slane %v547, 5
      %v1594 = vsel %vm629, %v1580, 0
      %v1597 = vsel %vm629, %v1581, 0
      %v1600 = vsel %vm629, %v1582, 0
      %v1603 = vsel %vm629, %v1583, 0
      %v1606 = vsel %vm629, %v1584, 0
      %v1609 = vsel %vm629, %v1585, 0
      %v1612 = vsel %vm629, %v1586, 0
      %v1615 = vsel %vm629, %v1587, 0
      %1617 = vmatpush.msra.mxu0 0.0
      %1618 = vmatpush.msra.mxu0 0.0
      %1619 = vmatpush.msra.mxu0 0.0
      %1620 = vmatpush.msra.mxu0 0.0
      %1621 = vmatpush.msra.mxu0 0.0
      %1622 = vmatpush.msra.mxu0 0.0
      %1623 = vmatpush.msra.mxu0 0.0
      %1624 = vmatpush.msra.mxu0 0.0
      %1625 = vmatpush.msra.mxu0 0.0
      %1626 = vmatpush.msra.mxu0 0.0
      %1627 = vmatpush.msra.mxu0 0.0
      %1628 = vmatpush.msra.mxu0 0.0
      %1629 = vmatpush.msra.mxu0 %v1591
      %1630 = vmatpush.msra.mxu0 %v1590
      %1631 = vmatpush.msra.mxu0 %v1589
      %1632 = vmatpush.msra.mxu0 %v1588
      %1633 = vmatmul.f32.gmra.mxu0 %v1594
      %v1634 = vpop.f32.mrf.mxu0
      %v1635 = vadd.f32 %v1592, %v1634
      %1636 = vmatmul.f32.gmra.mxu0 %v1597
      %v1637 = vpop.f32.mrf.mxu0
      %v1638 = vadd.f32 %v1592, %v1637
      %1639 = vmatmul.f32.gmra.mxu0 %v1600
      %v1640 = vpop.f32.mrf.mxu0
      %v1641 = vadd.f32 %v1592, %v1640
      %1642 = vmatmul.f32.gmra.mxu0 %v1603
      %v1643 = vpop.f32.mrf.mxu0
      %v1644 = vadd.f32 %v1592, %v1643
      %1645 = vmatmul.f32.gmra.mxu0 %v1606
      %v1646 = vpop.f32.mrf.mxu0
      %v1647 = vadd.f32 %v1592, %v1646
      %1648 = vmatmul.f32.gmra.mxu0 %v1609
      %v1649 = vpop.f32.mrf.mxu0
      %v1650 = vadd.f32 %v1592, %v1649
      %1651 = vmatmul.f32.gmra.mxu0 %v1612
      %v1652 = vpop.f32.mrf.mxu0
      %v1653 = vadd.f32 %v1592, %v1652
      %1654 = vmatmul.f32.gmra.mxu0 %v1615
      %v1655 = vpop.f32.mrf.mxu0
      %v1656 = vadd.f32 %v1592, %v1655
      %1657 = vdwg.mxu0
      %v1658 = vmax.f32 %v1635, 0.0
      %v1659 = vmax.f32 %v1638, 0.0
      %v1660 = vmax.f32 %v1641, 0.0
      %v1661 = vmax.f32 %v1644, 0.0
      %v1662 = vmax.f32 %v1647, 0.0
      %v1663 = vmax.f32 %v1650, 0.0
      %v1664 = vmax.f32 %v1653, 0.0
      %v1665 = vmax.f32 %v1656, 0.0
      %v1666 = vld [vmem:[%s5] sm:$0xff]
      %v1667 = vld [vmem:[%s5 + $0x8] sm:$0xff]
      %v1668 = vld [vmem:[%s5 + $0x10] sm:$0xff]
      %v1669 = vld [vmem:[%s5 + $0x18] sm:$0xff]
      %v1670 = vld [vmem:[%s5 + $0x20] sm:$0xff]
      %v1671 = vld [vmem:[%s5 + $0x28] sm:$0xff]
      %v1672 = vld [vmem:[%s5 + $0x30] sm:$0xff]
      %v1673 = vld [vmem:[%s5 + $0x38] sm:$0xff]
      %v1674 = vperm.slane %v547, 6
      %v1676 = vsel %vm801, %v1658, 0
      %v1679 = vsel %vm801, %v1659, 0
      %v1682 = vsel %vm801, %v1660, 0
      %v1685 = vsel %vm801, %v1661, 0
      %v1688 = vsel %vm801, %v1662, 0
      %v1691 = vsel %vm801, %v1663, 0
      %v1694 = vsel %vm801, %v1664, 0
      %v1697 = vsel %vm801, %v1665, 0
      %1699 = vmatpush.msra.mxu0 0.0
      %1700 = vmatpush.msra.mxu0 0.0
      %1701 = vmatpush.msra.mxu0 0.0
      %1702 = vmatpush.msra.mxu0 0.0
      %1703 = vmatpush.msra.mxu0 0.0
      %1704 = vmatpush.msra.mxu0 0.0
      %1705 = vmatpush.msra.mxu0 0.0
      %1706 = vmatpush.msra.mxu0 0.0
      %1707 = vmatpush.msra.mxu0 %v1673
      %1708 = vmatpush.msra.mxu0 %v1672
      %1709 = vmatpush.msra.mxu0 %v1671
      %1710 = vmatpush.msra.mxu0 %v1670
      %1711 = vmatpush.msra.mxu0 %v1669
      %1712 = vmatpush.msra.mxu0 %v1668
      %1713 = vmatpush.msra.mxu0 %v1667
      %1714 = vmatpush.msra.mxu0 %v1666
      %1715 = vmatmul.f32.gmra.mxu0 %v1676
      %v1716 = vpop.f32.mrf.mxu0
      %v1717 = vadd.f32 %v1674, %v1716
      %1718 = vmatmul.f32.gmra.mxu0 %v1679
      %v1719 = vpop.f32.mrf.mxu0
      %v1720 = vadd.f32 %v1674, %v1719
      %1721 = vmatmul.f32.gmra.mxu0 %v1682
      %v1722 = vpop.f32.mrf.mxu0
      %v1723 = vadd.f32 %v1674, %v1722
      %1724 = vmatmul.f32.gmra.mxu0 %v1685
      %v1725 = vpop.f32.mrf.mxu0
      %v1726 = vadd.f32 %v1674, %v1725
      %1727 = vmatmul.f32.gmra.mxu0 %v1688
      %v1728 = vpop.f32.mrf.mxu0
      %v1729 = vadd.f32 %v1674, %v1728
      %1730 = vmatmul.f32.gmra.mxu0 %v1691
      %v1731 = vpop.f32.mrf.mxu0
      %v1732 = vadd.f32 %v1674, %v1731
      %1733 = vmatmul.f32.gmra.mxu0 %v1694
      %v1734 = vpop.f32.mrf.mxu0
      %v1735 = vadd.f32 %v1674, %v1734
      %1736 = vmatmul.f32.gmra.mxu0 %v1697
      %v1737 = vpop.f32.mrf.mxu0
      %v1738 = vadd.f32 %v1674, %v1737
      %1739 = vdwg.mxu0
      %v1740 = vadd.f32 %v1580, %v1717
      %v1741 = vadd.f32 %v1581, %v1720
      %v1742 = vadd.f32 %v1582, %v1723
      %v1743 = vadd.f32 %v1583, %v1726
      %v1744 = vadd.f32 %v1584, %v1729
      %v1745 = vadd.f32 %v1585, %v1732
      %v1746 = vadd.f32 %v1586, %v1735
      %v1747 = vadd.f32 %v1587, %v1738
      %v1748 = vsel %vm629, %v1740, 0.0
      %1749 = vadd.xlane.f32.xlu0 %v1748
      %v1750 = vpop.xlane.xlu0 %1749
      %v1751 = vsel %vm629, %v1741, 0.0
      %1752 = vadd.xlane.f32.xlu0 %v1751
      %v1753 = vpop.xlane.xlu0 %1752
      %v1754 = vsel %vm629, %v1742, 0.0
      %1755 = vadd.xlane.f32.xlu0 %v1754
      %v1756 = vpop.xlane.xlu0 %1755
      %v1757 = vsel %vm629, %v1743, 0.0
      %1758 = vadd.xlane.f32.xlu0 %v1757
      %v1759 = vpop.xlane.xlu0 %1758
      %v1760 = vsel %vm629, %v1744, 0.0
      %1761 = vadd.xlane.f32.xlu0 %v1760
      %v1762 = vpop.xlane.xlu0 %1761
      %v1763 = vsel %vm629, %v1745, 0.0
      %1764 = vadd.xlane.f32.xlu0 %v1763
      %v1765 = vpop.xlane.xlu0 %1764
      %v1766 = vsel %vm629, %v1746, 0.0
      %1767 = vadd.xlane.f32.xlu0 %v1766
      %v1768 = vpop.xlane.xlu0 %1767
      %v1769 = vsel %vm629, %v1747, 0.0
      %1770 = vadd.xlane.f32.xlu0 %v1769
      %v1771 = vpop.xlane.xlu0 %1770
      %v1772 = vmul.f32 %v1750, %v1417
      %v1773 = vmul.f32 %v1753, %v1417
      %v1774 = vmul.f32 %v1756, %v1417
      %v1775 = vmul.f32 %v1759, %v1417
      %v1776 = vmul.f32 %v1762, %v1417
      %v1777 = vmul.f32 %v1765, %v1417
      %v1778 = vmul.f32 %v1768, %v1417
      %v1779 = vmul.f32 %v1771, %v1417
      %v1780 = vsub.f32 %v1740, %v1772
      %v1781 = vsub.f32 %v1741, %v1773
      %v1782 = vsub.f32 %v1742, %v1774
      %v1783 = vsub.f32 %v1743, %v1775
      %v1784 = vsub.f32 %v1744, %v1776
      %v1785 = vsub.f32 %v1745, %v1777
      %v1786 = vsub.f32 %v1746, %v1778
      %v1787 = vsub.f32 %v1747, %v1779
      %v1788 = vmul.f32 %v1780, %v1780
      %v1789 = vmul.f32 %v1781, %v1781
      %v1790 = vmul.f32 %v1782, %v1782
      %v1791 = vmul.f32 %v1783, %v1783
      %v1792 = vmul.f32 %v1784, %v1784
      %v1793 = vmul.f32 %v1785, %v1785
      %v1794 = vmul.f32 %v1786, %v1786
      %v1795 = vmul.f32 %v1787, %v1787
      %v1796 = vsel %vm629, %v1788, 0.0
      %1797 = vadd.xlane.f32.xlu0 %v1796
      %v1798 = vpop.xlane.xlu0 %1797
      %v1799 = vsel %vm629, %v1789, 0.0
      %1800 = vadd.xlane.f32.xlu0 %v1799
      %v1801 = vpop.xlane.xlu0 %1800
      %v1802 = vsel %vm629, %v1790, 0.0
      %1803 = vadd.xlane.f32.xlu0 %v1802
      %v1804 = vpop.xlane.xlu0 %1803
      %v1805 = vsel %vm629, %v1791, 0.0
      %1806 = vadd.xlane.f32.xlu0 %v1805
      %v1807 = vpop.xlane.xlu0 %1806
      %v1808 = vsel %vm629, %v1792, 0.0
      %1809 = vadd.xlane.f32.xlu0 %v1808
      %v1810 = vpop.xlane.xlu0 %1809
      %v1811 = vsel %vm629, %v1793, 0.0
      %1812 = vadd.xlane.f32.xlu0 %v1811
      %v1813 = vpop.xlane.xlu0 %1812
      %v1814 = vsel %vm629, %v1794, 0.0
      %1815 = vadd.xlane.f32.xlu0 %v1814
      %v1816 = vpop.xlane.xlu0 %1815
      %v1817 = vsel %vm629, %v1795, 0.0
      %1818 = vadd.xlane.f32.xlu0 %v1817
      %v1819 = vpop.xlane.xlu0 %1818
      %v1820 = vmul.f32 %v1798, %v1417
      %v1821 = vmul.f32 %v1801, %v1417
      %v1822 = vmul.f32 %v1804, %v1417
      %v1823 = vmul.f32 %v1807, %v1417
      %v1824 = vmul.f32 %v1810, %v1417
      %v1825 = vmul.f32 %v1813, %v1417
      %v1826 = vmul.f32 %v1816, %v1417
      %v1827 = vmul.f32 %v1819, %v1417
      %v1828 = vadd.f32 %v1820, 1e-05
      %v1829 = vadd.f32 %v1821, 1e-05
      %v1830 = vadd.f32 %v1822, 1e-05
      %v1831 = vadd.f32 %v1823, 1e-05
      %v1832 = vadd.f32 %v1824, 1e-05
      %v1833 = vadd.f32 %v1825, 1e-05
      %v1834 = vadd.f32 %v1826, 1e-05
      %v1835 = vadd.f32 %v1827, 1e-05
      %v1836 = vrsqrt.pop %v1828
      %v1837 = vmul.f32 %v1836, %v1828
      %v1838 = vmul.f32 %v1837, %v1836
      %v1839 = vmul.f32 0.5, %v1838
      %v1840 = vsub.f32 1.5, %v1839
      %v1841 = vmul.f32 %v1836, %v1840
      %vm1842 = vweird.f32 %v1828
      %vm1843 = vweird.f32 %v1836
      %vm1844 = vmor %vm1842, %vm1843
      %v1845 = vsel %vm1844, %v1836, %v1841
      %v1846 = vrsqrt.pop %v1829
      %v1847 = vmul.f32 %v1846, %v1829
      %v1848 = vmul.f32 %v1847, %v1846
      %v1849 = vmul.f32 0.5, %v1848
      %v1850 = vsub.f32 1.5, %v1849
      %v1851 = vmul.f32 %v1846, %v1850
      %vm1852 = vweird.f32 %v1829
      %vm1853 = vweird.f32 %v1846
      %vm1854 = vmor %vm1852, %vm1853
      %v1855 = vsel %vm1854, %v1846, %v1851
      %v1856 = vrsqrt.pop %v1830
      %v1857 = vmul.f32 %v1856, %v1830
      %v1858 = vmul.f32 %v1857, %v1856
      %v1859 = vmul.f32 0.5, %v1858
      %v1860 = vsub.f32 1.5, %v1859
      %v1861 = vmul.f32 %v1856, %v1860
      %vm1862 = vweird.f32 %v1830
      %vm1863 = vweird.f32 %v1856
      %vm1864 = vmor %vm1862, %vm1863
      %v1865 = vsel %vm1864, %v1856, %v1861
      %v1866 = vrsqrt.pop %v1831
      %v1867 = vmul.f32 %v1866, %v1831
      %v1868 = vmul.f32 %v1867, %v1866
      %v1869 = vmul.f32 0.5, %v1868
      %v1870 = vsub.f32 1.5, %v1869
      %v1871 = vmul.f32 %v1866, %v1870
      %vm1872 = vweird.f32 %v1831
      %vm1873 = vweird.f32 %v1866
      %vm1874 = vmor %vm1872, %vm1873
      %v1875 = vsel %vm1874, %v1866, %v1871
      %v1876 = vrsqrt.pop %v1832
      %v1877 = vmul.f32 %v1876, %v1832
      %v1878 = vmul.f32 %v1877, %v1876
      %v1879 = vmul.f32 0.5, %v1878
      %v1880 = vsub.f32 1.5, %v1879
      %v1881 = vmul.f32 %v1876, %v1880
      %vm1882 = vweird.f32 %v1832
      %vm1883 = vweird.f32 %v1876
      %vm1884 = vmor %vm1882, %vm1883
      %v1885 = vsel %vm1884, %v1876, %v1881
      %v1886 = vrsqrt.pop %v1833
      %v1887 = vmul.f32 %v1886, %v1833
      %v1888 = vmul.f32 %v1887, %v1886
      %v1889 = vmul.f32 0.5, %v1888
      %v1890 = vsub.f32 1.5, %v1889
      %v1891 = vmul.f32 %v1886, %v1890
      %vm1892 = vweird.f32 %v1833
      %vm1893 = vweird.f32 %v1886
      %vm1894 = vmor %vm1892, %vm1893
      %v1895 = vsel %vm1894, %v1886, %v1891
      %v1896 = vrsqrt.pop %v1834
      %v1897 = vmul.f32 %v1896, %v1834
      %v1898 = vmul.f32 %v1897, %v1896
      %v1899 = vmul.f32 0.5, %v1898
      %v1900 = vsub.f32 1.5, %v1899
      %v1901 = vmul.f32 %v1896, %v1900
      %vm1902 = vweird.f32 %v1834
      %vm1903 = vweird.f32 %v1896
      %vm1904 = vmor %vm1902, %vm1903
      %v1905 = vsel %vm1904, %v1896, %v1901
      %v1906 = vrsqrt.pop %v1835
      %v1907 = vmul.f32 %v1906, %v1835
      %v1908 = vmul.f32 %v1907, %v1906
      %v1909 = vmul.f32 0.5, %v1908
      %v1910 = vsub.f32 1.5, %v1909
      %v1911 = vmul.f32 %v1906, %v1910
      %vm1912 = vweird.f32 %v1835
      %vm1913 = vweird.f32 %v1906
      %vm1914 = vmor %vm1912, %vm1913
      %v1915 = vsel %vm1914, %v1906, %v1911
      %v1916 = vmul.f32 %v1780, %v1845
      %v1917 = vmul.f32 %v1781, %v1855
      %v1918 = vmul.f32 %v1782, %v1865
      %v1919 = vmul.f32 %v1783, %v1875
      %v1920 = vmul.f32 %v1784, %v1885
      %v1921 = vmul.f32 %v1785, %v1895
      %v1922 = vmul.f32 %v1786, %v1905
      %v1923 = vmul.f32 %v1787, %v1915
      %v1924 = vperm.slane %v547, 7
      %v1925 = vmul.f32 %v1916, %v1924
      %v1926 = vmul.f32 %v1917, %v1924
      %v1927 = vmul.f32 %v1918, %v1924
      %v1928 = vmul.f32 %v1919, %v1924
      %v1929 = vmul.f32 %v1920, %v1924
      %v1930 = vmul.f32 %v1921, %v1924
      %v1931 = vmul.f32 %v1922, %v1924
      %v1932 = vmul.f32 %v1923, %v1924
      %v1933 = vperm.slane %v548, 0
      %v1934 = vadd.f32 %v1925, %v1933
      %v1935 = vadd.f32 %v1926, %v1933
      %v1936 = vadd.f32 %v1927, %v1933
      %v1937 = vadd.f32 %v1928, %v1933
      %v1938 = vadd.f32 %v1929, %v1933
      %v1939 = vadd.f32 %v1930, %v1933
      %v1940 = vadd.f32 %v1931, %v1933
      %v1941 = vadd.f32 %v1932, %v1933
      %v1942 = vld [vmem:[%s15] sm:$0xff]
      %v1943 = vld [vmem:[%s6] sm:$0xff]
      %v1944 = vld [vmem:[%s6 + $0x8] sm:$0xff]
      %v1945 = vld [vmem:[%s6 + $0x10] sm:$0xff]
      %v1946 = vld [vmem:[%s6 + $0x18] sm:$0xff]
      %v1947 = vperm.slane %v548, 1
      %v1949 = vsel %vm629, %v1942, 0
      %1951 = vmatpush.msra.mxu0 0.0
      %1952 = vmatpush.msra.mxu0 0.0
      %1953 = vmatpush.msra.mxu0 0.0
      %1954 = vmatpush.msra.mxu0 0.0
      %1955 = vmatpush.msra.mxu0 0.0
      %1956 = vmatpush.msra.mxu0 0.0
      %1957 = vmatpush.msra.mxu0 0.0
      %1958 = vmatpush.msra.mxu0 0.0
      %1959 = vmatpush.msra.mxu0 0.0
      %1960 = vmatpush.msra.mxu0 0.0
      %1961 = vmatpush.msra.mxu0 0.0
      %1962 = vmatpush.msra.mxu0 0.0
      %1963 = vmatpush.msra.mxu0 %v1946
      %1964 = vmatpush.msra.mxu0 %v1945
      %1965 = vmatpush.msra.mxu0 %v1944
      %1966 = vmatpush.msra.mxu0 %v1943
      %1967 = vmatmul.f32.gmra.mxu0 %v1949
      %v1968 = vpop.f32.mrf.mxu0
      %v1969 = vadd.f32 %v1947, %v1968
      %1970 = vdwg.mxu0
      %1972 = vrot.lane.b32.xlu0 %v1969, 96
      %v1973 = vpop.permute.xlu0 %1972
      %v1974 = vsel %vm719, %v1969, 0
      %v1976 = vsel %vm719, %v1973, 0
      %1978 = vmatpush.xpose.msra.mxu0 0.0
      %1979 = vmatpush.xpose.msra.mxu0 0.0
      %1980 = vmatpush.xpose.msra.mxu0 0.0
      %1981 = vmatpush.xpose.msra.mxu0 0.0
      %1982 = vmatpush.xpose.msra.mxu0 0.0
      %1983 = vmatpush.xpose.msra.mxu0 0.0
      %1984 = vmatpush.xpose.msra.mxu0 0.0
      %1985 = vmatpush.xpose.msra.mxu0 0.0
      %1986 = vmatpush.xpose.msra.mxu0 0.0
      %1987 = vmatpush.xpose.msra.mxu0 0.0
      %1988 = vmatpush.xpose.msra.mxu0 0.0
      %1989 = vmatpush.xpose.msra.mxu0 0.0
      %1990 = vmatpush.xpose.msra.mxu0 0.0
      %1991 = vmatpush.xpose.msra.mxu0 0.0
      %1992 = vmatpush.xpose.msra.mxu0 0.0
      %1993 = vmatpush.xpose.msra.mxu0 %v1976
      %1994 = vmatmul.f32.gmra.mxu0 %v1974
      %v1995 = vpop.f32.mrf.mxu0
      %v1996 = vadd.f32 0.0, %v1995
      %1997 = vdwg.mxu0
      %v1998 = vmul.f32 %v1996, 0.25
      %vm1999 = vcmask 64512
      %v2000 = vsel %vm1999, %v1998, -inf
      %2001 = vmax.xlane.f32.xlu0 %v2000
      %v2002 = vpop.xlane.xlu0 %2001
      %v2003 = vsub.f32 %v1998, %v2002
      %v2004 = vmul.f32 %v2003, 1.442695
      %v2005 = vpow.pop %v2004
      %v2006 = vsel %vm1999, %v2005, 0.0
      %2007 = vadd.xlane.f32.xlu0 %v2006
      %v2008 = vpop.xlane.xlu0 %2007
      %v2009 = vrcp.pop %v2008
      %v2010 = vmul.f32 %v2005, %v2009
      %2011 = vrot.lane.b32.xlu0 %v1969, 64
      %v2012 = vpop.permute.xlu0 %2011
      %v2015 = vsel %vm1999, %v2010, 0
      %2017 = vmatpush.msra.mxu0 0.0
      %2018 = vmatpush.msra.mxu0 0.0
      %2019 = vmatpush.msra.mxu0 0.0
      %2020 = vmatpush.msra.mxu0 0.0
      %2021 = vmatpush.msra.mxu0 0.0
      %2022 = vmatpush.msra.mxu0 0.0
      %2023 = vmatpush.msra.mxu0 0.0
      %2024 = vmatpush.msra.mxu0 0.0
      %2025 = vmatpush.msra.mxu0 0.0
      %2026 = vmatpush.msra.mxu0 0.0
      %2027 = vmatpush.msra.mxu0 0.0
      %2028 = vmatpush.msra.mxu0 0.0
      %2029 = vmatpush.msra.mxu0 0.0
      %2030 = vmatpush.msra.mxu0 0.0
      %2031 = vmatpush.msra.mxu0 0.0
      %2032 = vmatpush.msra.mxu0 %v2012
      %2033 = vmatmul.f32.gmra.mxu0 %v2015
      %v2034 = vpop.f32.mrf.mxu0
      %v2035 = vadd.f32 0.0, %v2034
      %2036 = vdwg.mxu0
      %2037 = vrot.lane.b32.xlu0 %v1969, 112
      %v2038 = vpop.permute.xlu0 %2037
      %2039 = vrot.lane.b32.xlu0 %v1969, 80
      %v2040 = vpop.permute.xlu0 %2039
      %v2041 = vsel %vm719, %v2038, 0
      %v2043 = vsel %vm719, %v2040, 0
      %2045 = vmatpush.xpose.msra.mxu0 0.0
      %2046 = vmatpush.xpose.msra.mxu0 0.0
      %2047 = vmatpush.xpose.msra.mxu0 0.0
      %2048 = vmatpush.xpose.msra.mxu0 0.0
      %2049 = vmatpush.xpose.msra.mxu0 0.0
      %2050 = vmatpush.xpose.msra.mxu0 0.0
      %2051 = vmatpush.xpose.msra.mxu0 0.0
      %2052 = vmatpush.xpose.msra.mxu0 0.0
      %2053 = vmatpush.xpose.msra.mxu0 0.0
      %2054 = vmatpush.xpose.msra.mxu0 0.0
      %2055 = vmatpush.xpose.msra.mxu0 0.0
      %2056 = vmatpush.xpose.msra.mxu0 0.0
      %2057 = vmatpush.xpose.msra.mxu0 0.0
      %2058 = vmatpush.xpose.msra.mxu0 0.0
      %2059 = vmatpush.xpose.msra.mxu0 0.0
      %2060 = vmatpush.xpose.msra.mxu0 %v2043
      %2061 = vmatmul.f32.gmra.mxu0 %v2041
      %v2062 = vpop.f32.mrf.mxu0
      %v2063 = vadd.f32 0.0, %v2062
      %2064 = vdwg.mxu0
      %v2065 = vmul.f32 %v2063, 0.25
      %v2066 = vsel %vm1999, %v2065, -inf
      %2067 = vmax.xlane.f32.xlu0 %v2066
      %v2068 = vpop.xlane.xlu0 %2067
      %v2069 = vsub.f32 %v2065, %v2068
      %v2070 = vmul.f32 %v2069, 1.442695
      %v2071 = vpow.pop %v2070
      %v2072 = vsel %vm1999, %v2071, 0.0
      %2073 = vadd.xlane.f32.xlu0 %v2072
      %v2074 = vpop.xlane.xlu0 %2073
      %v2075 = vrcp.pop %v2074
      %v2076 = vmul.f32 %v2071, %v2075
      %2077 = vrot.lane.b32.xlu0 %v1969, 48
      %v2078 = vpop.permute.xlu0 %2077
      %v2081 = vsel %vm1999, %v2076, 0
      %2083 = vmatpush.msra.mxu0 0.0
      %2084 = vmatpush.msra.mxu0 0.0
      %2085 = vmatpush.msra.mxu0 0.0
      %2086 = vmatpush.msra.mxu0 0.0
      %2087 = vmatpush.msra.mxu0 0.0
      %2088 = vmatpush.msra.mxu0 0.0
      %2089 = vmatpush.msra.mxu0 0.0
      %2090 = vmatpush.msra.mxu0 0.0
      %2091 = vmatpush.msra.mxu0 0.0
      %2092 = vmatpush.msra.mxu0 0.0
      %2093 = vmatpush.msra.mxu0 0.0
      %2094 = vmatpush.msra.mxu0 0.0
      %2095 = vmatpush.msra.mxu0 0.0
      %2096 = vmatpush.msra.mxu0 0.0
      %2097 = vmatpush.msra.mxu0 0.0
      %2098 = vmatpush.msra.mxu0 %v2078
      %2099 = vmatmul.f32.gmra.mxu0 %v2081
      %v2100 = vpop.f32.mrf.mxu0
      %v2101 = vadd.f32 0.0, %v2100
      %2102 = vdwg.mxu0
      %2104 = vrot.lane.b32.xlu0 %v2101, 16
      %v2105 = vpop.permute.xlu0 %2104
      %v2107 = vsel %vm719, %v2035, %v2105
      %v2108 = vld [vmem:[%s7] sm:$0xff]
      %v2109 = vld [vmem:[%s7 + $0x8] sm:$0xff]
      %v2110 = vld [vmem:[%s7 + $0x10] sm:$0xff]
      %v2111 = vld [vmem:[%s7 + $0x18] sm:$0xff]
      %v2112 = vperm.slane %v548, 2
      %v2114 = vsel %vm629, %v2107, 0
      %2116 = vmatpush.msra.mxu0 0.0
      %2117 = vmatpush.msra.mxu0 0.0
      %2118 = vmatpush.msra.mxu0 0.0
      %2119 = vmatpush.msra.mxu0 0.0
      %2120 = vmatpush.msra.mxu0 0.0
      %2121 = vmatpush.msra.mxu0 0.0
      %2122 = vmatpush.msra.mxu0 0.0
      %2123 = vmatpush.msra.mxu0 0.0
      %2124 = vmatpush.msra.mxu0 0.0
      %2125 = vmatpush.msra.mxu0 0.0
      %2126 = vmatpush.msra.mxu0 0.0
      %2127 = vmatpush.msra.mxu0 0.0
      %2128 = vmatpush.msra.mxu0 %v2111
      %2129 = vmatpush.msra.mxu0 %v2110
      %2130 = vmatpush.msra.mxu0 %v2109
      %2131 = vmatpush.msra.mxu0 %v2108
      %2132 = vmatmul.f32.gmra.mxu0 %v2114
      %v2133 = vpop.f32.mrf.mxu0
      %v2134 = vadd.f32 %v2112, %v2133
      %2135 = vdwg.mxu0
      %v2136 = vadd.f32 %v1942, %v2134
      %v2137 = vsel %vm629, %v2136, 0.0
      %2138 = vadd.xlane.f32.xlu0 %v2137
      %v2139 = vpop.xlane.xlu0 %2138
      %v2140 = vmul.f32 %v2139, %v1417
      %v2141 = vsub.f32 %v2136, %v2140
      %v2142 = vmul.f32 %v2141, %v2141
      %v2143 = vsel %vm629, %v2142, 0.0
      %2144 = vadd.xlane.f32.xlu0 %v2143
      %v2145 = vpop.xlane.xlu0 %2144
      %v2146 = vmul.f32 %v2145, %v1417
      %v2147 = vadd.f32 %v2146, 1e-05
      %v2148 = vrsqrt.pop %v2147
      %v2149 = vmul.f32 %v2148, %v2147
      %v2150 = vmul.f32 %v2149, %v2148
      %v2151 = vmul.f32 0.5, %v2150
      %v2152 = vsub.f32 1.5, %v2151
      %v2153 = vmul.f32 %v2148, %v2152
      %vm2154 = vweird.f32 %v2147
      %vm2155 = vweird.f32 %v2148
      %vm2156 = vmor %vm2154, %vm2155
      %v2157 = vsel %vm2156, %v2148, %v2153
      %v2158 = vmul.f32 %v2141, %v2157
      %v2159 = vperm.slane %v548, 3
      %v2160 = vmul.f32 %v2158, %v2159
      %v2161 = vperm.slane %v548, 4
      %v2162 = vadd.f32 %v2160, %v2161
      %v2163 = vld [vmem:[%s8] sm:$0xff]
      %v2164 = vld [vmem:[%s8 + $0x8] sm:$0xff]
      %v2165 = vld [vmem:[%s8 + $0x10] sm:$0xff]
      %v2166 = vld [vmem:[%s8 + $0x18] sm:$0xff]
      %v2167 = vperm.slane %v548, 5
      %v2169 = vsel %vm629, %v2162, 0
      %2171 = vmatpush.msra.mxu0 0.0
      %2172 = vmatpush.msra.mxu0 0.0
      %2173 = vmatpush.msra.mxu0 0.0
      %2174 = vmatpush.msra.mxu0 0.0
      %2175 = vmatpush.msra.mxu0 0.0
      %2176 = vmatpush.msra.mxu0 0.0
      %2177 = vmatpush.msra.mxu0 0.0
      %2178 = vmatpush.msra.mxu0 0.0
      %2179 = vmatpush.msra.mxu0 0.0
      %2180 = vmatpush.msra.mxu0 0.0
      %2181 = vmatpush.msra.mxu0 0.0
      %2182 = vmatpush.msra.mxu0 0.0
      %2183 = vmatpush.msra.mxu0 %v2166
      %2184 = vmatpush.msra.mxu0 %v2165
      %2185 = vmatpush.msra.mxu0 %v2164
      %2186 = vmatpush.msra.mxu0 %v2163
      %2187 = vmatmul.f32.gmra.mxu0 %v2169
      %v2188 = vpop.f32.mrf.mxu0
      %v2189 = vadd.f32 %v2167, %v2188
      %2190 = vdwg.mxu0
      %v2191 = vld [vmem:[%s9] sm:$0xff]
      %v2192 = vld [vmem:[%s9 + $0x8] sm:$0xff]
      %v2193 = vld [vmem:[%s9 + $0x10] sm:$0xff]
      %v2194 = vld [vmem:[%s9 + $0x18] sm:$0xff]
      %v2195 = vperm.slane %v548, 6
      %v2197 = vsel %vm629, %v1934, 0
      %v2200 = vsel %vm629, %v1935, 0
      %v2203 = vsel %vm629, %v1936, 0
      %v2206 = vsel %vm629, %v1937, 0
      %v2209 = vsel %vm629, %v1938, 0
      %v2212 = vsel %vm629, %v1939, 0
      %v2215 = vsel %vm629, %v1940, 0
      %v2218 = vsel %vm629, %v1941, 0
      %2220 = vmatpush.msra.mxu0 0.0
      %2221 = vmatpush.msra.mxu0 0.0
      %2222 = vmatpush.msra.mxu0 0.0
      %2223 = vmatpush.msra.mxu0 0.0
      %2224 = vmatpush.msra.mxu0 0.0
      %2225 = vmatpush.msra.mxu0 0.0
      %2226 = vmatpush.msra.mxu0 0.0
      %2227 = vmatpush.msra.mxu0 0.0
      %2228 = vmatpush.msra.mxu0 0.0
      %2229 = vmatpush.msra.mxu0 0.0
      %2230 = vmatpush.msra.mxu0 0.0
      %2231 = vmatpush.msra.mxu0 0.0
      %2232 = vmatpush.msra.mxu0 %v2194
      %2233 = vmatpush.msra.mxu0 %v2193
      %2234 = vmatpush.msra.mxu0 %v2192
      %2235 = vmatpush.msra.mxu0 %v2191
      %2236 = vmatmul.f32.gmra.mxu0 %v2197
      %v2237 = vpop.f32.mrf.mxu0
      %v2238 = vadd.f32 %v2195, %v2237
      %2239 = vmatmul.f32.gmra.mxu0 %v2200
      %v2240 = vpop.f32.mrf.mxu0
      %v2241 = vadd.f32 %v2195, %v2240
      %2242 = vmatmul.f32.gmra.mxu0 %v2203
      %v2243 = vpop.f32.mrf.mxu0
      %v2244 = vadd.f32 %v2195, %v2243
      %2245 = vmatmul.f32.gmra.mxu0 %v2206
      %v2246 = vpop.f32.mrf.mxu0
      %v2247 = vadd.f32 %v2195, %v2246
      %2248 = vmatmul.f32.gmra.mxu0 %v2209
      %v2249 = vpop.f32.mrf.mxu0
      %v2250 = vadd.f32 %v2195, %v2249
      %2251 = vmatmul.f32.gmra.mxu0 %v2212
      %v2252 = vpop.f32.mrf.mxu0
      %v2253 = vadd.f32 %v2195, %v2252
      %2254 = vmatmul.f32.gmra.mxu0 %v2215
      %v2255 = vpop.f32.mrf.mxu0
      %v2256 = vadd.f32 %v2195, %v2255
      %2257 = vmatmul.f32.gmra.mxu0 %v2218
      %v2258 = vpop.f32.mrf.mxu0
      %v2259 = vadd.f32 %v2195, %v2258
      %2260 = vdwg.mxu0
      %v2262 = vsel %vm719, %v2189, 0
      %v2265 = vsel %vm719, %v2238, 0
      %v2268 = vsel %vm719, %v2241, 0
      %v2271 = vsel %vm719, %v2244, 0
      %v2274 = vsel %vm719, %v2247, 0
      %v2277 = vsel %vm719, %v2250, 0
      %v2280 = vsel %vm719, %v2253, 0
      %v2283 = vsel %vm719, %v2256, 0
      %v2286 = vsel %vm719, %v2259, 0
      %2288 = vmatpush.xpose.msra.mxu0 0.0
      %2289 = vmatpush.xpose.msra.mxu0 0.0
      %2290 = vmatpush.xpose.msra.mxu0 0.0
      %2291 = vmatpush.xpose.msra.mxu0 0.0
      %2292 = vmatpush.xpose.msra.mxu0 0.0
      %2293 = vmatpush.xpose.msra.mxu0 0.0
      %2294 = vmatpush.xpose.msra.mxu0 0.0
      %2295 = vmatpush.xpose.msra.mxu0 0.0
      %2296 = vmatpush.xpose.msra.mxu0 %v2286
      %2297 = vmatpush.xpose.msra.mxu0 %v2283
      %2298 = vmatpush.xpose.msra.mxu0 %v2280
      %2299 = vmatpush.xpose.msra.mxu0 %v2277
      %2300 = vmatpush.xpose.msra.mxu0 %v2274
      %2301 = vmatpush.xpose.msra.mxu0 %v2271
      %2302 = vmatpush.xpose.msra.mxu0 %v2268
      %2303 = vmatpush.xpose.msra.mxu0 %v2265
      %2304 = vmatmul.f32.gmra.mxu0 %v2262
      %v2305 = vpop.f32.mrf.mxu0
      %v2306 = vadd.f32 0.0, %v2305
      %2307 = vdwg.mxu0
      %v2308 = vmul.f32 %v2306, 0.25
      %v2309 = vsel %vm801, %v2308, -inf
      %2310 = vmax.xlane.f32.xlu0 %v2309
      %v2311 = vpop.xlane.xlu0 %2310
      %v2312 = vsub.f32 %v2308, %v2311
      %v2313 = vmul.f32 %v2312, 1.442695
      %v2314 = vpow.pop %v2313
      %v2315 = vsel %vm801, %v2314, 0.0
      %2316 = vadd.xlane.f32.xlu0 %v2315
      %v2317 = vpop.xlane.xlu0 %2316
      %v2318 = vrcp.pop %v2317
      %v2319 = vmul.f32 %v2314, %v2318
      %2320 = vrot.lane.b32.xlu0 %v2238, 96
      %v2321 = vpop.permute.xlu0 %2320
      %2322 = vrot.lane.b32.xlu0 %v2241, 96
      %v2323 = vpop.permute.xlu0 %2322
      %2324 = vrot.lane.b32.xlu0 %v2244, 96
      %v2325 = vpop.permute.xlu0 %2324
      %2326 = vrot.lane.b32.xlu0 %v2247, 96
      %v2327 = vpop.permute.xlu0 %2326
      %2328 = vrot.lane.b32.xlu0 %v2250, 96
      %v2329 = vpop.permute.xlu0 %2328
      %2330 = vrot.lane.b32.xlu0 %v2253, 96
      %v2331 = vpop.permute.xlu0 %2330
      %2332 = vrot.lane.b32.xlu0 %v2256, 96
      %v2333 = vpop.permute.xlu0 %2332
      %2334 = vrot.lane.b32.xlu0 %v2259, 96
      %v2335 = vpop.permute.xlu0 %2334
      %v2345 = vsel %vm801, %v2319, 0
      %2347 = vmatpush.msra.mxu0 0.0
      %2348 = vmatpush.msra.mxu0 0.0
      %2349 = vmatpush.msra.mxu0 0.0
      %2350 = vmatpush.msra.mxu0 0.0
      %2351 = vmatpush.msra.mxu0 0.0
      %2352 = vmatpush.msra.mxu0 0.0
      %2353 = vmatpush.msra.mxu0 0.0
      %2354 = vmatpush.msra.mxu0 0.0
      %2355 = vmatpush.msra.mxu0 %v2335
      %2356 = vmatpush.msra.mxu0 %v2333
      %2357 = vmatpush.msra.mxu0 %v2331
      %2358 = vmatpush.msra.mxu0 %v2329
      %2359 = vmatpush.msra.mxu0 %v2327
      %2360 = vmatpush.msra.mxu0 %v2325
      %2361 = vmatpush.msra.mxu0 %v2323
      %2362 = vmatpush.msra.mxu0 %v2321
      %2363 = vmatmul.f32.gmra.mxu0 %v2345
      %v2364 = vpop.f32.mrf.mxu0
      %v2365 = vadd.f32 0.0, %v2364
      %2366 = vdwg.mxu0
      %2367 = vrot.lane.b32.xlu0 %v2189, 112
      %v2368 = vpop.permute.xlu0 %2367
      %2369 = vrot.lane.b32.xlu0 %v2238, 112
      %v2370 = vpop.permute.xlu0 %2369
      %2371 = vrot.lane.b32.xlu0 %v2241, 112
      %v2372 = vpop.permute.xlu0 %2371
      %2373 = vrot.lane.b32.xlu0 %v2244, 112
      %v2374 = vpop.permute.xlu0 %2373
      %2375 = vrot.lane.b32.xlu0 %v2247, 112
      %v2376 = vpop.permute.xlu0 %2375
      %2377 = vrot.lane.b32.xlu0 %v2250, 112
      %v2378 = vpop.permute.xlu0 %2377
      %2379 = vrot.lane.b32.xlu0 %v2253, 112
      %v2380 = vpop.permute.xlu0 %2379
      %2381 = vrot.lane.b32.xlu0 %v2256, 112
      %v2382 = vpop.permute.xlu0 %2381
      %2383 = vrot.lane.b32.xlu0 %v2259, 112
      %v2384 = vpop.permute.xlu0 %2383
      %v2385 = vsel %vm719, %v2368, 0
      %v2387 = vsel %vm719, %v2370, 0
      %v2389 = vsel %vm719, %v2372, 0
      %v2391 = vsel %vm719, %v2374, 0
      %v2393 = vsel %vm719, %v2376, 0
      %v2395 = vsel %vm719, %v2378, 0
      %v2397 = vsel %vm719, %v2380, 0
      %v2399 = vsel %vm719, %v2382, 0
      %v2401 = vsel %vm719, %v2384, 0
      %2403 = vmatpush.xpose.msra.mxu0 0.0
      %2404 = vmatpush.xpose.msra.mxu0 0.0
      %2405 = vmatpush.xpose.msra.mxu0 0.0
      %2406 = vmatpush.xpose.msra.mxu0 0.0
      %2407 = vmatpush.xpose.msra.mxu0 0.0
      %2408 = vmatpush.xpose.msra.mxu0 0.0
      %2409 = vmatpush.xpose.msra.mxu0 0.0
      %2410 = vmatpush.xpose.msra.mxu0 0.0
      %2411 = vmatpush.xpose.msra.mxu0 %v2401
      %2412 = vmatpush.xpose.msra.mxu0 %v2399
      %2413 = vmatpush.xpose.msra.mxu0 %v2397
      %2414 = vmatpush.xpose.msra.mxu0 %v2395
      %2415 = vmatpush.xpose.msra.mxu0 %v2393
      %2416 = vmatpush.xpose.msra.mxu0 %v2391
      %2417 = vmatpush.xpose.msra.mxu0 %v2389
      %2418 = vmatpush.xpose.msra.mxu0 %v2387
      %2419 = vmatmul.f32.gmra.mxu0 %v2385
      %v2420 = vpop.f32.mrf.mxu0
      %v2421 = vadd.f32 0.0, %v2420
      %2422 = vdwg.mxu0
      %v2423 = vmul.f32 %v2421, 0.25
      %v2424 = vsel %vm801, %v2423, -inf
      %2425 = vmax.xlane.f32.xlu0 %v2424
      %v2426 = vpop.xlane.xlu0 %2425
      %v2427 = vsub.f32 %v2423, %v2426
      %v2428 = vmul.f32 %v2427, 1.442695
      %v2429 = vpow.pop %v2428
      %v2430 = vsel %vm801, %v2429, 0.0
      %2431 = vadd.xlane.f32.xlu0 %v2430
      %v2432 = vpop.xlane.xlu0 %2431
      %v2433 = vrcp.pop %v2432
      %v2434 = vmul.f32 %v2429, %v2433
      %2435 = vrot.lane.b32.xlu0 %v2238, 80
      %v2436 = vpop.permute.xlu0 %2435
      %2437 = vrot.lane.b32.xlu0 %v2241, 80
      %v2438 = vpop.permute.xlu0 %2437
      %2439 = vrot.lane.b32.xlu0 %v2244, 80
      %v2440 = vpop.permute.xlu0 %2439
      %2441 = vrot.lane.b32.xlu0 %v2247, 80
      %v2442 = vpop.permute.xlu0 %2441
      %2443 = vrot.lane.b32.xlu0 %v2250, 80
      %v2444 = vpop.permute.xlu0 %2443
      %2445 = vrot.lane.b32.xlu0 %v2253, 80
      %v2446 = vpop.permute.xlu0 %2445
      %2447 = vrot.lane.b32.xlu0 %v2256, 80
      %v2448 = vpop.permute.xlu0 %2447
      %2449 = vrot.lane.b32.xlu0 %v2259, 80
      %v2450 = vpop.permute.xlu0 %2449
      %v2460 = vsel %vm801, %v2434, 0
      %2462 = vmatpush.msra.mxu0 0.0
      %2463 = vmatpush.msra.mxu0 0.0
      %2464 = vmatpush.msra.mxu0 0.0
      %2465 = vmatpush.msra.mxu0 0.0
      %2466 = vmatpush.msra.mxu0 0.0
      %2467 = vmatpush.msra.mxu0 0.0
      %2468 = vmatpush.msra.mxu0 0.0
      %2469 = vmatpush.msra.mxu0 0.0
      %2470 = vmatpush.msra.mxu0 %v2450
      %2471 = vmatpush.msra.mxu0 %v2448
      %2472 = vmatpush.msra.mxu0 %v2446
      %2473 = vmatpush.msra.mxu0 %v2444
      %2474 = vmatpush.msra.mxu0 %v2442
      %2475 = vmatpush.msra.mxu0 %v2440
      %2476 = vmatpush.msra.mxu0 %v2438
      %2477 = vmatpush.msra.mxu0 %v2436
      %2478 = vmatmul.f32.gmra.mxu0 %v2460
      %v2479 = vpop.f32.mrf.mxu0
      %v2480 = vadd.f32 0.0, %v2479
      %2481 = vdwg.mxu0
      %2483 = vrot.lane.b32.xlu0 %v2480, 16
      %v2484 = vpop.permute.xlu0 %2483
      %v2486 = vsel %vm719, %v2365, %v2484
      %v2487 = vld [vmem:[%s10] sm:$0xff]
      %v2488 = vld [vmem:[%s10 + $0x8] sm:$0xff]
      %v2489 = vld [vmem:[%s10 + $0x10] sm:$0xff]
      %v2490 = vld [vmem:[%s10 + $0x18] sm:$0xff]
      %v2491 = vperm.slane %v548, 7
      %v2493 = vsel %vm629, %v2486, 0
      %2495 = vmatpush.msra.mxu0 0.0
      %2496 = vmatpush.msra.mxu0 0.0
      %2497 = vmatpush.msra.mxu0 0.0
      %2498 = vmatpush.msra.mxu0 0.0
      %2499 = vmatpush.msra.mxu0 0.0
      %2500 = vmatpush.msra.mxu0 0.0
      %2501 = vmatpush.msra.mxu0 0.0
      %2502 = vmatpush.msra.mxu0 0.0
      %2503 = vmatpush.msra.mxu0 0.0
      %2504 = vmatpush.msra.mxu0 0.0
      %2505 = vmatpush.msra.mxu0 0.0
      %2506 = vmatpush.msra.mxu0 0.0
      %2507 = vmatpush.msra.mxu0 %v2490
      %2508 = vmatpush.msra.mxu0 %v2489
      %2509 = vmatpush.msra.mxu0 %v2488
      %2510 = vmatpush.msra.mxu0 %v2487
      %2511 = vmatmul.f32.gmra.mxu0 %v2493
      %v2512 = vpop.f32.mrf.mxu0
      %v2513 = vadd.f32 %v2491, %v2512
      %2514 = vdwg.mxu0
      %v2515 = vadd.f32 %v2162, %v2513
      %v2516 = vsel %vm629, %v2515, 0.0
      %2517 = vadd.xlane.f32.xlu0 %v2516
      %v2518 = vpop.xlane.xlu0 %2517
      %v2519 = vmul.f32 %v2518, %v1417
      %v2520 = vsub.f32 %v2515, %v2519
      %v2521 = vmul.f32 %v2520, %v2520
      %v2522 = vsel %vm629, %v2521, 0.0
      %2523 = vadd.xlane.f32.xlu0 %v2522
      %v2524 = vpop.xlane.xlu0 %2523
      %v2525 = vmul.f32 %v2524, %v1417
      %v2526 = vadd.f32 %v2525, 1e-05
      %v2527 = vrsqrt.pop %v2526
      %v2528 = vmul.f32 %v2527, %v2526
      %v2529 = vmul.f32 %v2528, %v2527
      %v2530 = vmul.f32 0.5, %v2529
      %v2531 = vsub.f32 1.5, %v2530
      %v2532 = vmul.f32 %v2527, %v2531
      %vm2533 = vweird.f32 %v2526
      %vm2534 = vweird.f32 %v2527
      %vm2535 = vmor %vm2533, %vm2534
      %v2536 = vsel %vm2535, %v2527, %v2532
      %v2537 = vmul.f32 %v2520, %v2536
      %v2538 = vperm.slane %v549, 0
      %v2539 = vmul.f32 %v2537, %v2538
      %v2540 = vperm.slane %v549, 1
      %v2541 = vadd.f32 %v2539, %v2540
      %v2542 = vld [vmem:[%s11] sm:$0xff]
      %v2543 = vld [vmem:[%s11 + $0x8] sm:$0xff]
      %v2544 = vld [vmem:[%s11 + $0x10] sm:$0xff]
      %v2545 = vld [vmem:[%s11 + $0x18] sm:$0xff]
      %v2546 = vperm.slane %v549, 2
      %v2548 = vsel %vm629, %v2541, 0
      %2550 = vmatpush.msra.mxu0 0.0
      %2551 = vmatpush.msra.mxu0 0.0
      %2552 = vmatpush.msra.mxu0 0.0
      %2553 = vmatpush.msra.mxu0 0.0
      %2554 = vmatpush.msra.mxu0 0.0
      %2555 = vmatpush.msra.mxu0 0.0
      %2556 = vmatpush.msra.mxu0 0.0
      %2557 = vmatpush.msra.mxu0 0.0
      %2558 = vmatpush.msra.mxu0 0.0
      %2559 = vmatpush.msra.mxu0 0.0
      %2560 = vmatpush.msra.mxu0 0.0
      %2561 = vmatpush.msra.mxu0 0.0
      %2562 = vmatpush.msra.mxu0 %v2545
      %2563 = vmatpush.msra.mxu0 %v2544
      %2564 = vmatpush.msra.mxu0 %v2543
      %2565 = vmatpush.msra.mxu0 %v2542
      %2566 = vmatmul.f32.gmra.mxu0 %v2548
      %v2567 = vpop.f32.mrf.mxu0
      %v2568 = vadd.f32 %v2546, %v2567
      %2569 = vdwg.mxu0
      %v2570 = vmax.f32 %v2568, 0.0
      %v2571 = vld [vmem:[%s12] sm:$0xff]
      %v2572 = vld [vmem:[%s12 + $0x8] sm:$0xff]
      %v2573 = vld [vmem:[%s12 + $0x10] sm:$0xff]
      %v2574 = vld [vmem:[%s12 + $0x18] sm:$0xff]
      %v2575 = vld [vmem:[%s12 + $0x20] sm:$0xff]
      %v2576 = vld [vmem:[%s12 + $0x28] sm:$0xff]
      %v2577 = vld [vmem:[%s12 + $0x30] sm:$0xff]
      %v2578 = vld [vmem:[%s12 + $0x38] sm:$0xff]
      %v2579 = vperm.slane %v549, 3
      %v2581 = vsel %vm801, %v2570, 0
      %2583 = vmatpush.msra.mxu0 0.0
      %2584 = vmatpush.msra.mxu0 0.0
      %2585 = vmatpush.msra.mxu0 0.0
      %2586 = vmatpush.msra.mxu0 0.0
      %2587 = vmatpush.msra.mxu0 0.0
      %2588 = vmatpush.msra.mxu0 0.0
      %2589 = vmatpush.msra.mxu0 0.0
      %2590 = vmatpush.msra.mxu0 0.0
      %2591 = vmatpush.msra.mxu0 %v2578
      %2592 = vmatpush.msra.mxu0 %v2577
      %2593 = vmatpush.msra.mxu0 %v2576
      %2594 = vmatpush.msra.mxu0 %v2575
      %2595 = vmatpush.msra.mxu0 %v2574
      %2596 = vmatpush.msra.mxu0 %v2573
      %2597 = vmatpush.msra.mxu0 %v2572
      %2598 = vmatpush.msra.mxu0 %v2571
      %2599 = vmatmul.f32.gmra.mxu0 %v2581
      %v2600 = vpop.f32.mrf.mxu0
      %v2601 = vadd.f32 %v2579, %v2600
      %2602 = vdwg.mxu0
      %v2603 = vadd.f32 %v2541, %v2601
      %v2604 = vsel %vm629, %v2603, 0.0
      %2605 = vadd.xlane.f32.xlu0 %v2604
      %v2606 = vpop.xlane.xlu0 %2605
      %v2607 = vmul.f32 %v2606, %v1417
      %v2608 = vsub.f32 %v2603, %v2607
      %v2609 = vmul.f32 %v2608, %v2608
      %v2610 = vsel %vm629, %v2609, 0.0
      %2611 = vadd.xlane.f32.xlu0 %v2610
      %v2612 = vpop.xlane.xlu0 %2611
      %v2613 = vmul.f32 %v2612, %v1417
      %v2614 = vadd.f32 %v2613, 1e-05
      %v2615 = vrsqrt.pop %v2614
      %v2616 = vmul.f32 %v2615, %v2614
      %v2617 = vmul.f32 %v2616, %v2615
      %v2618 = vmul.f32 0.5, %v2617
      %v2619 = vsub.f32 1.5, %v2618
      %v2620 = vmul.f32 %v2615, %v2619
      %vm2621 = vweird.f32 %v2614
      %vm2622 = vweird.f32 %v2615
      %vm2623 = vmor %vm2621, %vm2622
      %v2624 = vsel %vm2623, %v2615, %v2620
      %v2625 = vmul.f32 %v2608, %v2624
      %v2626 = vperm.slane %v549, 4
      %v2627 = vmul.f32 %v2625, %v2626
      %v2628 = vperm.slane %v549, 5
      %v2629 = vadd.f32 %v2627, %v2628
      %v2630 = vld [vmem:[%s13] sm:$0xff]
      %v2631 = vld [vmem:[%s13 + $0x8] sm:$0xff]
      %v2632 = vld [vmem:[%s13 + $0x10] sm:$0xff]
      %v2633 = vld [vmem:[%s13 + $0x18] sm:$0xff]
      %v2634 = vperm.slane %v549, 6
      %v2636 = vsel %vm629, %v2629, 0
      %2638 = vmatpush.msra.mxu0 0.0
      %2639 = vmatpush.msra.mxu0 0.0
      %2640 = vmatpush.msra.mxu0 0.0
      %2641 = vmatpush.msra.mxu0 0.0
      %2642 = vmatpush.msra.mxu0 0.0
      %2643 = vmatpush.msra.mxu0 0.0
      %2644 = vmatpush.msra.mxu0 0.0
      %2645 = vmatpush.msra.mxu0 0.0
      %2646 = vmatpush.msra.mxu0 0.0
      %2647 = vmatpush.msra.mxu0 0.0
      %2648 = vmatpush.msra.mxu0 0.0
      %2649 = vmatpush.msra.mxu0 0.0
      %2650 = vmatpush.msra.mxu0 %v2633
      %2651 = vmatpush.msra.mxu0 %v2632
      %2652 = vmatpush.msra.mxu0 %v2631
      %2653 = vmatpush.msra.mxu0 %v2630
      %2654 = vmatmul.f32.gmra.mxu0 %v2636
      %v2655 = vpop.f32.mrf.mxu0
      %v2656 = vadd.f32 %v2634, %v2655
      %2657 = vdwg.mxu0
      %v2658 = vmax.f32 %v2656, 0.0
      %v2659 = vld [vmem:[%s14] sm:$0xff]
      %v2660 = vld [vmem:[%s14 + $0x8] sm:$0xff]
      %v2661 = vld [vmem:[%s14 + $0x10] sm:$0xff]
      %v2662 = vld [vmem:[%s14 + $0x18] sm:$0xff]
      %v2663 = vperm.slane %v549, 7
      %2665 = vrot.lane.b32.xlu0 %v2658, 120
      %v2666 = vpop.permute.xlu0 %2665
      %v2667 = vsel %vm629, %v2666, 0
      %2669 = vmatpush.msra.mxu0 0.0
      %2670 = vmatpush.msra.mxu0 0.0
      %2671 = vmatpush.msra.mxu0 0.0
      %2672 = vmatpush.msra.mxu0 0.0
      %2673 = vmatpush.msra.mxu0 0.0
      %2674 = vmatpush.msra.mxu0 0.0
      %2675 = vmatpush.msra.mxu0 0.0
      %2676 = vmatpush.msra.mxu0 0.0
      %2677 = vmatpush.msra.mxu0 0.0
      %2678 = vmatpush.msra.mxu0 0.0
      %2679 = vmatpush.msra.mxu0 0.0
      %2680 = vmatpush.msra.mxu0 0.0
      %2681 = vmatpush.msra.mxu0 %v2662
      %2682 = vmatpush.msra.mxu0 %v2661
      %2683 = vmatpush.msra.mxu0 %v2660
      %2684 = vmatpush.msra.mxu0 %v2659
      %2685 = vmatmul.f32.gmra.mxu0 %v2667
      %v2686 = vpop.f32.mrf.mxu0
      %v2687 = vadd.f32 %v2663, %v2686
      %2688 = vdwg.mxu0
      %v2689 = vxor.u32 %v2687, 2147483648
      %v2690 = vmul.f32 %v2689, 1.442695
      %v2691 = vpow.pop %v2690
      %v2692 = vadd.f32 %v2691, 1.0
      %v2693 = vrcp.pop %v2692
      %v2694 = vmul.f32 %v2692, %v2693
      %v2695 = vsub.f32 1.0, %v2694
      %v2696 = vmul.f32 %v2693, %v2695
      %v2697 = vadd.f32 %v2693, %v2696
      %vm2698 = vweird.f32 %v2692
      %vm2699 = vweird.f32 %v2693
      %vm2700 = vmor %vm2698, %vm2699
      %v2701 = vsel %vm2700, %v2693, %v2697
      %v2702 = vand.u32 2147483647, %v2692
      %vm2703 = vcmp.eq.f32.partialorder %v2702, 8.507059e+37
      %v2704 = vand.u32 %v2692, 2147483648
      %v2705 = vor.u32 1.1754944e-38, %v2704
      %v2706 = vsel %vm2703, %v2705, %v2701
      %v2707 = vmul.f32 1.0, %v2706
      %2709 = vrot.lane.b32.xlu0 %v2707, 8
      %v2710 = vpop.permute.xlu0 %2709
      %v2712 = vsel %vm1999, %v2656, %v2710
      %vm2713 = vcmask 97280
      %v2714 = vsel %vm2713, %v2712, 0.0
      %2715 = vst [vmem:[%s546] sm:$0xff] %v2714
      %p2716 = scmp.lt.s32.totalorder %s28, 1
      %s2717 = scalar_select %p2716, %s28, 1
      %s2718 = smul.addr %s2717, 8
      %s2719 = scalar_lea.vmem %s17, %s2718
      // Predicated region
      $region89: #{rtdetr_forward.1} parent=87 // pred_check
        %p2720 = pneg %p408
      $region90: #{rtdetr_forward.1} parent=87 // pred_check_branch
        %2722 = sbr.rel (%p2720) target = $region92
      $region91: #{rtdetr_forward.1} parent=87 // pred_region
        _
      $region92: #{rtdetr_forward.1} parent=87 // pred_fallthru
        _
    $region88: #{rtdetr_forward.1} parent=5 // pred_fallthru
      _
    %p2723 = scmp.le.s32.totalorder 2, %s23
    // Predicated region
    $region93: #{rtdetr_forward.1} parent=5 // pred_check
      %p2724 = pneg %p2723
    $region94: #{rtdetr_forward.1} parent=5 // pred_check_branch
      %2726 = sbr.rel (%p2724) target = $region96
    $region95: #{rtdetr_forward.1} parent=5 // pred_region
      %s2727 = ssub.s32 %s23, 2
      // Predicated region
      $region97: #{rtdetr_forward.1} parent=95 // pred_check
        %p2728 = pneg %p414
      $region98: #{rtdetr_forward.1} parent=95 // pred_check_branch
        %2730 = sbr.rel (%p2728) target = $region100
      $region99: #{rtdetr_forward.1} parent=95 // pred_region
        %p2731 = scmp.lt.s32.totalorder %s29, 1
        %s2732 = scalar_select %p2731, %s29, 1
        %s2733 = smul.addr %s2732, 8
        %s2734 = scalar_lea.vmem %s17, %s2733
      $region100: #{rtdetr_forward.1} parent=95 // pred_fallthru
        _
    $region96: #{rtdetr_forward.1} parent=5 // pred_fallthru
      _
  $region6: #{rtdetr_forward.1} parent=0 // loop_footer
    %s27 = sadd.s32 1, %s23
  $region7: #{rtdetr_forward.1} parent=0 // loop_footer_branch
    %22 = sbr.rel target = $region3
  $region8: #{rtdetr_forward.1} parent=0 // loop_exit
    _

</llo_original>
